<compile_context>
chip_gen: v7x
topology: tpu7x:2x2x1
jax: 0.10.0
libtpu: 0.0.40
codegen_flags: <defaults>
</compile_context>

<pallas_src>
import jax
import jax.numpy as jnp
from jax.experimental import pallas as pl
from jax.experimental.pallas import tpu as pltpu


CIN, COUT, KSZ, STRIDE = 128, 64, 4, 4
NCOL = COUT * KSZ * KSZ          # 1024 -> lane-dense last dim
BN_EPS = 1e-5
MAX_TM = 1024                    # fits default scoped-VMEM on v5e/v6e/v7x


def _round_up(x, m):
    return ((x + m - 1) // m) * m


def _choose_tiling(M, max_tm=MAX_TM):
    """Pick (tm, M_pad, num_tiles) with bounded padding waste (< 8 rows per tile)."""
    num_tiles = -(-M // max_tm)                  # ceil
    tm = _round_up(-(-M // num_tiles), 8)        # per-tile rows, sublane-aligned
    return tm, num_tiles * tm, num_tiles


# ---------------- Kernel 1: stats-only matmul (per-tile partial sums) ----------------

def _stats_kernel(x_ref, w_ref, sum_ref, sq_ref):
    y = jnp.dot(x_ref[...], w_ref[...], preferred_element_type=jnp.float32)
    sum_ref[...] = jnp.sum(y, axis=0, keepdims=True)
    sq_ref[...] = jnp.sum(y * y, axis=0, keepdims=True)


def matmul_stats(x_flat, w_flat, *, tm, num_tiles):
    _, K = x_flat.shape
    _, N = w_flat.shape
    return pl.pallas_call(
        _stats_kernel,
        out_shape=(
            jax.ShapeDtypeStruct((num_tiles, N), jnp.float32),   # per-tile column sums
            jax.ShapeDtypeStruct((num_tiles, N), jnp.float32),   # per-tile column sum-sq
        ),
        grid_spec=pltpu.PrefetchScalarGridSpec(
            num_scalar_prefetch=0,
            grid=(num_tiles,),
            in_specs=[
                pl.BlockSpec((tm, K), lambda i: (i, 0)),
                pl.BlockSpec((K, N), lambda i: (0, 0)),          # weights resident
            ],
            out_specs=[
                pl.BlockSpec((1, N), lambda i: (i, 0)),
                pl.BlockSpec((1, N), lambda i: (i, 0)),
            ],
        ),
        compiler_params=pltpu.CompilerParams(
            dimension_semantics=("parallel",)),                  # megacore-shardable
    )(x_flat, w_flat)


# ---------------- Kernel 2: recompute matmul + BN apply + sigmoid (fused) ----------------

def _fused_bn_sigmoid_kernel(scale_ref, shift_ref, x_ref, w_ref, o_ref):
    y = jnp.dot(x_ref[...], w_ref[...], preferred_element_type=jnp.float32)
    z = y * scale_ref[...] + shift_ref[...]
    # sigmoid = 1 / (1 + exp(-z)): exp on EUP, approx reciprocal on EUP -> VALU stays free
    o_ref[...] = pl.reciprocal(1.0 + jnp.exp(-z), approx=True)


def fused_bn_sigmoid(x_flat, w_flat, scale_col, shift_col, *, tm, num_tiles):
    M_pad, K = x_flat.shape
    _, N = w_flat.shape
    return pl.pallas_call(
        _fused_bn_sigmoid_kernel,
        out_shape=jax.ShapeDtypeStruct((M_pad, N), jnp.float32),
        grid_spec=pltpu.PrefetchScalarGridSpec(
            num_scalar_prefetch=0,
            grid=(num_tiles,),
            in_specs=[
                pl.BlockSpec((1, N), lambda i: (0, 0)),          # scale (resident)
                pl.BlockSpec((1, N), lambda i: (0, 0)),          # shift (resident)
                pl.BlockSpec((tm, K), lambda i: (i, 0)),
                pl.BlockSpec((K, N), lambda i: (0, 0)),          # weights resident
            ],
            out_specs=pl.BlockSpec((tm, N), lambda i: (i, 0)),   # lane-dense output
        ),
        compiler_params=pltpu.CompilerParams(
            dimension_semantics=("parallel",)),
    )(scale_col, shift_col, x_flat, w_flat)


# ---------------- Model wrapper ----------------

def init_params(key):
    kw, kb = jax.random.split(key)
    # PyTorch ConvTranspose2d weight layout: (Cin, Cout, kH, kW)
    fan = CIN * KSZ * KSZ
    bound = 1.0 / jnp.sqrt(fan)
    w = jax.random.uniform(kw, (CIN, COUT, KSZ, KSZ), jnp.float32, -bound, bound)
    b = jax.random.uniform(kb, (COUT,), jnp.float32, -bound, bound)
    gamma = jnp.ones((COUT,), jnp.float32)   # BatchNorm default init
    beta = jnp.zeros((COUT,), jnp.float32)
    return w, b, gamma, beta


@jax.jit
def model_forward(x_nchw, w, b, gamma, beta):
    # Conv bias is exactly cancelled by training-mode BatchNorm (mean absorbs it,
    # variance is shift-invariant), so it does not enter the compute path.
    del b
    # TODO(synk): running_mean / running_var updates of BatchNorm2d are not produced here.
    N, Cin, H, W = x_nchw.shape
    assert Cin == CIN
    Hout, Wout = H * STRIDE, W * STRIDE
    M = N * H * W

    # channels-last flattening: matmul form of the stride==kernel deconv (bf16 operands,
    # f32 MXU accumulation)
    x_flat = jnp.transpose(x_nchw, (0, 2, 3, 1)).reshape(M, CIN).astype(jnp.bfloat16)
    w_flat = w.reshape(CIN, NCOL).astype(jnp.bfloat16)   # column = cout*16 + (kh*4 + kw)

    tm, M_pad, num_tiles = _choose_tiling(M)
    if M_pad != M:
        x_flat = jnp.pad(x_flat, ((0, M_pad - M), (0, 0)))   # zero rows: exact for stats

    # pass 1: per-tile partial column sums / sums of squares (no y written to HBM)
    part_sum, part_sq = matmul_stats(x_flat, w_flat, tm=tm, num_tiles=num_tiles)

    # per-Cout batch stats: each Cout owns 16 consecutive columns, count = M*16 elements
    cnt = jnp.float32(M * KSZ * KSZ)
    ch_sum = part_sum.sum(axis=0).reshape(COUT, KSZ * KSZ).sum(axis=1)
    ch_sq = part_sq.sum(axis=0).reshape(COUT, KSZ * KSZ).sum(axis=1)
    mean = ch_sum / cnt
    var = jnp.maximum(ch_sq / cnt - mean * mean, 0.0)     # biased var (training mode)
    scale = gamma / jnp.sqrt(var + BN_EPS)
    shift = beta - mean * scale
    scale_col = jnp.repeat(scale, KSZ * KSZ).reshape(1, NCOL)
    shift_col = jnp.repeat(shift, KSZ * KSZ).reshape(1, NCOL)

    # pass 2: recompute matmul + BN-apply + sigmoid, fused, lane-dense output
    out_flat = fused_bn_sigmoid(x_flat, w_flat, scale_col, shift_col,
                                tm=tm, num_tiles=num_tiles)

    # scatter non-overlapping 4x4 blocks into NCHW with a single transpose
    out_flat = out_flat[:M]
    out = (out_flat.reshape(N, H, W, COUT, KSZ, KSZ)
                   .transpose(0, 3, 1, 4, 2, 5)           # N, C, H, kH, W, kW
                   .reshape(N, COUT, Hout, Wout))
    return out


if __name__ == "__main__":
    key = jax.random.PRNGKey(0)
    kx, kp = jax.random.split(key)
    # small shapes consistent with the module (Cin=128 is fixed by the conv)
    x = jax.random.normal(kx, (2, CIN, 8, 8), jnp.float32)
    w, b, gamma, beta = init_params(kp)

    out = model_forward(x, w, b, gamma, beta)
    jax.block_until_ready(out)
    assert out.shape == (2, COUT, 32, 32)
    assert bool(jnp.all(jnp.isfinite(out)))
    print("KERNEL_OK")
</pallas_src>

<mosaic_0001>
module attributes {stable_mosaic.version = 11 : i64} {
  func.func @_stats_kernel(%arg0: i32, %arg1: memref<128x128xbf16, #tpu.memory_space<vmem>>, %arg2: memref<128x1024xbf16, #tpu.memory_space<vmem>>, %arg3: memref<1x1024xf32, #tpu.memory_space<vmem>>, %arg4: memref<1x1024xf32, #tpu.memory_space<vmem>>) attributes {dimension_semantics = [#tpu.dimension_semantics<parallel>], iteration_bounds = array<i64: 1>, scalar_prefetch = 0 : i64, scratch_operands = 0 : i64, tpu.core_type = #tpu.core_type<tc>, window_params = [{transform_indices = @transform_0, window_bounds = array<i64: 128, 128>}, {pipeline_mode = #tpu.pipeline_mode<synchronous>, transform_indices = @transform_1, window_bounds = array<i64: 128, 1024>}, {transform_indices = @transform_2, window_bounds = array<i64: 1, 1024>}, {transform_indices = @transform_3, window_bounds = array<i64: 1, 1024>}]} {
    %c0 = arith.constant 0 : index
    %c0_0 = arith.constant 0 : index
    %0 = vector.load %arg1[%c0, %c0_0] : memref<128x128xbf16, #tpu.memory_space<vmem>>, vector<128x128xbf16>
    %c0_1 = arith.constant 0 : index
    %c0_2 = arith.constant 0 : index
    %1 = vector.load %arg2[%c0_1, %c0_2] : memref<128x1024xbf16, #tpu.memory_space<vmem>>, vector<128x1024xbf16>
    %cst = arith.constant dense<0.000000e+00> : vector<128x1024xf32>
    %2 = tpu.matmul %0, %1, %cst {dimension_numbers = #tpu.dot_dimension_numbers<[1], [0], [0], [1], [0, 0, 1, 1], [], []>} : vector<128x128xbf16>, vector<128x1024xbf16>, vector<128x1024xf32> -> vector<128x1024xf32>
    %cst_3 = arith.constant dense<0.000000e+00> : vector<1024xf32>
    %3 = vector.multi_reduction <add>, %2, %cst_3 [0] : vector<128x1024xf32> to vector<1024xf32>
    %4 = vector.shape_cast %3 : vector<1024xf32> to vector<1x1024xf32>
    %c0_4 = arith.constant 0 : index
    %c0_5 = arith.constant 0 : index
    %5 = vector.load %arg3[%c0_4, %c0_5] : memref<1x1024xf32, #tpu.memory_space<vmem>>, vector<1x1024xf32>
    tpu.vector_store %arg3[%c0_4, %c0_5], %4 {strides = array<i32>} : memref<1x1024xf32, #tpu.memory_space<vmem>>, vector<1x1024xf32>,
    %6 = arith.mulf %2, %2 : vector<128x1024xf32>
    %cst_6 = arith.constant dense<0.000000e+00> : vector<1024xf32>
    %7 = vector.multi_reduction <add>, %6, %cst_6 [0] : vector<128x1024xf32> to vector<1024xf32>
    %8 = vector.shape_cast %7 : vector<1024xf32> to vector<1x1024xf32>
    %c0_7 = arith.constant 0 : index
    %c0_8 = arith.constant 0 : index
    %9 = vector.load %arg4[%c0_7, %c0_8] : memref<1x1024xf32, #tpu.memory_space<vmem>>, vector<1x1024xf32>
    tpu.vector_store %arg4[%c0_7, %c0_8], %8 {strides = array<i32>} : memref<1x1024xf32, #tpu.memory_space<vmem>>, vector<1x1024xf32>,
    return
  }
  func.func @transform_0(%arg0: i32) -> (i32, i32) {
    %c0_i32 = arith.constant 0 : i32
    %c0_i32_0 = arith.constant 0 : i32
    return %arg0, %c0_i32 : i32, i32
  }
  func.func @transform_1(%arg0: i32) -> (i32, i32) {
    %c0_i32 = arith.constant 0 : i32
    %c0_i32_0 = arith.constant 0 : i32
    %c0_i32_1 = arith.constant 0 : i32
    return %c0_i32, %c0_i32_0 : i32, i32
  }
  func.func @transform_2(%arg0: i32) -> (i32, i32) {
    %c0_i32 = arith.constant 0 : i32
    %c0_i32_0 = arith.constant 0 : i32
    return %arg0, %c0_i32 : i32, i32
  }
  func.func @transform_3(%arg0: i32) -> (i32, i32) {
    %c0_i32 = arith.constant 0 : i32
    %c0_i32_0 = arith.constant 0 : i32
    return %arg0, %c0_i32 : i32, i32
  }
}

module attributes {stable_mosaic.version = 11 : i64} {
  func.func @_fused_bn_sigmoid_kernel(%arg0: i32, %arg1: memref<1x1024xf32, #tpu.memory_space<vmem>>, %arg2: memref<1x1024xf32, #tpu.memory_space<vmem>>, %arg3: memref<128x128xbf16, #tpu.memory_space<vmem>>, %arg4: memref<128x1024xbf16, #tpu.memory_space<vmem>>, %arg5: memref<128x1024xf32, #tpu.memory_space<vmem>>) attributes {dimension_semantics = [#tpu.dimension_semantics<parallel>], iteration_bounds = array<i64: 1>, scalar_prefetch = 0 : i64, scratch_operands = 0 : i64, tpu.core_type = #tpu.core_type<tc>, window_params = [{pipeline_mode = #tpu.pipeline_mode<synchronous>, transform_indices = @transform_0, window_bounds = array<i64: 1, 1024>}, {pipeline_mode = #tpu.pipeline_mode<synchronous>, transform_indices = @transform_1, window_bounds = array<i64: 1, 1024>}, {transform_indices = @transform_2, window_bounds = array<i64: 128, 128>}, {pipeline_mode = #tpu.pipeline_mode<synchronous>, transform_indices = @transform_3, window_bounds = array<i64: 128, 1024>}, {transform_indices = @transform_4, window_bounds = array<i64: 128, 1024>}]} {
    %c0 = arith.constant 0 : index
    %c0_0 = arith.constant 0 : index
    %0 = vector.load %arg3[%c0, %c0_0] : memref<128x128xbf16, #tpu.memory_space<vmem>>, vector<128x128xbf16>
    %c0_1 = arith.constant 0 : index
    %c0_2 = arith.constant 0 : index
    %1 = vector.load %arg4[%c0_1, %c0_2] : memref<128x1024xbf16, #tpu.memory_space<vmem>>, vector<128x1024xbf16>
    %cst = arith.constant dense<0.000000e+00> : vector<128x1024xf32>
    %2 = tpu.matmul %0, %1, %cst {dimension_numbers = #tpu.dot_dimension_numbers<[1], [0], [0], [1], [0, 0, 1, 1], [], []>} : vector<128x128xbf16>, vector<128x1024xbf16>, vector<128x1024xf32> -> vector<128x1024xf32>
    %c0_3 = arith.constant 0 : index
    %c0_4 = arith.constant 0 : index
    %3 = vector.load %arg1[%c0_3, %c0_4] : memref<1x1024xf32, #tpu.memory_space<vmem>>, vector<1x1024xf32>
    %4 = vector.broadcast %3 : vector<1x1024xf32> to vector<128x1024xf32>
    %5 = arith.mulf %2, %4 : vector<128x1024xf32>
    %c0_5 = arith.constant 0 : index
    %c0_6 = arith.constant 0 : index
    %6 = vector.load %arg2[%c0_5, %c0_6] : memref<1x1024xf32, #tpu.memory_space<vmem>>, vector<1x1024xf32>
    %7 = vector.broadcast %6 : vector<1x1024xf32> to vector<128x1024xf32>
    %8 = arith.addf %5, %7 : vector<128x1024xf32>
    %cst_7 = arith.constant 0.000000e+00 : f32
    %9 = vector.broadcast %cst_7 : f32 to vector<128x1024xf32>
    %10 = arith.subf %9, %8 : vector<128x1024xf32>
    %11 = math.exp %10 : vector<128x1024xf32>
    %cst_8 = arith.constant 1.000000e+00 : f32
    %12 = vector.broadcast %cst_8 : f32 to vector<128x1024xf32>
    %13 = arith.addf %12, %11 : vector<128x1024xf32>
    %14 = tpu.reciprocal %13 {approx = true} : vector<128x1024xf32> -> vector<128x1024xf32>
    %c0_9 = arith.constant 0 : index
    %c0_10 = arith.constant 0 : index
    %15 = vector.load %arg5[%c0_9, %c0_10] : memref<128x1024xf32, #tpu.memory_space<vmem>>, vector<128x1024xf32>
    tpu.vector_store %arg5[%c0_9, %c0_10], %14 {strides = array<i32>} : memref<128x1024xf32, #tpu.memory_space<vmem>>, vector<128x1024xf32>,
    return
  }
  func.func @transform_0(%arg0: i32) -> (i32, i32) {
    %c0_i32 = arith.constant 0 : i32
    %c0_i32_0 = arith.constant 0 : i32
    %c0_i32_1 = arith.constant 0 : i32
    return %c0_i32, %c0_i32_0 : i32, i32
  }
  func.func @transform_1(%arg0: i32) -> (i32, i32) {
    %c0_i32 = arith.constant 0 : i32
    %c0_i32_0 = arith.constant 0 : i32
    %c0_i32_1 = arith.constant 0 : i32
    return %c0_i32, %c0_i32_0 : i32, i32
  }
  func.func @transform_2(%arg0: i32) -> (i32, i32) {
    %c0_i32 = arith.constant 0 : i32
    %c0_i32_0 = arith.constant 0 : i32
    return %arg0, %c0_i32 : i32, i32
  }
  func.func @transform_3(%arg0: i32) -> (i32, i32) {
    %c0_i32 = arith.constant 0 : i32
    %c0_i32_0 = arith.constant 0 : i32
    %c0_i32_1 = arith.constant 0 : i32
    return %c0_i32, %c0_i32_0 : i32, i32
  }
  func.func @transform_4(%arg0: i32) -> (i32, i32) {
    %c0_i32 = arith.constant 0 : i32
    %c0_i32_0 = arith.constant 0 : i32
    return %arg0, %c0_i32 : i32, i32
  }
}

</mosaic_0001>

<llo_original>
// kernel: model_forward.2
$region0: #{model_forward.2}
  #allocation0 [shape = 'u32[]', space=smem, size = 0x4, offset = 0x4, fixed_abs, tag = 'smem constant byte address 0x4 - core index']
  #allocation1 [shape = 'u32[144,128]{1,0:T(1,128)}', space=vmem, size = 0x12000, scoped, tag = 'internal scratch']
  %s0 = inlined_call_operand.vmem [shape: bf16[128,128], index: 0, kind: input, shape index: {}]
  %s1 = inlined_call_operand.vmem [shape: bf16[128,1024], index: 1, kind: input, shape index: {}]
  %s2 = inlined_call_operand.vmem [shape: f32[1,1024], index: 2, kind: output, shape index: {0}]
  %s3 = inlined_call_operand.vmem [shape: f32[1,1024], index: 3, kind: output, shape index: {1}]
  %4 = xla_tuple %s2, %s3
  %s5 = sld [smem:[#allocation0]]
  $region26: #{model_forward.2} parent=0
    _
  %s7 = ssub.s32 1, %s5
  %s8 = scalar_select 0, %s7, %s5
  // Predicated region
  $region2: #{model_forward.2} parent=0 // pred_check
    _
  $region3: #{model_forward.2} parent=0 // pred_check_branch
    %10 = sbr.rel (0) target = $region5
  $region4: #{model_forward.2} parent=0 // pred_region
    _
  $region5: #{model_forward.2} parent=0 // pred_fallthru
    _
  // Predicated region
  $region6: #{model_forward.2} parent=0 // pred_check
    _
  $region7: #{model_forward.2} parent=0 // pred_check_branch
    %12 = sbr.rel (0) target = $region9
  $region8: #{model_forward.2} parent=0 // pred_region
    _
  $region9: #{model_forward.2} parent=0 // pred_fallthru
    _
  %v14 = vld [vmem:[%s0] sm:$0xf]
  %v15 = vld [vmem:[%s0 + $0x4] sm:$0xf]
  %v16 = vld [vmem:[%s0 + $0x8] sm:$0xf]
  %v17 = vld [vmem:[%s0 + $0xc] sm:$0xf]
  %v18 = vld [vmem:[%s0 + $0x10] sm:$0xf]
  %v19 = vld [vmem:[%s0 + $0x14] sm:$0xf]
  %v20 = vld [vmem:[%s0 + $0x18] sm:$0xf]
  %v21 = vld [vmem:[%s0 + $0x1c] sm:$0xf]
  %v22 = vld [vmem:[%s0 + $0x20] sm:$0xf]
  %v23 = vld [vmem:[%s0 + $0x24] sm:$0xf]
  %v24 = vld [vmem:[%s0 + $0x28] sm:$0xf]
  %v25 = vld [vmem:[%s0 + $0x2c] sm:$0xf]
  %v26 = vld [vmem:[%s0 + $0x30] sm:$0xf]
  %v27 = vld [vmem:[%s0 + $0x34] sm:$0xf]
  %v28 = vld [vmem:[%s0 + $0x38] sm:$0xf]
  %v29 = vld [vmem:[%s0 + $0x3c] sm:$0xf]
  %v30 = vld [vmem:[%s1] sm:$0xff]
  %v31 = vld [vmem:[%s1 + $0x8] sm:$0xff]
  %v32 = vld [vmem:[%s1 + $0x10] sm:$0xff]
  %v33 = vld [vmem:[%s1 + $0x18] sm:$0xff]
  %v34 = vld [vmem:[%s1 + $0x20] sm:$0xff]
  %v35 = vld [vmem:[%s1 + $0x28] sm:$0xff]
  %v36 = vld [vmem:[%s1 + $0x30] sm:$0xff]
  %v37 = vld [vmem:[%s1 + $0x38] sm:$0xff]
  %v38 = vld [vmem:[%s1 + $0x40] sm:$0xff]
  %v39 = vld [vmem:[%s1 + $0x48] sm:$0xff]
  %v40 = vld [vmem:[%s1 + $0x50] sm:$0xff]
  %v41 = vld [vmem:[%s1 + $0x58] sm:$0xff]
  %v42 = vld [vmem:[%s1 + $0x60] sm:$0xff]
  %v43 = vld [vmem:[%s1 + $0x68] sm:$0xff]
  %v44 = vld [vmem:[%s1 + $0x70] sm:$0xff]
  %v45 = vld [vmem:[%s1 + $0x78] sm:$0xff]
  %v46 = vld [vmem:[%s1 + $0x80] sm:$0xff]
  %v47 = vld [vmem:[%s1 + $0x88] sm:$0xff]
  %v48 = vld [vmem:[%s1 + $0x90] sm:$0xff]
  %v49 = vld [vmem:[%s1 + $0x98] sm:$0xff]
  %v50 = vld [vmem:[%s1 + $0xa0] sm:$0xff]
  %v51 = vld [vmem:[%s1 + $0xa8] sm:$0xff]
  %v52 = vld [vmem:[%s1 + $0xb0] sm:$0xff]
  %v53 = vld [vmem:[%s1 + $0xb8] sm:$0xff]
  %v54 = vld [vmem:[%s1 + $0xc0] sm:$0xff]
  %v55 = vld [vmem:[%s1 + $0xc8] sm:$0xff]
  %v56 = vld [vmem:[%s1 + $0xd0] sm:$0xff]
  %v57 = vld [vmem:[%s1 + $0xd8] sm:$0xff]
  %v58 = vld [vmem:[%s1 + $0xe0] sm:$0xff]
  %v59 = vld [vmem:[%s1 + $0xe8] sm:$0xff]
  %v60 = vld [vmem:[%s1 + $0xf0] sm:$0xff]
  %v61 = vld [vmem:[%s1 + $0xf8] sm:$0xff]
  %v62 = vld [vmem:[%s1 + $0x100] sm:$0xff]
  %v63 = vld [vmem:[%s1 + $0x108] sm:$0xff]
  %v64 = vld [vmem:[%s1 + $0x110] sm:$0xff]
  %v65 = vld [vmem:[%s1 + $0x118] sm:$0xff]
  %v66 = vld [vmem:[%s1 + $0x120] sm:$0xff]
  %v67 = vld [vmem:[%s1 + $0x128] sm:$0xff]
  %v68 = vld [vmem:[%s1 + $0x130] sm:$0xff]
  %v69 = vld [vmem:[%s1 + $0x138] sm:$0xff]
  %v70 = vld [vmem:[%s1 + $0x140] sm:$0xff]
  %v71 = vld [vmem:[%s1 + $0x148] sm:$0xff]
  %v72 = vld [vmem:[%s1 + $0x150] sm:$0xff]
  %v73 = vld [vmem:[%s1 + $0x158] sm:$0xff]
  %v74 = vld [vmem:[%s1 + $0x160] sm:$0xff]
  %v75 = vld [vmem:[%s1 + $0x168] sm:$0xff]
  %v76 = vld [vmem:[%s1 + $0x170] sm:$0xff]
  %v77 = vld [vmem:[%s1 + $0x178] sm:$0xff]
  %v78 = vld [vmem:[%s1 + $0x180] sm:$0xff]
  %v79 = vld [vmem:[%s1 + $0x188] sm:$0xff]
  %v80 = vld [vmem:[%s1 + $0x190] sm:$0xff]
  %v81 = vld [vmem:[%s1 + $0x198] sm:$0xff]
  %v82 = vld [vmem:[%s1 + $0x1a0] sm:$0xff]
  %v83 = vld [vmem:[%s1 + $0x1a8] sm:$0xff]
  %v84 = vld [vmem:[%s1 + $0x1b0] sm:$0xff]
  %v85 = vld [vmem:[%s1 + $0x1b8] sm:$0xff]
  %v86 = vld [vmem:[%s1 + $0x1c0] sm:$0xff]
  %v87 = vld [vmem:[%s1 + $0x1c8] sm:$0xff]
  %v88 = vld [vmem:[%s1 + $0x1d0] sm:$0xff]
  %v89 = vld [vmem:[%s1 + $0x1d8] sm:$0xff]
  %v90 = vld [vmem:[%s1 + $0x1e0] sm:$0xff]
  %v91 = vld [vmem:[%s1 + $0x1e8] sm:$0xff]
  %v92 = vld [vmem:[%s1 + $0x1f0] sm:$0xff]
  %v93 = vld [vmem:[%s1 + $0x1f8] sm:$0xff]
  %v110 = vunpack.c.l.b16 %v14
  %v111 = vunpack.c.l.b16 %v15
  %v112 = vunpack.c.l.b16 %v16
  %v113 = vunpack.c.l.b16 %v17
  %v114 = vunpack.c.l.b16 %v18
  %v115 = vunpack.c.l.b16 %v19
  %v116 = vunpack.c.l.b16 %v20
  %v117 = vunpack.c.l.b16 %v21
  %v118 = vunpack.c.l.b16 %v22
  %v119 = vunpack.c.l.b16 %v23
  %v120 = vunpack.c.l.b16 %v24
  %v121 = vunpack.c.l.b16 %v25
  %v122 = vunpack.c.l.b16 %v26
  %v123 = vunpack.c.l.b16 %v27
  %v124 = vunpack.c.l.b16 %v28
  %v125 = vunpack.c.l.b16 %v29
  %v126 = vpack.c.b16 %v111, %v110
  %v127 = vpack.c.b16 %v113, %v112
  %v128 = vpack.c.b16 %v115, %v114
  %v129 = vpack.c.b16 %v117, %v116
  %v130 = vpack.c.b16 %v119, %v118
  %v131 = vpack.c.b16 %v121, %v120
  %v132 = vpack.c.b16 %v123, %v122
  %v133 = vpack.c.b16 %v125, %v124
  %v206 = vunpack.c.l.b16 %v30
  %v207 = vunpack.c.h.b16 %v30
  %v208 = vunpack.c.l.b16 %v31
  %v209 = vunpack.c.h.b16 %v31
  %v210 = vunpack.c.l.b16 %v32
  %v211 = vunpack.c.h.b16 %v32
  %v212 = vunpack.c.l.b16 %v33
  %v213 = vunpack.c.h.b16 %v33
  %v214 = vunpack.c.l.b16 %v34
  %v215 = vunpack.c.h.b16 %v34
  %v216 = vunpack.c.l.b16 %v35
  %v217 = vunpack.c.h.b16 %v35
  %v218 = vunpack.c.l.b16 %v36
  %v219 = vunpack.c.h.b16 %v36
  %v220 = vunpack.c.l.b16 %v37
  %v221 = vunpack.c.h.b16 %v37
  %v222 = vunpack.c.l.b16 %v38
  %v223 = vunpack.c.h.b16 %v38
  %v224 = vunpack.c.l.b16 %v39
  %v225 = vunpack.c.h.b16 %v39
  %v226 = vunpack.c.l.b16 %v40
  %v227 = vunpack.c.h.b16 %v40
  %v228 = vunpack.c.l.b16 %v41
  %v229 = vunpack.c.h.b16 %v41
  %v230 = vunpack.c.l.b16 %v42
  %v231 = vunpack.c.h.b16 %v42
  %v232 = vunpack.c.l.b16 %v43
  %v233 = vunpack.c.h.b16 %v43
  %v234 = vunpack.c.l.b16 %v44
  %v235 = vunpack.c.h.b16 %v44
  %v236 = vunpack.c.l.b16 %v45
  %v237 = vunpack.c.h.b16 %v45
  %v238 = vunpack.c.l.b16 %v46
  %v239 = vunpack.c.h.b16 %v46
  %v240 = vunpack.c.l.b16 %v47
  %v241 = vunpack.c.h.b16 %v47
  %v242 = vunpack.c.l.b16 %v48
  %v243 = vunpack.c.h.b16 %v48
  %v244 = vunpack.c.l.b16 %v49
  %v245 = vunpack.c.h.b16 %v49
  %v246 = vunpack.c.l.b16 %v50
  %v247 = vunpack.c.h.b16 %v50
  %v248 = vunpack.c.l.b16 %v51
  %v249 = vunpack.c.h.b16 %v51
  %v250 = vunpack.c.l.b16 %v52
  %v251 = vunpack.c.h.b16 %v52
  %v252 = vunpack.c.l.b16 %v53
  %v253 = vunpack.c.h.b16 %v53
  %v254 = vunpack.c.l.b16 %v54
  %v255 = vunpack.c.h.b16 %v54
  %v256 = vunpack.c.l.b16 %v55
  %v257 = vunpack.c.h.b16 %v55
  %v258 = vunpack.c.l.b16 %v56
  %v259 = vunpack.c.h.b16 %v56
  %v260 = vunpack.c.l.b16 %v57
  %v261 = vunpack.c.h.b16 %v57
  %v262 = vunpack.c.l.b16 %v58
  %v263 = vunpack.c.h.b16 %v58
  %v264 = vunpack.c.l.b16 %v59
  %v265 = vunpack.c.h.b16 %v59
  %v266 = vunpack.c.l.b16 %v60
  %v267 = vunpack.c.h.b16 %v60
  %v268 = vunpack.c.l.b16 %v61
  %v269 = vunpack.c.h.b16 %v61
  %v270 = vunpack.c.l.b16 %v62
  %v271 = vunpack.c.h.b16 %v62
  %v272 = vunpack.c.l.b16 %v63
  %v273 = vunpack.c.h.b16 %v63
  %v274 = vunpack.c.l.b16 %v64
  %v275 = vunpack.c.h.b16 %v64
  %v276 = vunpack.c.l.b16 %v65
  %v277 = vunpack.c.h.b16 %v65
  %v278 = vunpack.c.l.b16 %v66
  %v279 = vunpack.c.h.b16 %v66
  %v280 = vunpack.c.l.b16 %v67
  %v281 = vunpack.c.h.b16 %v67
  %v282 = vunpack.c.l.b16 %v68
  %v283 = vunpack.c.h.b16 %v68
  %v284 = vunpack.c.l.b16 %v69
  %v285 = vunpack.c.h.b16 %v69
  %v286 = vunpack.c.l.b16 %v70
  %v287 = vunpack.c.h.b16 %v70
  %v288 = vunpack.c.l.b16 %v71
  %v289 = vunpack.c.h.b16 %v71
  %v290 = vunpack.c.l.b16 %v72
  %v291 = vunpack.c.h.b16 %v72
  %v292 = vunpack.c.l.b16 %v73
  %v293 = vunpack.c.h.b16 %v73
  %v294 = vunpack.c.l.b16 %v74
  %v295 = vunpack.c.h.b16 %v74
  %v296 = vunpack.c.l.b16 %v75
  %v297 = vunpack.c.h.b16 %v75
  %v298 = vunpack.c.l.b16 %v76
  %v299 = vunpack.c.h.b16 %v76
  %v300 = vunpack.c.l.b16 %v77
  %v301 = vunpack.c.h.b16 %v77
  %v302 = vunpack.c.l.b16 %v78
  %v303 = vunpack.c.h.b16 %v78
  %v304 = vunpack.c.l.b16 %v79
  %v305 = vunpack.c.h.b16 %v79
  %v306 = vunpack.c.l.b16 %v80
  %v307 = vunpack.c.h.b16 %v80
  %v308 = vunpack.c.l.b16 %v81
  %v309 = vunpack.c.h.b16 %v81
  %v310 = vunpack.c.l.b16 %v82
  %v311 = vunpack.c.h.b16 %v82
  %v312 = vunpack.c.l.b16 %v83
  %v313 = vunpack.c.h.b16 %v83
  %v314 = vunpack.c.l.b16 %v84
  %v315 = vunpack.c.h.b16 %v84
  %v316 = vunpack.c.l.b16 %v85
  %v317 = vunpack.c.h.b16 %v85
  %v318 = vunpack.c.l.b16 %v86
  %v319 = vunpack.c.h.b16 %v86
  %v320 = vunpack.c.l.b16 %v87
  %v321 = vunpack.c.h.b16 %v87
  %v322 = vunpack.c.l.b16 %v88
  %v323 = vunpack.c.h.b16 %v88
  %v324 = vunpack.c.l.b16 %v89
  %v325 = vunpack.c.h.b16 %v89
  %v326 = vunpack.c.l.b16 %v90
  %v327 = vunpack.c.h.b16 %v90
  %v328 = vunpack.c.l.b16 %v91
  %v329 = vunpack.c.h.b16 %v91
  %v330 = vunpack.c.l.b16 %v92
  %v331 = vunpack.c.h.b16 %v92
  %v332 = vunpack.c.l.b16 %v93
  %v333 = vunpack.c.h.b16 %v93
  %v334 = vpack.c.b16 %v214, %v206
  %v335 = vpack.c.b16 %v215, %v207
  %v336 = vpack.c.b16 %v216, %v208
  %v337 = vpack.c.b16 %v217, %v209
  %v338 = vpack.c.b16 %v218, %v210
  %v339 = vpack.c.b16 %v219, %v211
  %v340 = vpack.c.b16 %v220, %v212
  %v341 = vpack.c.b16 %v221, %v213
  %v342 = vpack.c.b16 %v230, %v222
  %v343 = vpack.c.b16 %v231, %v223
  %v344 = vpack.c.b16 %v232, %v224
  %v345 = vpack.c.b16 %v233, %v225
  %v346 = vpack.c.b16 %v234, %v226
  %v347 = vpack.c.b16 %v235, %v227
  %v348 = vpack.c.b16 %v236, %v228
  %v349 = vpack.c.b16 %v237, %v229
  %v350 = vpack.c.b16 %v246, %v238
  %v351 = vpack.c.b16 %v247, %v239
  %v352 = vpack.c.b16 %v248, %v240
  %v353 = vpack.c.b16 %v249, %v241
  %v354 = vpack.c.b16 %v250, %v242
  %v355 = vpack.c.b16 %v251, %v243
  %v356 = vpack.c.b16 %v252, %v244
  %v357 = vpack.c.b16 %v253, %v245
  %v358 = vpack.c.b16 %v262, %v254
  %v359 = vpack.c.b16 %v263, %v255
  %v360 = vpack.c.b16 %v264, %v256
  %v361 = vpack.c.b16 %v265, %v257
  %v362 = vpack.c.b16 %v266, %v258
  %v363 = vpack.c.b16 %v267, %v259
  %v364 = vpack.c.b16 %v268, %v260
  %v365 = vpack.c.b16 %v269, %v261
  %v366 = vpack.c.b16 %v278, %v270
  %v367 = vpack.c.b16 %v279, %v271
  %v368 = vpack.c.b16 %v280, %v272
  %v369 = vpack.c.b16 %v281, %v273
  %v370 = vpack.c.b16 %v282, %v274
  %v371 = vpack.c.b16 %v283, %v275
  %v372 = vpack.c.b16 %v284, %v276
  %v373 = vpack.c.b16 %v285, %v277
  %v374 = vpack.c.b16 %v294, %v286
  %v375 = vpack.c.b16 %v295, %v287
  %v376 = vpack.c.b16 %v296, %v288
  %v377 = vpack.c.b16 %v297, %v289
  %v378 = vpack.c.b16 %v298, %v290
  %v379 = vpack.c.b16 %v299, %v291
  %v380 = vpack.c.b16 %v300, %v292
  %v381 = vpack.c.b16 %v301, %v293
  %v382 = vpack.c.b16 %v310, %v302
  %v383 = vpack.c.b16 %v311, %v303
  %v384 = vpack.c.b16 %v312, %v304
  %v385 = vpack.c.b16 %v313, %v305
  %v386 = vpack.c.b16 %v314, %v306
  %v387 = vpack.c.b16 %v315, %v307
  %v388 = vpack.c.b16 %v316, %v308
  %v389 = vpack.c.b16 %v317, %v309
  %v390 = vpack.c.b16 %v326, %v318
  %v391 = vpack.c.b16 %v327, %v319
  %v392 = vpack.c.b16 %v328, %v320
  %v393 = vpack.c.b16 %v329, %v321
  %v394 = vpack.c.b16 %v330, %v322
  %v395 = vpack.c.b16 %v331, %v323
  %v396 = vpack.c.b16 %v332, %v324
  %v397 = vpack.c.b16 %v333, %v325
  %462 = vmatprep.subr.bf16.mxu0 %v335
  %463 = vmatpush1.bf16.msra.mxu0 %v334
  %464 = vmatprep.subr.bf16.mxu0 %v343
  %465 = vmatpush1.bf16.msra.mxu0 %v342
  %466 = vmatprep.subr.bf16.mxu0 %v351
  %467 = vmatpush1.bf16.msra.mxu0 %v350
  %468 = vmatprep.subr.bf16.mxu0 %v359
  %469 = vmatpush1.bf16.msra.mxu0 %v358
  %470 = vmatprep.subr.bf16.mxu0 %v367
  %471 = vmatpush1.bf16.msra.mxu0 %v366
  %472 = vmatprep.subr.bf16.mxu0 %v375
  %473 = vmatpush1.bf16.msra.mxu0 %v374
  %474 = vmatprep.subr.bf16.mxu0 %v383
  %475 = vmatpush1.bf16.msra.mxu0 %v382
  %476 = vmatprep.subr.bf16.mxu0 %v391
  %477 = vmatpush1.bf16.msra.mxu0 %v390
  %478 = vmatprep.subr.bf16.mxu0 0
  %479 = vmatpush1.bf16.msra.mxu0 0
  %480 = vmatprep.subr.bf16.mxu0 0
  %481 = vmatpush1.bf16.msra.mxu0 0
  %482 = vmatprep.subr.bf16.mxu0 0
  %483 = vmatpush1.bf16.msra.mxu0 0
  %484 = vmatprep.subr.bf16.mxu0 0
  %485 = vmatpush1.bf16.msra.mxu0 0
  %486 = vmatprep.subr.bf16.mxu0 0
  %487 = vmatpush1.bf16.msra.mxu0 0
  %488 = vmatprep.subr.bf16.mxu0 0
  %489 = vmatpush1.bf16.msra.mxu0 0
  %490 = vmatprep.subr.bf16.mxu0 0
  %491 = vmatpush1.bf16.msra.mxu0 0
  %492 = vmatprep.subr.bf16.mxu0 0
  %493 = vmatpush1.bf16.msra.mxu0 0
  %494 = vmatprep.mubr.bf16.mxu0 0
  %495 = vmatmul.mubr.bf16.gmra.mrb[0].mxu0 %v126
  %v496 = vpop.f32.mrb[0].mxu0
  %v497 = vadd.f32 0.0, %v496
  %v498 = vpop.f32.mrb[0].mxu0
  %v499 = vadd.f32 0.0, %v498
  %v500 = vpop.f32.mrb[0].mxu0
  %v501 = vadd.f32 0.0, %v500
  %v502 = vpop.f32.mrb[0].mxu0
  %v503 = vadd.f32 0.0, %v502
  %504 = vmatprep.mubr.bf16.mxu0 0
  %505 = vmatmul.mubr.bf16.gmra.mrb[0].mxu0 %v127
  %v506 = vpop.f32.mrb[0].mxu0
  %v507 = vadd.f32 0.0, %v506
  %v508 = vpop.f32.mrb[0].mxu0
  %v509 = vadd.f32 0.0, %v508
  %v510 = vpop.f32.mrb[0].mxu0
  %v511 = vadd.f32 0.0, %v510
  %v512 = vpop.f32.mrb[0].mxu0
  %v513 = vadd.f32 0.0, %v512
  %514 = vmatprep.mubr.bf16.mxu0 0
  %515 = vmatmul.mubr.bf16.gmra.mrb[0].mxu0 %v128
  %v516 = vpop.f32.mrb[0].mxu0
  %v517 = vadd.f32 0.0, %v516
  %v518 = vpop.f32.mrb[0].mxu0
  %v519 = vadd.f32 0.0, %v518
  %v520 = vpop.f32.mrb[0].mxu0
  %v521 = vadd.f32 0.0, %v520
  %v522 = vpop.f32.mrb[0].mxu0
  %v523 = vadd.f32 0.0, %v522
  %524 = vmatprep.mubr.bf16.mxu0 0
  %525 = vmatmul.mubr.bf16.gmra.mrb[0].mxu0 %v129
  %v526 = vpop.f32.mrb[0].mxu0
  %v527 = vadd.f32 0.0, %v526
  %v528 = vpop.f32.mrb[0].mxu0
  %v529 = vadd.f32 0.0, %v528
  %v530 = vpop.f32.mrb[0].mxu0
  %v531 = vadd.f32 0.0, %v530
  %v532 = vpop.f32.mrb[0].mxu0
  %v533 = vadd.f32 0.0, %v532
  %534 = vmatprep.mubr.bf16.mxu0 0
  %535 = vmatmul.mubr.bf16.gmra.mrb[0].mxu0 %v130
  %v536 = vpop.f32.mrb[0].mxu0
  %v537 = vadd.f32 0.0, %v536
  %v538 = vpop.f32.mrb[0].mxu0
  %v539 = vadd.f32 0.0, %v538
  %v540 = vpop.f32.mrb[0].mxu0
  %v541 = vadd.f32 0.0, %v540
  %v542 = vpop.f32.mrb[0].mxu0
  %v543 = vadd.f32 0.0, %v542
  %544 = vmatprep.mubr.bf16.mxu0 0
  %545 = vmatmul.mubr.bf16.gmra.mrb[0].mxu0 %v131
  %v546 = vpop.f32.mrb[0].mxu0
  %v547 = vadd.f32 0.0, %v546
  %v548 = vpop.f32.mrb[0].mxu0
  %v549 = vadd.f32 0.0, %v548
  %v550 = vpop.f32.mrb[0].mxu0
  %v551 = vadd.f32 0.0, %v550
  %v552 = vpop.f32.mrb[0].mxu0
  %v553 = vadd.f32 0.0, %v552
  %554 = vmatprep.mubr.bf16.mxu0 0
  %555 = vmatmul.mubr.bf16.gmra.mrb[0].mxu0 %v132
  %v556 = vpop.f32.mrb[0].mxu0
  %v557 = vadd.f32 0.0, %v556
  %v558 = vpop.f32.mrb[0].mxu0
  %v559 = vadd.f32 0.0, %v558
  %v560 = vpop.f32.mrb[0].mxu0
  %v561 = vadd.f32 0.0, %v560
  %v562 = vpop.f32.mrb[0].mxu0
  %v563 = vadd.f32 0.0, %v562
  %564 = vmatprep.mubr.bf16.mxu0 0
  %565 = vmatmul.mubr.bf16.gmra.mrb[0].mxu0 %v133
  %v566 = vpop.f32.mrb[0].mxu0
  %v567 = vadd.f32 0.0, %v566
  %v568 = vpop.f32.mrb[0].mxu0
  %v569 = vadd.f32 0.0, %v568
  %v570 = vpop.f32.mrb[0].mxu0
  %v571 = vadd.f32 0.0, %v570
  %v572 = vpop.f32.mrb[0].mxu0
  %v573 = vadd.f32 0.0, %v572
  %574 = vdwg.mxu0
  %575 = vmatprep.subr.bf16.mxu0 %v337
  %576 = vmatpush1.bf16.msra.mxu0 %v336
  %577 = vmatprep.subr.bf16.mxu0 %v345
  %578 = vmatpush1.bf16.msra.mxu0 %v344
  %579 = vmatprep.subr.bf16.mxu0 %v353
  %580 = vmatpush1.bf16.msra.mxu0 %v352
  %581 = vmatprep.subr.bf16.mxu0 %v361
  %582 = vmatpush1.bf16.msra.mxu0 %v360
  %583 = vmatprep.subr.bf16.mxu0 %v369
  %584 = vmatpush1.bf16.msra.mxu0 %v368
  %585 = vmatprep.subr.bf16.mxu0 %v377
  %586 = vmatpush1.bf16.msra.mxu0 %v376
  %587 = vmatprep.subr.bf16.mxu0 %v385
  %588 = vmatpush1.bf16.msra.mxu0 %v384
  %589 = vmatprep.subr.bf16.mxu0 %v393
  %590 = vmatpush1.bf16.msra.mxu0 %v392
  %591 = vmatprep.subr.bf16.mxu0 0
  %592 = vmatpush1.bf16.msra.mxu0 0
  %593 = vmatprep.subr.bf16.mxu0 0
  %594 = vmatpush1.bf16.msra.mxu0 0
  %595 = vmatprep.subr.bf16.mxu0 0
  %596 = vmatpush1.bf16.msra.mxu0 0
  %597 = vmatprep.subr.bf16.mxu0 0
  %598 = vmatpush1.bf16.msra.mxu0 0
  %599 = vmatprep.subr.bf16.mxu0 0
  %600 = vmatpush1.bf16.msra.mxu0 0
  %601 = vmatprep.subr.bf16.mxu0 0
  %602 = vmatpush1.bf16.msra.mxu0 0
  %603 = vmatprep.subr.bf16.mxu0 0
  %604 = vmatpush1.bf16.msra.mxu0 0
  %605 = vmatprep.subr.bf16.mxu0 0
  %606 = vmatpush1.bf16.msra.mxu0 0
  %607 = vmatprep.mubr.bf16.mxu0 0
  %608 = vmatmul.mubr.bf16.gmra.mrb[0].mxu0 %v126
  %v609 = vpop.f32.mrb[0].mxu0
  %v610 = vadd.f32 0.0, %v609
  %v611 = vpop.f32.mrb[0].mxu0
  %v612 = vadd.f32 0.0, %v611
  %v613 = vpop.f32.mrb[0].mxu0
  %v614 = vadd.f32 0.0, %v613
  %v615 = vpop.f32.mrb[0].mxu0
  %v616 = vadd.f32 0.0, %v615
  %617 = vmatprep.mubr.bf16.mxu0 0
  %618 = vmatmul.mubr.bf16.gmra.mrb[0].mxu0 %v127
  %v619 = vpop.f32.mrb[0].mxu0
  %v620 = vadd.f32 0.0, %v619
  %v621 = vpop.f32.mrb[0].mxu0
  %v622 = vadd.f32 0.0, %v621
  %v623 = vpop.f32.mrb[0].mxu0
  %v624 = vadd.f32 0.0, %v623
  %v625 = vpop.f32.mrb[0].mxu0
  %v626 = vadd.f32 0.0, %v625
  %627 = vmatprep.mubr.bf16.mxu0 0
  %628 = vmatmul.mubr.bf16.gmra.mrb[0].mxu0 %v128
  %v629 = vpop.f32.mrb[0].mxu0
  %v630 = vadd.f32 0.0, %v629
  %v631 = vpop.f32.mrb[0].mxu0
  %v632 = vadd.f32 0.0, %v631
  %v633 = vpop.f32.mrb[0].mxu0
  %v634 = vadd.f32 0.0, %v633
  %v635 = vpop.f32.mrb[0].mxu0
  %v636 = vadd.f32 0.0, %v635
  %637 = vmatprep.mubr.bf16.mxu0 0
  %638 = vmatmul.mubr.bf16.gmra.mrb[0].mxu0 %v129
  %v639 = vpop.f32.mrb[0].mxu0
  %v640 = vadd.f32 0.0, %v639
  %v641 = vpop.f32.mrb[0].mxu0
  %v642 = vadd.f32 0.0, %v641
  %v643 = vpop.f32.mrb[0].mxu0
  %v644 = vadd.f32 0.0, %v643
  %v645 = vpop.f32.mrb[0].mxu0
  %v646 = vadd.f32 0.0, %v645
  %647 = vmatprep.mubr.bf16.mxu0 0
  %648 = vmatmul.mubr.bf16.gmra.mrb[0].mxu0 %v130
  %v649 = vpop.f32.mrb[0].mxu0
  %v650 = vadd.f32 0.0, %v649
  %v651 = vpop.f32.mrb[0].mxu0
  %v652 = vadd.f32 0.0, %v651
  %v653 = vpop.f32.mrb[0].mxu0
  %v654 = vadd.f32 0.0, %v653
  %v655 = vpop.f32.mrb[0].mxu0
  %v656 = vadd.f32 0.0, %v655
  %657 = vmatprep.mubr.bf16.mxu0 0
  %658 = vmatmul.mubr.bf16.gmra.mrb[0].mxu0 %v131
  %v659 = vpop.f32.mrb[0].mxu0
  %v660 = vadd.f32 0.0, %v659
  %v661 = vpop.f32.mrb[0].mxu0
  %v662 = vadd.f32 0.0, %v661
  %v663 = vpop.f32.mrb[0].mxu0
  %v664 = vadd.f32 0.0, %v663
  %v665 = vpop.f32.mrb[0].mxu0
  %v666 = vadd.f32 0.0, %v665
  %667 = vmatprep.mubr.bf16.mxu0 0
  %668 = vmatmul.mubr.bf16.gmra.mrb[0].mxu0 %v132
  %v669 = vpop.f32.mrb[0].mxu0
  %v670 = vadd.f32 0.0, %v669
  %v671 = vpop.f32.mrb[0].mxu0
  %v672 = vadd.f32 0.0, %v671
  %v673 = vpop.f32.mrb[0].mxu0
  %v674 = vadd.f32 0.0, %v673
  %v675 = vpop.f32.mrb[0].mxu0
  %v676 = vadd.f32 0.0, %v675
  %677 = vmatprep.mubr.bf16.mxu0 0
  %678 = vmatmul.mubr.bf16.gmra.mrb[0].mxu0 %v133
  %v679 = vpop.f32.mrb[0].mxu0
  %v680 = vadd.f32 0.0, %v679
  %v681 = vpop.f32.mrb[0].mxu0
  %v682 = vadd.f32 0.0, %v681
  %v683 = vpop.f32.mrb[0].mxu0
  %v684 = vadd.f32 0.0, %v683
  %v685 = vpop.f32.mrb[0].mxu0
  %v686 = vadd.f32 0.0, %v685
  %687 = vdwg.mxu0
  %688 = vmatprep.subr.bf16.mxu0 %v339
  %689 = vmatpush1.bf16.msra.mxu0 %v338
  %690 = vmatprep.subr.bf16.mxu0 %v347
  %691 = vmatpush1.bf16.msra.mxu0 %v346
  %692 = vmatprep.subr.bf16.mxu0 %v355
  %693 = vmatpush1.bf16.msra.mxu0 %v354
  %694 = vmatprep.subr.bf16.mxu0 %v363
  %695 = vmatpush1.bf16.msra.mxu0 %v362
  %696 = vmatprep.subr.bf16.mxu0 %v371
  %697 = vmatpush1.bf16.msra.mxu0 %v370
  %698 = vmatprep.subr.bf16.mxu0 %v379
  %699 = vmatpush1.bf16.msra.mxu0 %v378
  %700 = vmatprep.subr.bf16.mxu0 %v387
  %701 = vmatpush1.bf16.msra.mxu0 %v386
  %702 = vmatprep.subr.bf16.mxu0 %v395
  %703 = vmatpush1.bf16.msra.mxu0 %v394
  %704 = vmatprep.subr.bf16.mxu0 0
  %705 = vmatpush1.bf16.msra.mxu0 0
  %706 = vmatprep.subr.bf16.mxu0 0
  %707 = vmatpush1.bf16.msra.mxu0 0
  %708 = vmatprep.subr.bf16.mxu0 0
  %709 = vmatpush1.bf16.msra.mxu0 0
  %710 = vmatprep.subr.bf16.mxu0 0
  %711 = vmatpush1.bf16.msra.mxu0 0
  %712 = vmatprep.subr.bf16.mxu0 0
  %713 = vmatpush1.bf16.msra.mxu0 0
  %714 = vmatprep.subr.bf16.mxu0 0
  %715 = vmatpush1.bf16.msra.mxu0 0
  %716 = vmatprep.subr.bf16.mxu0 0
  %717 = vmatpush1.bf16.msra.mxu0 0
  %718 = vmatprep.subr.bf16.mxu0 0
  %719 = vmatpush1.bf16.msra.mxu0 0
  %720 = vmatprep.mubr.bf16.mxu0 0
  %721 = vmatmul.mubr.bf16.gmra.mrb[0].mxu0 %v126
  %v722 = vpop.f32.mrb[0].mxu0
  %v723 = vadd.f32 0.0, %v722
  %v724 = vpop.f32.mrb[0].mxu0
  %v725 = vadd.f32 0.0, %v724
  %v726 = vpop.f32.mrb[0].mxu0
  %v727 = vadd.f32 0.0, %v726
  %v728 = vpop.f32.mrb[0].mxu0
  %v729 = vadd.f32 0.0, %v728
  %730 = vmatprep.mubr.bf16.mxu0 0
  %731 = vmatmul.mubr.bf16.gmra.mrb[0].mxu0 %v127
  %v732 = vpop.f32.mrb[0].mxu0
  %v733 = vadd.f32 0.0, %v732
  %v734 = vpop.f32.mrb[0].mxu0
  %v735 = vadd.f32 0.0, %v734
  %v736 = vpop.f32.mrb[0].mxu0
  %v737 = vadd.f32 0.0, %v736
  %v738 = vpop.f32.mrb[0].mxu0
  %v739 = vadd.f32 0.0, %v738
  %740 = vmatprep.mubr.bf16.mxu0 0
  %741 = vmatmul.mubr.bf16.gmra.mrb[0].mxu0 %v128
  %v742 = vpop.f32.mrb[0].mxu0
  %v743 = vadd.f32 0.0, %v742
  %v744 = vpop.f32.mrb[0].mxu0
  %v745 = vadd.f32 0.0, %v744
  %v746 = vpop.f32.mrb[0].mxu0
  %v747 = vadd.f32 0.0, %v746
  %v748 = vpop.f32.mrb[0].mxu0
  %v749 = vadd.f32 0.0, %v748
  %750 = vmatprep.mubr.bf16.mxu0 0
  %751 = vmatmul.mubr.bf16.gmra.mrb[0].mxu0 %v129
  %v752 = vpop.f32.mrb[0].mxu0
  %v753 = vadd.f32 0.0, %v752
  %v754 = vpop.f32.mrb[0].mxu0
  %v755 = vadd.f32 0.0, %v754
  %v756 = vpop.f32.mrb[0].mxu0
  %v757 = vadd.f32 0.0, %v756
  %v758 = vpop.f32.mrb[0].mxu0
  %v759 = vadd.f32 0.0, %v758
  %760 = vmatprep.mubr.bf16.mxu0 0
  %761 = vmatmul.mubr.bf16.gmra.mrb[0].mxu0 %v130
  %v762 = vpop.f32.mrb[0].mxu0
  %v763 = vadd.f32 0.0, %v762
  %v764 = vpop.f32.mrb[0].mxu0
  %v765 = vadd.f32 0.0, %v764
  %v766 = vpop.f32.mrb[0].mxu0
  %v767 = vadd.f32 0.0, %v766
  %v768 = vpop.f32.mrb[0].mxu0
  %v769 = vadd.f32 0.0, %v768
  %770 = vmatprep.mubr.bf16.mxu0 0
  %771 = vmatmul.mubr.bf16.gmra.mrb[0].mxu0 %v131
  %v772 = vpop.f32.mrb[0].mxu0
  %v773 = vadd.f32 0.0, %v772
  %v774 = vpop.f32.mrb[0].mxu0
  %v775 = vadd.f32 0.0, %v774
  %v776 = vpop.f32.mrb[0].mxu0
  %v777 = vadd.f32 0.0, %v776
  %v778 = vpop.f32.mrb[0].mxu0
  %v779 = vadd.f32 0.0, %v778
  %780 = vmatprep.mubr.bf16.mxu0 0
  %781 = vmatmul.mubr.bf16.gmra.mrb[0].mxu0 %v132
  %v782 = vpop.f32.mrb[0].mxu0
  %v783 = vadd.f32 0.0, %v782
  %v784 = vpop.f32.mrb[0].mxu0
  %v785 = vadd.f32 0.0, %v784
  %v786 = vpop.f32.mrb[0].mxu0
  %v787 = vadd.f32 0.0, %v786
  %v788 = vpop.f32.mrb[0].mxu0
  %v789 = vadd.f32 0.0, %v788
  %790 = vmatprep.mubr.bf16.mxu0 0
  %791 = vmatmul.mubr.bf16.gmra.mrb[0].mxu0 %v133
  %v792 = vpop.f32.mrb[0].mxu0
  %v793 = vadd.f32 0.0, %v792
  %v794 = vpop.f32.mrb[0].mxu0
  %v795 = vadd.f32 0.0, %v794
  %v796 = vpop.f32.mrb[0].mxu0
  %v797 = vadd.f32 0.0, %v796
  %v798 = vpop.f32.mrb[0].mxu0
  %v799 = vadd.f32 0.0, %v798
  %800 = vdwg.mxu0
  %801 = vmatprep.subr.bf16.mxu0 %v341
  %802 = vmatpush1.bf16.msra.mxu0 %v340
  %803 = vmatprep.subr.bf16.mxu0 %v349
  %804 = vmatpush1.bf16.msra.mxu0 %v348
  %805 = vmatprep.subr.bf16.mxu0 %v357
  %806 = vmatpush1.bf16.msra.mxu0 %v356
  %807 = vmatprep.subr.bf16.mxu0 %v365
  %808 = vmatpush1.bf16.msra.mxu0 %v364
  %809 = vmatprep.subr.bf16.mxu0 %v373
  %810 = vmatpush1.bf16.msra.mxu0 %v372
  %811 = vmatprep.subr.bf16.mxu0 %v381
  %812 = vmatpush1.bf16.msra.mxu0 %v380
  %813 = vmatprep.subr.bf16.mxu0 %v389
  %814 = vmatpush1.bf16.msra.mxu0 %v388
  %815 = vmatprep.subr.bf16.mxu0 %v397
  %816 = vmatpush1.bf16.msra.mxu0 %v396
  %817 = vmatprep.subr.bf16.mxu0 0
  %818 = vmatpush1.bf16.msra.mxu0 0
  %819 = vmatprep.subr.bf16.mxu0 0
  %820 = vmatpush1.bf16.msra.mxu0 0
  %821 = vmatprep.subr.bf16.mxu0 0
  %822 = vmatpush1.bf16.msra.mxu0 0
  %823 = vmatprep.subr.bf16.mxu0 0
  %824 = vmatpush1.bf16.msra.mxu0 0
  %825 = vmatprep.subr.bf16.mxu0 0
  %826 = vmatpush1.bf16.msra.mxu0 0
  %827 = vmatprep.subr.bf16.mxu0 0
  %828 = vmatpush1.bf16.msra.mxu0 0
  %829 = vmatprep.subr.bf16.mxu0 0
  %830 = vmatpush1.bf16.msra.mxu0 0
  %831 = vmatprep.subr.bf16.mxu0 0
  %832 = vmatpush1.bf16.msra.mxu0 0
  %833 = vmatprep.mubr.bf16.mxu0 0
  %834 = vmatmul.mubr.bf16.gmra.mrb[0].mxu0 %v126
  %v835 = vpop.f32.mrb[0].mxu0
  %v836 = vadd.f32 0.0, %v835
  %v837 = vpop.f32.mrb[0].mxu0
  %v838 = vadd.f32 0.0, %v837
  %v839 = vpop.f32.mrb[0].mxu0
  %v840 = vadd.f32 0.0, %v839
  %v841 = vpop.f32.mrb[0].mxu0
  %v842 = vadd.f32 0.0, %v841
  %843 = vmatprep.mubr.bf16.mxu0 0
  %844 = vmatmul.mubr.bf16.gmra.mrb[0].mxu0 %v127
  %v845 = vpop.f32.mrb[0].mxu0
  %v846 = vadd.f32 0.0, %v845
  %v847 = vpop.f32.mrb[0].mxu0
  %v848 = vadd.f32 0.0, %v847
  %v849 = vpop.f32.mrb[0].mxu0
  %v850 = vadd.f32 0.0, %v849
  %v851 = vpop.f32.mrb[0].mxu0
  %v852 = vadd.f32 0.0, %v851
  %853 = vmatprep.mubr.bf16.mxu0 0
  %854 = vmatmul.mubr.bf16.gmra.mrb[0].mxu0 %v128
  %v855 = vpop.f32.mrb[0].mxu0
  %v856 = vadd.f32 0.0, %v855
  %v857 = vpop.f32.mrb[0].mxu0
  %v858 = vadd.f32 0.0, %v857
  %v859 = vpop.f32.mrb[0].mxu0
  %v860 = vadd.f32 0.0, %v859
  %v861 = vpop.f32.mrb[0].mxu0
  %v862 = vadd.f32 0.0, %v861
  %863 = vmatprep.mubr.bf16.mxu0 0
  %864 = vmatmul.mubr.bf16.gmra.mrb[0].mxu0 %v129
  %v865 = vpop.f32.mrb[0].mxu0
  %v866 = vadd.f32 0.0, %v865
  %v867 = vpop.f32.mrb[0].mxu0
  %v868 = vadd.f32 0.0, %v867
  %v869 = vpop.f32.mrb[0].mxu0
  %v870 = vadd.f32 0.0, %v869
  %v871 = vpop.f32.mrb[0].mxu0
  %v872 = vadd.f32 0.0, %v871
  %873 = vmatprep.mubr.bf16.mxu0 0
  %874 = vmatmul.mubr.bf16.gmra.mrb[0].mxu0 %v130
  %v875 = vpop.f32.mrb[0].mxu0
  %v876 = vadd.f32 0.0, %v875
  %v877 = vpop.f32.mrb[0].mxu0
  %v878 = vadd.f32 0.0, %v877
  %v879 = vpop.f32.mrb[0].mxu0
  %v880 = vadd.f32 0.0, %v879
  %v881 = vpop.f32.mrb[0].mxu0
  %v882 = vadd.f32 0.0, %v881
  %883 = vmatprep.mubr.bf16.mxu0 0
  %884 = vmatmul.mubr.bf16.gmra.mrb[0].mxu0 %v131
  %v885 = vpop.f32.mrb[0].mxu0
  %v886 = vadd.f32 0.0, %v885
  %v887 = vpop.f32.mrb[0].mxu0
  %v888 = vadd.f32 0.0, %v887
  %v889 = vpop.f32.mrb[0].mxu0
  %v890 = vadd.f32 0.0, %v889
  %v891 = vpop.f32.mrb[0].mxu0
  %v892 = vadd.f32 0.0, %v891
  %893 = vmatprep.mubr.bf16.mxu0 0
  %894 = vmatmul.mubr.bf16.gmra.mrb[0].mxu0 %v132
  %v895 = vpop.f32.mrb[0].mxu0
  %v896 = vadd.f32 0.0, %v895
  %v897 = vpop.f32.mrb[0].mxu0
  %v898 = vadd.f32 0.0, %v897
  %v899 = vpop.f32.mrb[0].mxu0
  %v900 = vadd.f32 0.0, %v899
  %v901 = vpop.f32.mrb[0].mxu0
  %v902 = vadd.f32 0.0, %v901
  %903 = vmatprep.mubr.bf16.mxu0 0
  %904 = vmatmul.mubr.bf16.gmra.mrb[0].mxu0 %v133
  %v905 = vpop.f32.mrb[0].mxu0
  %v906 = vadd.f32 0.0, %v905
  %v907 = vpop.f32.mrb[0].mxu0
  %v908 = vadd.f32 0.0, %v907
  %v909 = vpop.f32.mrb[0].mxu0
  %v910 = vadd.f32 0.0, %v909
  %v911 = vpop.f32.mrb[0].mxu0
  %v912 = vadd.f32 0.0, %v911
  %913 = vdwg.mxu0
  %v914 = vadd.f32 %v497, %v501
  %v915 = vadd.f32 %v914, %v507
  %v916 = vadd.f32 %v915, %v511
  %v917 = vadd.f32 %v916, %v517
  %v918 = vadd.f32 %v917, %v521
  %v919 = vadd.f32 %v918, %v527
  %v920 = vadd.f32 %v919, %v531
  %v921 = vadd.f32 %v920, %v537
  %v922 = vadd.f32 %v921, %v541
  %v923 = vadd.f32 %v922, %v547
  %v924 = vadd.f32 %v923, %v551
  %v925 = vadd.f32 %v924, %v557
  %v926 = vadd.f32 %v925, %v561
  %v927 = vadd.f32 %v926, %v567
  %v928 = vadd.f32 %v927, %v571
  %v929 = vrot.slane %v928, 4
  %v930 = vadd.f32 %v928, %v929
  %v931 = vrot.slane %v930, 2
  %v932 = vadd.f32 %v930, %v931
  %v933 = vrot.slane %v932, 1
  %v934 = vadd.f32 %v932, %v933
  %v935 = vadd.f32 %v499, %v503
  %v936 = vadd.f32 %v935, %v509
  %v937 = vadd.f32 %v936, %v513
  %v938 = vadd.f32 %v937, %v519
  %v939 = vadd.f32 %v938, %v523
  %v940 = vadd.f32 %v939, %v529
  %v941 = vadd.f32 %v940, %v533
  %v942 = vadd.f32 %v941, %v539
  %v943 = vadd.f32 %v942, %v543
  %v944 = vadd.f32 %v943, %v549
  %v945 = vadd.f32 %v944, %v553
  %v946 = vadd.f32 %v945, %v559
  %v947 = vadd.f32 %v946, %v563
  %v948 = vadd.f32 %v947, %v569
  %v949 = vadd.f32 %v948, %v573
  %v950 = vrot.slane %v949, 4
  %v951 = vadd.f32 %v949, %v950
  %v952 = vrot.slane %v951, 2
  %v953 = vadd.f32 %v951, %v952
  %v954 = vrot.slane %v953, 1
  %v955 = vadd.f32 %v953, %v954
  %v956 = vadd.f32 %v610, %v614
  %v957 = vadd.f32 %v956, %v620
  %v958 = vadd.f32 %v957, %v624
  %v959 = vadd.f32 %v958, %v630
  %v960 = vadd.f32 %v959, %v634
  %v961 = vadd.f32 %v960, %v640
  %v962 = vadd.f32 %v961, %v644
  %v963 = vadd.f32 %v962, %v650
  %v964 = vadd.f32 %v963, %v654
  %v965 = vadd.f32 %v964, %v660
  %v966 = vadd.f32 %v965, %v664
  %v967 = vadd.f32 %v966, %v670
  %v968 = vadd.f32 %v967, %v674
  %v969 = vadd.f32 %v968, %v680
  %v970 = vadd.f32 %v969, %v684
  %v971 = vrot.slane %v970, 4
  %v972 = vadd.f32 %v970, %v971
  %v973 = vrot.slane %v972, 2
  %v974 = vadd.f32 %v972, %v973
  %v975 = vrot.slane %v974, 1
  %v976 = vadd.f32 %v974, %v975
  %v977 = vadd.f32 %v612, %v616
  %v978 = vadd.f32 %v977, %v622
  %v979 = vadd.f32 %v978, %v626
  %v980 = vadd.f32 %v979, %v632
  %v981 = vadd.f32 %v980, %v636
  %v982 = vadd.f32 %v981, %v642
  %v983 = vadd.f32 %v982, %v646
  %v984 = vadd.f32 %v983, %v652
  %v985 = vadd.f32 %v984, %v656
  %v986 = vadd.f32 %v985, %v662
  %v987 = vadd.f32 %v986, %v666
  %v988 = vadd.f32 %v987, %v672
  %v989 = vadd.f32 %v988, %v676
  %v990 = vadd.f32 %v989, %v682
  %v991 = vadd.f32 %v990, %v686
  %v992 = vrot.slane %v991, 4
  %v993 = vadd.f32 %v991, %v992
  %v994 = vrot.slane %v993, 2
  %v995 = vadd.f32 %v993, %v994
  %v996 = vrot.slane %v995, 1
  %v997 = vadd.f32 %v995, %v996
  %v998 = vadd.f32 %v723, %v727
  %v999 = vadd.f32 %v998, %v733
  %v1000 = vadd.f32 %v999, %v737
  %v1001 = vadd.f32 %v1000, %v743
  %v1002 = vadd.f32 %v1001, %v747
  %v1003 = vadd.f32 %v1002, %v753
  %v1004 = vadd.f32 %v1003, %v757
  %v1005 = vadd.f32 %v1004, %v763
  %v1006 = vadd.f32 %v1005, %v767
  %v1007 = vadd.f32 %v1006, %v773
  %v1008 = vadd.f32 %v1007, %v777
  %v1009 = vadd.f32 %v1008, %v783
  %v1010 = vadd.f32 %v1009, %v787
  %v1011 = vadd.f32 %v1010, %v793
  %v1012 = vadd.f32 %v1011, %v797
  %v1013 = vrot.slane %v1012, 4
  %v1014 = vadd.f32 %v1012, %v1013
  %v1015 = vrot.slane %v1014, 2
  %v1016 = vadd.f32 %v1014, %v1015
  %v1017 = vrot.slane %v1016, 1
  %v1018 = vadd.f32 %v1016, %v1017
  %v1019 = vadd.f32 %v725, %v729
  %v1020 = vadd.f32 %v1019, %v735
  %v1021 = vadd.f32 %v1020, %v739
  %v1022 = vadd.f32 %v1021, %v745
  %v1023 = vadd.f32 %v1022, %v749
  %v1024 = vadd.f32 %v1023, %v755
  %v1025 = vadd.f32 %v1024, %v759
  %v1026 = vadd.f32 %v1025, %v765
  %v1027 = vadd.f32 %v1026, %v769
  %v1028 = vadd.f32 %v1027, %v775
  %v1029 = vadd.f32 %v1028, %v779
  %v1030 = vadd.f32 %v1029, %v785
  %v1031 = vadd.f32 %v1030, %v789
  %v1032 = vadd.f32 %v1031, %v795
  %v1033 = vadd.f32 %v1032, %v799
  %v1034 = vrot.slane %v1033, 4
  %v1035 = vadd.f32 %v1033, %v1034
  %v1036 = vrot.slane %v1035, 2
  %v1037 = vadd.f32 %v1035, %v1036
  %v1038 = vrot.slane %v1037, 1
  %v1039 = vadd.f32 %v1037, %v1038
  %v1040 = vadd.f32 %v836, %v840
  %v1041 = vadd.f32 %v1040, %v846
  %v1042 = vadd.f32 %v1041, %v850
  %v1043 = vadd.f32 %v1042, %v856
  %v1044 = vadd.f32 %v1043, %v860
  %v1045 = vadd.f32 %v1044, %v866
  %v1046 = vadd.f32 %v1045, %v870
  %v1047 = vadd.f32 %v1046, %v876
  %v1048 = vadd.f32 %v1047, %v880
  %v1049 = vadd.f32 %v1048, %v886
  %v1050 = vadd.f32 %v1049, %v890
  %v1051 = vadd.f32 %v1050, %v896
  %v1052 = vadd.f32 %v1051, %v900
  %v1053 = vadd.f32 %v1052, %v906
  %v1054 = vadd.f32 %v1053, %v910
  %v1055 = vrot.slane %v1054, 4
  %v1056 = vadd.f32 %v1054, %v1055
  %v1057 = vrot.slane %v1056, 2
  %v1058 = vadd.f32 %v1056, %v1057
  %v1059 = vrot.slane %v1058, 1
  %v1060 = vadd.f32 %v1058, %v1059
  %v1061 = vadd.f32 %v838, %v842
  %v1062 = vadd.f32 %v1061, %v848
  %v1063 = vadd.f32 %v1062, %v852
  %v1064 = vadd.f32 %v1063, %v858
  %v1065 = vadd.f32 %v1064, %v862
  %v1066 = vadd.f32 %v1065, %v868
  %v1067 = vadd.f32 %v1066, %v872
  %v1068 = vadd.f32 %v1067, %v878
  %v1069 = vadd.f32 %v1068, %v882
  %v1070 = vadd.f32 %v1069, %v888
  %v1071 = vadd.f32 %v1070, %v892
  %v1072 = vadd.f32 %v1071, %v898
  %v1073 = vadd.f32 %v1072, %v902
  %v1074 = vadd.f32 %v1073, %v908
  %v1075 = vadd.f32 %v1074, %v912
  %v1076 = vrot.slane %v1075, 4
  %v1077 = vadd.f32 %v1075, %v1076
  %v1078 = vrot.slane %v1077, 2
  %v1079 = vadd.f32 %v1077, %v1078
  %v1080 = vrot.slane %v1079, 1
  %v1081 = vadd.f32 %v1079, %v1080
  %v1090 = vcombine.low %v934, %v955
  %v1091 = vcombine.low %v976, %v997
  %v1092 = vcombine.low %v1018, %v1039
  %v1093 = vcombine.low %v1060, %v1081
  %v1095 = vunpack.c.l.s4 1966171168
  %v1096 = vunpack.c.0.s8 %v1095
  %v1097 = vlaneseq
  %v1098 = vshrl.u32 %v1097, 7
  %v1099 = vsub.s32 %v1096, %v1098
  %v1100 = vrot.slane %v1090, %v1099
  %v1102 = vunpack.c.l.s4 1966171168
  %v1103 = vunpack.c.0.s8 %v1102
  %v1104 = vlaneseq
  %v1105 = vshrl.u32 %v1104, 7
  %v1106 = vsub.s32 %v1103, %v1105
  %v1107 = vrot.slane %v1091, %v1106
  %v1109 = vunpack.c.l.s4 1966171168
  %v1110 = vunpack.c.0.s8 %v1109
  %v1111 = vlaneseq
  %v1112 = vshrl.u32 %v1111, 7
  %v1113 = vsub.s32 %v1110, %v1112
  %v1114 = vrot.slane %v1092, %v1113
  %v1116 = vunpack.c.l.s4 1966171168
  %v1117 = vunpack.c.0.s8 %v1116
  %v1118 = vlaneseq
  %v1119 = vshrl.u32 %v1118, 7
  %v1120 = vsub.s32 %v1117, %v1119
  %v1121 = vrot.slane %v1093, %v1120
  %v1122 = vcombine.low %v1100, %v1107
  %v1123 = vcombine.low %v1114, %v1121
  %v1125 = vunpack.c.l.s4 1966171168
  %v1126 = vunpack.c.0.s8 %v1125
  %v1127 = vlaneseq
  %v1128 = vshrl.u32 %v1127, 7
  %v1129 = vsub.s32 %v1126, %v1128
  %v1130 = vrot.slane %v1122, %v1129
  %v1132 = vunpack.c.l.s4 1966171168
  %v1133 = vunpack.c.0.s8 %v1132
  %v1134 = vlaneseq
  %v1135 = vshrl.u32 %v1134, 7
  %v1136 = vsub.s32 %v1133, %v1135
  %v1137 = vrot.slane %v1123, %v1136
  %v1138 = vcombine.low %v1130, %v1137
  %1140 = vst [vmem:[%s2] sm:$0xff] %v1138
  %v1141 = vmul.f32 %v497, %v497
  %v1142 = vmul.f32 %v499, %v499
  %v1143 = vmul.f32 %v610, %v610
  %v1144 = vmul.f32 %v612, %v612
  %v1145 = vmul.f32 %v723, %v723
  %v1146 = vmul.f32 %v725, %v725
  %v1147 = vmul.f32 %v836, %v836
  %v1148 = vmul.f32 %v838, %v838
  %v1149 = vmul.f32 %v501, %v501
  %v1150 = vmul.f32 %v503, %v503
  %v1151 = vmul.f32 %v614, %v614
  %v1152 = vmul.f32 %v616, %v616
  %v1153 = vmul.f32 %v727, %v727
  %v1154 = vmul.f32 %v729, %v729
  %v1155 = vmul.f32 %v840, %v840
  %v1156 = vmul.f32 %v842, %v842
  %v1157 = vmul.f32 %v507, %v507
  %v1158 = vmul.f32 %v509, %v509
  %v1159 = vmul.f32 %v620, %v620
  %v1160 = vmul.f32 %v622, %v622
  %v1161 = vmul.f32 %v733, %v733
  %v1162 = vmul.f32 %v735, %v735
  %v1163 = vmul.f32 %v846, %v846
  %v1164 = vmul.f32 %v848, %v848
  %v1165 = vmul.f32 %v511, %v511
  %v1166 = vmul.f32 %v513, %v513
  %v1167 = vmul.f32 %v624, %v624
  %v1168 = vmul.f32 %v626, %v626
  %v1169 = vmul.f32 %v737, %v737
  %v1170 = vmul.f32 %v739, %v739
  %v1171 = vmul.f32 %v850, %v850
  %v1172 = vmul.f32 %v852, %v852
  %v1173 = vmul.f32 %v517, %v517
  %v1174 = vmul.f32 %v519, %v519
  %v1175 = vmul.f32 %v630, %v630
  %v1176 = vmul.f32 %v632, %v632
  %v1177 = vmul.f32 %v743, %v743
  %v1178 = vmul.f32 %v745, %v745
  %v1179 = vmul.f32 %v856, %v856
  %v1180 = vmul.f32 %v858, %v858
  %v1181 = vmul.f32 %v521, %v521
  %v1182 = vmul.f32 %v523, %v523
  %v1183 = vmul.f32 %v634, %v634
  %v1184 = vmul.f32 %v636, %v636
  %v1185 = vmul.f32 %v747, %v747
  %v1186 = vmul.f32 %v749, %v749
  %v1187 = vmul.f32 %v860, %v860
  %v1188 = vmul.f32 %v862, %v862
  %v1189 = vmul.f32 %v527, %v527
  %v1190 = vmul.f32 %v529, %v529
  %v1191 = vmul.f32 %v640, %v640
  %v1192 = vmul.f32 %v642, %v642
  %v1193 = vmul.f32 %v753, %v753
  %v1194 = vmul.f32 %v755, %v755
  %v1195 = vmul.f32 %v866, %v866
  %v1196 = vmul.f32 %v868, %v868
  %v1197 = vmul.f32 %v531, %v531
  %v1198 = vmul.f32 %v533, %v533
  %v1199 = vmul.f32 %v644, %v644
  %v1200 = vmul.f32 %v646, %v646
  %v1201 = vmul.f32 %v757, %v757
  %v1202 = vmul.f32 %v759, %v759
  %v1203 = vmul.f32 %v870, %v870
  %v1204 = vmul.f32 %v872, %v872
  %v1205 = vmul.f32 %v537, %v537
  %v1206 = vmul.f32 %v539, %v539
  %v1207 = vmul.f32 %v650, %v650
  %v1208 = vmul.f32 %v652, %v652
  %v1209 = vmul.f32 %v763, %v763
  %v1210 = vmul.f32 %v765, %v765
  %v1211 = vmul.f32 %v876, %v876
  %v1212 = vmul.f32 %v878, %v878
  %v1213 = vmul.f32 %v541, %v541
  %v1214 = vmul.f32 %v543, %v543
  %v1215 = vmul.f32 %v654, %v654
  %v1216 = vmul.f32 %v656, %v656
  %v1217 = vmul.f32 %v767, %v767
  %v1218 = vmul.f32 %v769, %v769
  %v1219 = vmul.f32 %v880, %v880
  %v1220 = vmul.f32 %v882, %v882
  %v1221 = vmul.f32 %v547, %v547
  %v1222 = vmul.f32 %v549, %v549
  %v1223 = vmul.f32 %v660, %v660
  %v1224 = vmul.f32 %v662, %v662
  %v1225 = vmul.f32 %v773, %v773
  %v1226 = vmul.f32 %v775, %v775
  %v1227 = vmul.f32 %v886, %v886
  %v1228 = vmul.f32 %v888, %v888
  %v1229 = vmul.f32 %v551, %v551
  %v1230 = vmul.f32 %v553, %v553
  %v1231 = vmul.f32 %v664, %v664
  %v1232 = vmul.f32 %v666, %v666
  %v1233 = vmul.f32 %v777, %v777
  %v1234 = vmul.f32 %v779, %v779
  %v1235 = vmul.f32 %v890, %v890
  %v1236 = vmul.f32 %v892, %v892
  %v1237 = vmul.f32 %v557, %v557
  %v1238 = vmul.f32 %v559, %v559
  %v1239 = vmul.f32 %v670, %v670
  %v1240 = vmul.f32 %v672, %v672
  %v1241 = vmul.f32 %v783, %v783
  %v1242 = vmul.f32 %v785, %v785
  %v1243 = vmul.f32 %v896, %v896
  %v1244 = vmul.f32 %v898, %v898
  %v1245 = vmul.f32 %v561, %v561
  %v1246 = vmul.f32 %v563, %v563
  %v1247 = vmul.f32 %v674, %v674
  %v1248 = vmul.f32 %v676, %v676
  %v1249 = vmul.f32 %v787, %v787
  %v1250 = vmul.f32 %v789, %v789
  %v1251 = vmul.f32 %v900, %v900
  %v1252 = vmul.f32 %v902, %v902
  %v1253 = vmul.f32 %v567, %v567
  %v1254 = vmul.f32 %v569, %v569
  %v1255 = vmul.f32 %v680, %v680
  %v1256 = vmul.f32 %v682, %v682
  %v1257 = vmul.f32 %v793, %v793
  %v1258 = vmul.f32 %v795, %v795
  %v1259 = vmul.f32 %v906, %v906
  %v1260 = vmul.f32 %v908, %v908
  %v1261 = vmul.f32 %v571, %v571
  %v1262 = vmul.f32 %v573, %v573
  %v1263 = vmul.f32 %v684, %v684
  %v1264 = vmul.f32 %v686, %v686
  %v1265 = vmul.f32 %v797, %v797
  %v1266 = vmul.f32 %v799, %v799
  %v1267 = vmul.f32 %v910, %v910
  %v1268 = vmul.f32 %v912, %v912
  %v1269 = vadd.f32 %v1141, %v1149
  %v1270 = vadd.f32 %v1269, %v1157
  %v1271 = vadd.f32 %v1270, %v1165
  %v1272 = vadd.f32 %v1271, %v1173
  %v1273 = vadd.f32 %v1272, %v1181
  %v1274 = vadd.f32 %v1273, %v1189
  %v1275 = vadd.f32 %v1274, %v1197
  %v1276 = vadd.f32 %v1275, %v1205
  %v1277 = vadd.f32 %v1276, %v1213
  %v1278 = vadd.f32 %v1277, %v1221
  %v1279 = vadd.f32 %v1278, %v1229
  %v1280 = vadd.f32 %v1279, %v1237
  %v1281 = vadd.f32 %v1280, %v1245
  %v1282 = vadd.f32 %v1281, %v1253
  %v1283 = vadd.f32 %v1282, %v1261
  %v1284 = vrot.slane %v1283, 4
  %v1285 = vadd.f32 %v1283, %v1284
  %v1286 = vrot.slane %v1285, 2
  %v1287 = vadd.f32 %v1285, %v1286
  %v1288 = vrot.slane %v1287, 1
  %v1289 = vadd.f32 %v1287, %v1288
  %v1290 = vadd.f32 %v1142, %v1150
  %v1291 = vadd.f32 %v1290, %v1158
  %v1292 = vadd.f32 %v1291, %v1166
  %v1293 = vadd.f32 %v1292, %v1174
  %v1294 = vadd.f32 %v1293, %v1182
  %v1295 = vadd.f32 %v1294, %v1190
  %v1296 = vadd.f32 %v1295, %v1198
  %v1297 = vadd.f32 %v1296, %v1206
  %v1298 = vadd.f32 %v1297, %v1214
  %v1299 = vadd.f32 %v1298, %v1222
  %v1300 = vadd.f32 %v1299, %v1230
  %v1301 = vadd.f32 %v1300, %v1238
  %v1302 = vadd.f32 %v1301, %v1246
  %v1303 = vadd.f32 %v1302, %v1254
  %v1304 = vadd.f32 %v1303, %v1262
  %v1305 = vrot.slane %v1304, 4
  %v1306 = vadd.f32 %v1304, %v1305
  %v1307 = vrot.slane %v1306, 2
  %v1308 = vadd.f32 %v1306, %v1307
  %v1309 = vrot.slane %v1308, 1
  %v1310 = vadd.f32 %v1308, %v1309
  %v1311 = vadd.f32 %v1143, %v1151
  %v1312 = vadd.f32 %v1311, %v1159
  %v1313 = vadd.f32 %v1312, %v1167
  %v1314 = vadd.f32 %v1313, %v1175
  %v1315 = vadd.f32 %v1314, %v1183
  %v1316 = vadd.f32 %v1315, %v1191
  %v1317 = vadd.f32 %v1316, %v1199
  %v1318 = vadd.f32 %v1317, %v1207
  %v1319 = vadd.f32 %v1318, %v1215
  %v1320 = vadd.f32 %v1319, %v1223
  %v1321 = vadd.f32 %v1320, %v1231
  %v1322 = vadd.f32 %v1321, %v1239
  %v1323 = vadd.f32 %v1322, %v1247
  %v1324 = vadd.f32 %v1323, %v1255
  %v1325 = vadd.f32 %v1324, %v1263
  %v1326 = vrot.slane %v1325, 4
  %v1327 = vadd.f32 %v1325, %v1326
  %v1328 = vrot.slane %v1327, 2
  %v1329 = vadd.f32 %v1327, %v1328
  %v1330 = vrot.slane %v1329, 1
  %v1331 = vadd.f32 %v1329, %v1330
  %v1332 = vadd.f32 %v1144, %v1152
  %v1333 = vadd.f32 %v1332, %v1160
  %v1334 = vadd.f32 %v1333, %v1168
  %v1335 = vadd.f32 %v1334, %v1176
  %v1336 = vadd.f32 %v1335, %v1184
  %v1337 = vadd.f32 %v1336, %v1192
  %v1338 = vadd.f32 %v1337, %v1200
  %v1339 = vadd.f32 %v1338, %v1208
  %v1340 = vadd.f32 %v1339, %v1216
  %v1341 = vadd.f32 %v1340, %v1224
  %v1342 = vadd.f32 %v1341, %v1232
  %v1343 = vadd.f32 %v1342, %v1240
  %v1344 = vadd.f32 %v1343, %v1248
  %v1345 = vadd.f32 %v1344, %v1256
  %v1346 = vadd.f32 %v1345, %v1264
  %v1347 = vrot.slane %v1346, 4
  %v1348 = vadd.f32 %v1346, %v1347
  %v1349 = vrot.slane %v1348, 2
  %v1350 = vadd.f32 %v1348, %v1349
  %v1351 = vrot.slane %v1350, 1
  %v1352 = vadd.f32 %v1350, %v1351
  %v1353 = vadd.f32 %v1145, %v1153
  %v1354 = vadd.f32 %v1353, %v1161
  %v1355 = vadd.f32 %v1354, %v1169
  %v1356 = vadd.f32 %v1355, %v1177
  %v1357 = vadd.f32 %v1356, %v1185
  %v1358 = vadd.f32 %v1357, %v1193
  %v1359 = vadd.f32 %v1358, %v1201
  %v1360 = vadd.f32 %v1359, %v1209
  %v1361 = vadd.f32 %v1360, %v1217
  %v1362 = vadd.f32 %v1361, %v1225
  %v1363 = vadd.f32 %v1362, %v1233
  %v1364 = vadd.f32 %v1363, %v1241
  %v1365 = vadd.f32 %v1364, %v1249
  %v1366 = vadd.f32 %v1365, %v1257
  %v1367 = vadd.f32 %v1366, %v1265
  %v1368 = vrot.slane %v1367, 4
  %v1369 = vadd.f32 %v1367, %v1368
  %v1370 = vrot.slane %v1369, 2
  %v1371 = vadd.f32 %v1369, %v1370
  %v1372 = vrot.slane %v1371, 1
  %v1373 = vadd.f32 %v1371, %v1372
  %v1374 = vadd.f32 %v1146, %v1154
  %v1375 = vadd.f32 %v1374, %v1162
  %v1376 = vadd.f32 %v1375, %v1170
  %v1377 = vadd.f32 %v1376, %v1178
  %v1378 = vadd.f32 %v1377, %v1186
  %v1379 = vadd.f32 %v1378, %v1194
  %v1380 = vadd.f32 %v1379, %v1202
  %v1381 = vadd.f32 %v1380, %v1210
  %v1382 = vadd.f32 %v1381, %v1218
  %v1383 = vadd.f32 %v1382, %v1226
  %v1384 = vadd.f32 %v1383, %v1234
  %v1385 = vadd.f32 %v1384, %v1242
  %v1386 = vadd.f32 %v1385, %v1250
  %v1387 = vadd.f32 %v1386, %v1258
  %v1388 = vadd.f32 %v1387, %v1266
  %v1389 = vrot.slane %v1388, 4
  %v1390 = vadd.f32 %v1388, %v1389
  %v1391 = vrot.slane %v1390, 2
  %v1392 = vadd.f32 %v1390, %v1391
  %v1393 = vrot.slane %v1392, 1
  %v1394 = vadd.f32 %v1392, %v1393
  %v1395 = vadd.f32 %v1147, %v1155
  %v1396 = vadd.f32 %v1395, %v1163
  %v1397 = vadd.f32 %v1396, %v1171
  %v1398 = vadd.f32 %v1397, %v1179
  %v1399 = vadd.f32 %v1398, %v1187
  %v1400 = vadd.f32 %v1399, %v1195
  %v1401 = vadd.f32 %v1400, %v1203
  %v1402 = vadd.f32 %v1401, %v1211
  %v1403 = vadd.f32 %v1402, %v1219
  %v1404 = vadd.f32 %v1403, %v1227
  %v1405 = vadd.f32 %v1404, %v1235
  %v1406 = vadd.f32 %v1405, %v1243
  %v1407 = vadd.f32 %v1406, %v1251
  %v1408 = vadd.f32 %v1407, %v1259
  %v1409 = vadd.f32 %v1408, %v1267
  %v1410 = vrot.slane %v1409, 4
  %v1411 = vadd.f32 %v1409, %v1410
  %v1412 = vrot.slane %v1411, 2
  %v1413 = vadd.f32 %v1411, %v1412
  %v1414 = vrot.slane %v1413, 1
  %v1415 = vadd.f32 %v1413, %v1414
  %v1416 = vadd.f32 %v1148, %v1156
  %v1417 = vadd.f32 %v1416, %v1164
  %v1418 = vadd.f32 %v1417, %v1172
  %v1419 = vadd.f32 %v1418, %v1180
  %v1420 = vadd.f32 %v1419, %v1188
  %v1421 = vadd.f32 %v1420, %v1196
  %v1422 = vadd.f32 %v1421, %v1204
  %v1423 = vadd.f32 %v1422, %v1212
  %v1424 = vadd.f32 %v1423, %v1220
  %v1425 = vadd.f32 %v1424, %v1228
  %v1426 = vadd.f32 %v1425, %v1236
  %v1427 = vadd.f32 %v1426, %v1244
  %v1428 = vadd.f32 %v1427, %v1252
  %v1429 = vadd.f32 %v1428, %v1260
  %v1430 = vadd.f32 %v1429, %v1268
  %v1431 = vrot.slane %v1430, 4
  %v1432 = vadd.f32 %v1430, %v1431
  %v1433 = vrot.slane %v1432, 2
  %v1434 = vadd.f32 %v1432, %v1433
  %v1435 = vrot.slane %v1434, 1
  %v1436 = vadd.f32 %v1434, %v1435
  %v1445 = vcombine.low %v1289, %v1310
  %v1446 = vcombine.low %v1331, %v1352
  %v1447 = vcombine.low %v1373, %v1394
  %v1448 = vcombine.low %v1415, %v1436
  %v1450 = vunpack.c.l.s4 1966171168
  %v1451 = vunpack.c.0.s8 %v1450
  %v1452 = vlaneseq
  %v1453 = vshrl.u32 %v1452, 7
  %v1454 = vsub.s32 %v1451, %v1453
  %v1455 = vrot.slane %v1445, %v1454
  %v1457 = vunpack.c.l.s4 1966171168
  %v1458 = vunpack.c.0.s8 %v1457
  %v1459 = vlaneseq
  %v1460 = vshrl.u32 %v1459, 7
  %v1461 = vsub.s32 %v1458, %v1460
  %v1462 = vrot.slane %v1446, %v1461
  %v1464 = vunpack.c.l.s4 1966171168
  %v1465 = vunpack.c.0.s8 %v1464
  %v1466 = vlaneseq
  %v1467 = vshrl.u32 %v1466, 7
  %v1468 = vsub.s32 %v1465, %v1467
  %v1469 = vrot.slane %v1447, %v1468
  %v1471 = vunpack.c.l.s4 1966171168
  %v1472 = vunpack.c.0.s8 %v1471
  %v1473 = vlaneseq
  %v1474 = vshrl.u32 %v1473, 7
  %v1475 = vsub.s32 %v1472, %v1474
  %v1476 = vrot.slane %v1448, %v1475
  %v1477 = vcombine.low %v1455, %v1462
  %v1478 = vcombine.low %v1469, %v1476
  %v1480 = vunpack.c.l.s4 1966171168
  %v1481 = vunpack.c.0.s8 %v1480
  %v1482 = vlaneseq
  %v1483 = vshrl.u32 %v1482, 7
  %v1484 = vsub.s32 %v1481, %v1483
  %v1485 = vrot.slane %v1477, %v1484
  %v1487 = vunpack.c.l.s4 1966171168
  %v1488 = vunpack.c.0.s8 %v1487
  %v1489 = vlaneseq
  %v1490 = vshrl.u32 %v1489, 7
  %v1491 = vsub.s32 %v1488, %v1490
  %v1492 = vrot.slane %v1478, %v1491
  %v1493 = vcombine.low %v1485, %v1492
  %1495 = vst [vmem:[%s3] sm:$0xff] %v1493
  // Predicated region
  $region10: #{model_forward.2} parent=0 // pred_check
    _
  $region11: #{model_forward.2} parent=0 // pred_check_branch
    %1497 = sbr.rel (0) target = $region13
  $region12: #{model_forward.2} parent=0 // pred_region
    _
  $region13: #{model_forward.2} parent=0 // pred_fallthru
    _
  // Predicated region
  $region14: #{model_forward.2} parent=0 // pred_check
    _
  $region15: #{model_forward.2} parent=0 // pred_check_branch
    %1499 = sbr.rel (0) target = $region17
  $region16: #{model_forward.2} parent=0 // pred_region
    _
  $region17: #{model_forward.2} parent=0 // pred_fallthru
    _
  // Predicated region
  $region18: #{model_forward.2} parent=0 // pred_check
    _
  $region19: #{model_forward.2} parent=0 // pred_check_branch
    %1501 = sbr.rel (0) target = $region21
  $region20: #{model_forward.2} parent=0 // pred_region
    _
  $region21: #{model_forward.2} parent=0 // pred_fallthru
    _
  // Predicated region
  $region22: #{model_forward.2} parent=0 // pred_check
    _
  $region23: #{model_forward.2} parent=0 // pred_check_branch
    %1503 = sbr.rel (0) target = $region25
  $region24: #{model_forward.2} parent=0 // pred_region
    _
  $region25: #{model_forward.2} parent=0 // pred_fallthru
    _

// kernel: model_forward.3
$region0: #{model_forward.3}
  #allocation0 [shape = 'u32[]', space=smem, size = 0x4, offset = 0x4, fixed_abs, tag = 'smem constant byte address 0x4 - core index']
  #allocation1 [shape = 'u32[144,128]{1,0:T(1,128)}', space=vmem, size = 0x12000, scoped, tag = 'internal scratch']
  %s0 = inlined_call_operand.vmem [shape: f32[1,1024], index: 0, kind: input, shape index: {}]
  %s1 = inlined_call_operand.vmem [shape: f32[1,1024], index: 1, kind: input, shape index: {}]
  %s2 = inlined_call_operand.vmem [shape: bf16[128,128], index: 2, kind: input, shape index: {}]
  %s3 = inlined_call_operand.vmem [shape: bf16[128,1024], index: 3, kind: input, shape index: {}]
  %s4 = inlined_call_operand.vmem [shape: f32[128,1024], index: 4, kind: output, shape index: {}]
  %s5 = sld [smem:[#allocation0]]
  $region26: #{model_forward.3} parent=0
    _
  %s7 = ssub.s32 1, %s5
  %s8 = scalar_select 0, %s7, %s5
  // Predicated region
  $region2: #{model_forward.3} parent=0 // pred_check
    _
  $region3: #{model_forward.3} parent=0 // pred_check_branch
    %10 = sbr.rel (0) target = $region5
  $region4: #{model_forward.3} parent=0 // pred_region
    _
  $region5: #{model_forward.3} parent=0 // pred_fallthru
    _
  // Predicated region
  $region6: #{model_forward.3} parent=0 // pred_check
    _
  $region7: #{model_forward.3} parent=0 // pred_check_branch
    %12 = sbr.rel (0) target = $region9
  $region8: #{model_forward.3} parent=0 // pred_region
    _
  $region9: #{model_forward.3} parent=0 // pred_fallthru
    _
  // Predicated region
  $region10: #{model_forward.3} parent=0 // pred_check
    _
  $region11: #{model_forward.3} parent=0 // pred_check_branch
    %14 = sbr.rel (0) target = $region13
  $region12: #{model_forward.3} parent=0 // pred_region
    _
  $region13: #{model_forward.3} parent=0 // pred_fallthru
    _
  // Predicated region
  $region14: #{model_forward.3} parent=0 // pred_check
    _
  $region15: #{model_forward.3} parent=0 // pred_check_branch
    %16 = sbr.rel (0) target = $region17
  $region16: #{model_forward.3} parent=0 // pred_region
    _
  $region17: #{model_forward.3} parent=0 // pred_fallthru
    _
  %v18 = vld [vmem:[%s2] sm:$0xf]
  %v19 = vld [vmem:[%s2 + $0x4] sm:$0xf]
  %v20 = vld [vmem:[%s2 + $0x8] sm:$0xf]
  %v21 = vld [vmem:[%s2 + $0xc] sm:$0xf]
  %v22 = vld [vmem:[%s2 + $0x10] sm:$0xf]
  %v23 = vld [vmem:[%s2 + $0x14] sm:$0xf]
  %v24 = vld [vmem:[%s2 + $0x18] sm:$0xf]
  %v25 = vld [vmem:[%s2 + $0x1c] sm:$0xf]
  %v26 = vld [vmem:[%s2 + $0x20] sm:$0xf]
  %v27 = vld [vmem:[%s2 + $0x24] sm:$0xf]
  %v28 = vld [vmem:[%s2 + $0x28] sm:$0xf]
  %v29 = vld [vmem:[%s2 + $0x2c] sm:$0xf]
  %v30 = vld [vmem:[%s2 + $0x30] sm:$0xf]
  %v31 = vld [vmem:[%s2 + $0x34] sm:$0xf]
  %v32 = vld [vmem:[%s2 + $0x38] sm:$0xf]
  %v33 = vld [vmem:[%s2 + $0x3c] sm:$0xf]
  %v34 = vld [vmem:[%s3] sm:$0xff]
  %v35 = vld [vmem:[%s3 + $0x8] sm:$0xff]
  %v36 = vld [vmem:[%s3 + $0x10] sm:$0xff]
  %v37 = vld [vmem:[%s3 + $0x18] sm:$0xff]
  %v38 = vld [vmem:[%s3 + $0x20] sm:$0xff]
  %v39 = vld [vmem:[%s3 + $0x28] sm:$0xff]
  %v40 = vld [vmem:[%s3 + $0x30] sm:$0xff]
  %v41 = vld [vmem:[%s3 + $0x38] sm:$0xff]
  %v42 = vld [vmem:[%s3 + $0x40] sm:$0xff]
  %v43 = vld [vmem:[%s3 + $0x48] sm:$0xff]
  %v44 = vld [vmem:[%s3 + $0x50] sm:$0xff]
  %v45 = vld [vmem:[%s3 + $0x58] sm:$0xff]
  %v46 = vld [vmem:[%s3 + $0x60] sm:$0xff]
  %v47 = vld [vmem:[%s3 + $0x68] sm:$0xff]
  %v48 = vld [vmem:[%s3 + $0x70] sm:$0xff]
  %v49 = vld [vmem:[%s3 + $0x78] sm:$0xff]
  %v50 = vld [vmem:[%s3 + $0x80] sm:$0xff]
  %v51 = vld [vmem:[%s3 + $0x88] sm:$0xff]
  %v52 = vld [vmem:[%s3 + $0x90] sm:$0xff]
  %v53 = vld [vmem:[%s3 + $0x98] sm:$0xff]
  %v54 = vld [vmem:[%s3 + $0xa0] sm:$0xff]
  %v55 = vld [vmem:[%s3 + $0xa8] sm:$0xff]
  %v56 = vld [vmem:[%s3 + $0xb0] sm:$0xff]
  %v57 = vld [vmem:[%s3 + $0xb8] sm:$0xff]
  %v58 = vld [vmem:[%s3 + $0xc0] sm:$0xff]
  %v59 = vld [vmem:[%s3 + $0xc8] sm:$0xff]
  %v60 = vld [vmem:[%s3 + $0xd0] sm:$0xff]
  %v61 = vld [vmem:[%s3 + $0xd8] sm:$0xff]
  %v62 = vld [vmem:[%s3 + $0xe0] sm:$0xff]
  %v63 = vld [vmem:[%s3 + $0xe8] sm:$0xff]
  %v64 = vld [vmem:[%s3 + $0xf0] sm:$0xff]
  %v65 = vld [vmem:[%s3 + $0xf8] sm:$0xff]
  %v66 = vld [vmem:[%s3 + $0x100] sm:$0xff]
  %v67 = vld [vmem:[%s3 + $0x108] sm:$0xff]
  %v68 = vld [vmem:[%s3 + $0x110] sm:$0xff]
  %v69 = vld [vmem:[%s3 + $0x118] sm:$0xff]
  %v70 = vld [vmem:[%s3 + $0x120] sm:$0xff]
  %v71 = vld [vmem:[%s3 + $0x128] sm:$0xff]
  %v72 = vld [vmem:[%s3 + $0x130] sm:$0xff]
  %v73 = vld [vmem:[%s3 + $0x138] sm:$0xff]
  %v74 = vld [vmem:[%s3 + $0x140] sm:$0xff]
  %v75 = vld [vmem:[%s3 + $0x148] sm:$0xff]
  %v76 = vld [vmem:[%s3 + $0x150] sm:$0xff]
  %v77 = vld [vmem:[%s3 + $0x158] sm:$0xff]
  %v78 = vld [vmem:[%s3 + $0x160] sm:$0xff]
  %v79 = vld [vmem:[%s3 + $0x168] sm:$0xff]
  %v80 = vld [vmem:[%s3 + $0x170] sm:$0xff]
  %v81 = vld [vmem:[%s3 + $0x178] sm:$0xff]
  %v82 = vld [vmem:[%s3 + $0x180] sm:$0xff]
  %v83 = vld [vmem:[%s3 + $0x188] sm:$0xff]
  %v84 = vld [vmem:[%s3 + $0x190] sm:$0xff]
  %v85 = vld [vmem:[%s3 + $0x198] sm:$0xff]
  %v86 = vld [vmem:[%s3 + $0x1a0] sm:$0xff]
  %v87 = vld [vmem:[%s3 + $0x1a8] sm:$0xff]
  %v88 = vld [vmem:[%s3 + $0x1b0] sm:$0xff]
  %v89 = vld [vmem:[%s3 + $0x1b8] sm:$0xff]
  %v90 = vld [vmem:[%s3 + $0x1c0] sm:$0xff]
  %v91 = vld [vmem:[%s3 + $0x1c8] sm:$0xff]
  %v92 = vld [vmem:[%s3 + $0x1d0] sm:$0xff]
  %v93 = vld [vmem:[%s3 + $0x1d8] sm:$0xff]
  %v94 = vld [vmem:[%s3 + $0x1e0] sm:$0xff]
  %v95 = vld [vmem:[%s3 + $0x1e8] sm:$0xff]
  %v96 = vld [vmem:[%s3 + $0x1f0] sm:$0xff]
  %v97 = vld [vmem:[%s3 + $0x1f8] sm:$0xff]
  %v114 = vunpack.c.l.b16 %v18
  %v115 = vunpack.c.l.b16 %v19
  %v116 = vunpack.c.l.b16 %v20
  %v117 = vunpack.c.l.b16 %v21
  %v118 = vunpack.c.l.b16 %v22
  %v119 = vunpack.c.l.b16 %v23
  %v120 = vunpack.c.l.b16 %v24
  %v121 = vunpack.c.l.b16 %v25
  %v122 = vunpack.c.l.b16 %v26
  %v123 = vunpack.c.l.b16 %v27
  %v124 = vunpack.c.l.b16 %v28
  %v125 = vunpack.c.l.b16 %v29
  %v126 = vunpack.c.l.b16 %v30
  %v127 = vunpack.c.l.b16 %v31
  %v128 = vunpack.c.l.b16 %v32
  %v129 = vunpack.c.l.b16 %v33
  %v130 = vpack.c.b16 %v115, %v114
  %v131 = vpack.c.b16 %v117, %v116
  %v132 = vpack.c.b16 %v119, %v118
  %v133 = vpack.c.b16 %v121, %v120
  %v134 = vpack.c.b16 %v123, %v122
  %v135 = vpack.c.b16 %v125, %v124
  %v136 = vpack.c.b16 %v127, %v126
  %v137 = vpack.c.b16 %v129, %v128
  %v210 = vunpack.c.l.b16 %v34
  %v211 = vunpack.c.h.b16 %v34
  %v212 = vunpack.c.l.b16 %v35
  %v213 = vunpack.c.h.b16 %v35
  %v214 = vunpack.c.l.b16 %v36
  %v215 = vunpack.c.h.b16 %v36
  %v216 = vunpack.c.l.b16 %v37
  %v217 = vunpack.c.h.b16 %v37
  %v218 = vunpack.c.l.b16 %v38
  %v219 = vunpack.c.h.b16 %v38
  %v220 = vunpack.c.l.b16 %v39
  %v221 = vunpack.c.h.b16 %v39
  %v222 = vunpack.c.l.b16 %v40
  %v223 = vunpack.c.h.b16 %v40
  %v224 = vunpack.c.l.b16 %v41
  %v225 = vunpack.c.h.b16 %v41
  %v226 = vunpack.c.l.b16 %v42
  %v227 = vunpack.c.h.b16 %v42
  %v228 = vunpack.c.l.b16 %v43
  %v229 = vunpack.c.h.b16 %v43
  %v230 = vunpack.c.l.b16 %v44
  %v231 = vunpack.c.h.b16 %v44
  %v232 = vunpack.c.l.b16 %v45
  %v233 = vunpack.c.h.b16 %v45
  %v234 = vunpack.c.l.b16 %v46
  %v235 = vunpack.c.h.b16 %v46
  %v236 = vunpack.c.l.b16 %v47
  %v237 = vunpack.c.h.b16 %v47
  %v238 = vunpack.c.l.b16 %v48
  %v239 = vunpack.c.h.b16 %v48
  %v240 = vunpack.c.l.b16 %v49
  %v241 = vunpack.c.h.b16 %v49
  %v242 = vunpack.c.l.b16 %v50
  %v243 = vunpack.c.h.b16 %v50
  %v244 = vunpack.c.l.b16 %v51
  %v245 = vunpack.c.h.b16 %v51
  %v246 = vunpack.c.l.b16 %v52
  %v247 = vunpack.c.h.b16 %v52
  %v248 = vunpack.c.l.b16 %v53
  %v249 = vunpack.c.h.b16 %v53
  %v250 = vunpack.c.l.b16 %v54
  %v251 = vunpack.c.h.b16 %v54
  %v252 = vunpack.c.l.b16 %v55
  %v253 = vunpack.c.h.b16 %v55
  %v254 = vunpack.c.l.b16 %v56
  %v255 = vunpack.c.h.b16 %v56
  %v256 = vunpack.c.l.b16 %v57
  %v257 = vunpack.c.h.b16 %v57
  %v258 = vunpack.c.l.b16 %v58
  %v259 = vunpack.c.h.b16 %v58
  %v260 = vunpack.c.l.b16 %v59
  %v261 = vunpack.c.h.b16 %v59
  %v262 = vunpack.c.l.b16 %v60
  %v263 = vunpack.c.h.b16 %v60
  %v264 = vunpack.c.l.b16 %v61
  %v265 = vunpack.c.h.b16 %v61
  %v266 = vunpack.c.l.b16 %v62
  %v267 = vunpack.c.h.b16 %v62
  %v268 = vunpack.c.l.b16 %v63
  %v269 = vunpack.c.h.b16 %v63
  %v270 = vunpack.c.l.b16 %v64
  %v271 = vunpack.c.h.b16 %v64
  %v272 = vunpack.c.l.b16 %v65
  %v273 = vunpack.c.h.b16 %v65
  %v274 = vunpack.c.l.b16 %v66
  %v275 = vunpack.c.h.b16 %v66
  %v276 = vunpack.c.l.b16 %v67
  %v277 = vunpack.c.h.b16 %v67
  %v278 = vunpack.c.l.b16 %v68
  %v279 = vunpack.c.h.b16 %v68
  %v280 = vunpack.c.l.b16 %v69
  %v281 = vunpack.c.h.b16 %v69
  %v282 = vunpack.c.l.b16 %v70
  %v283 = vunpack.c.h.b16 %v70
  %v284 = vunpack.c.l.b16 %v71
  %v285 = vunpack.c.h.b16 %v71
  %v286 = vunpack.c.l.b16 %v72
  %v287 = vunpack.c.h.b16 %v72
  %v288 = vunpack.c.l.b16 %v73
  %v289 = vunpack.c.h.b16 %v73
  %v290 = vunpack.c.l.b16 %v74
  %v291 = vunpack.c.h.b16 %v74
  %v292 = vunpack.c.l.b16 %v75
  %v293 = vunpack.c.h.b16 %v75
  %v294 = vunpack.c.l.b16 %v76
  %v295 = vunpack.c.h.b16 %v76
  %v296 = vunpack.c.l.b16 %v77
  %v297 = vunpack.c.h.b16 %v77
  %v298 = vunpack.c.l.b16 %v78
  %v299 = vunpack.c.h.b16 %v78
  %v300 = vunpack.c.l.b16 %v79
  %v301 = vunpack.c.h.b16 %v79
  %v302 = vunpack.c.l.b16 %v80
  %v303 = vunpack.c.h.b16 %v80
  %v304 = vunpack.c.l.b16 %v81
  %v305 = vunpack.c.h.b16 %v81
  %v306 = vunpack.c.l.b16 %v82
  %v307 = vunpack.c.h.b16 %v82
  %v308 = vunpack.c.l.b16 %v83
  %v309 = vunpack.c.h.b16 %v83
  %v310 = vunpack.c.l.b16 %v84
  %v311 = vunpack.c.h.b16 %v84
  %v312 = vunpack.c.l.b16 %v85
  %v313 = vunpack.c.h.b16 %v85
  %v314 = vunpack.c.l.b16 %v86
  %v315 = vunpack.c.h.b16 %v86
  %v316 = vunpack.c.l.b16 %v87
  %v317 = vunpack.c.h.b16 %v87
  %v318 = vunpack.c.l.b16 %v88
  %v319 = vunpack.c.h.b16 %v88
  %v320 = vunpack.c.l.b16 %v89
  %v321 = vunpack.c.h.b16 %v89
  %v322 = vunpack.c.l.b16 %v90
  %v323 = vunpack.c.h.b16 %v90
  %v324 = vunpack.c.l.b16 %v91
  %v325 = vunpack.c.h.b16 %v91
  %v326 = vunpack.c.l.b16 %v92
  %v327 = vunpack.c.h.b16 %v92
  %v328 = vunpack.c.l.b16 %v93
  %v329 = vunpack.c.h.b16 %v93
  %v330 = vunpack.c.l.b16 %v94
  %v331 = vunpack.c.h.b16 %v94
  %v332 = vunpack.c.l.b16 %v95
  %v333 = vunpack.c.h.b16 %v95
  %v334 = vunpack.c.l.b16 %v96
  %v335 = vunpack.c.h.b16 %v96
  %v336 = vunpack.c.l.b16 %v97
  %v337 = vunpack.c.h.b16 %v97
  %v338 = vpack.c.b16 %v218, %v210
  %v339 = vpack.c.b16 %v219, %v211
  %v340 = vpack.c.b16 %v220, %v212
  %v341 = vpack.c.b16 %v221, %v213
  %v342 = vpack.c.b16 %v222, %v214
  %v343 = vpack.c.b16 %v223, %v215
  %v344 = vpack.c.b16 %v224, %v216
  %v345 = vpack.c.b16 %v225, %v217
  %v346 = vpack.c.b16 %v234, %v226
  %v347 = vpack.c.b16 %v235, %v227
  %v348 = vpack.c.b16 %v236, %v228
  %v349 = vpack.c.b16 %v237, %v229
  %v350 = vpack.c.b16 %v238, %v230
  %v351 = vpack.c.b16 %v239, %v231
  %v352 = vpack.c.b16 %v240, %v232
  %v353 = vpack.c.b16 %v241, %v233
  %v354 = vpack.c.b16 %v250, %v242
  %v355 = vpack.c.b16 %v251, %v243
  %v356 = vpack.c.b16 %v252, %v244
  %v357 = vpack.c.b16 %v253, %v245
  %v358 = vpack.c.b16 %v254, %v246
  %v359 = vpack.c.b16 %v255, %v247
  %v360 = vpack.c.b16 %v256, %v248
  %v361 = vpack.c.b16 %v257, %v249
  %v362 = vpack.c.b16 %v266, %v258
  %v363 = vpack.c.b16 %v267, %v259
  %v364 = vpack.c.b16 %v268, %v260
  %v365 = vpack.c.b16 %v269, %v261
  %v366 = vpack.c.b16 %v270, %v262
  %v367 = vpack.c.b16 %v271, %v263
  %v368 = vpack.c.b16 %v272, %v264
  %v369 = vpack.c.b16 %v273, %v265
  %v370 = vpack.c.b16 %v282, %v274
  %v371 = vpack.c.b16 %v283, %v275
  %v372 = vpack.c.b16 %v284, %v276
  %v373 = vpack.c.b16 %v285, %v277
  %v374 = vpack.c.b16 %v286, %v278
  %v375 = vpack.c.b16 %v287, %v279
  %v376 = vpack.c.b16 %v288, %v280
  %v377 = vpack.c.b16 %v289, %v281
  %v378 = vpack.c.b16 %v298, %v290
  %v379 = vpack.c.b16 %v299, %v291
  %v380 = vpack.c.b16 %v300, %v292
  %v381 = vpack.c.b16 %v301, %v293
  %v382 = vpack.c.b16 %v302, %v294
  %v383 = vpack.c.b16 %v303, %v295
  %v384 = vpack.c.b16 %v304, %v296
  %v385 = vpack.c.b16 %v305, %v297
  %v386 = vpack.c.b16 %v314, %v306
  %v387 = vpack.c.b16 %v315, %v307
  %v388 = vpack.c.b16 %v316, %v308
  %v389 = vpack.c.b16 %v317, %v309
  %v390 = vpack.c.b16 %v318, %v310
  %v391 = vpack.c.b16 %v319, %v311
  %v392 = vpack.c.b16 %v320, %v312
  %v393 = vpack.c.b16 %v321, %v313
  %v394 = vpack.c.b16 %v330, %v322
  %v395 = vpack.c.b16 %v331, %v323
  %v396 = vpack.c.b16 %v332, %v324
  %v397 = vpack.c.b16 %v333, %v325
  %v398 = vpack.c.b16 %v334, %v326
  %v399 = vpack.c.b16 %v335, %v327
  %v400 = vpack.c.b16 %v336, %v328
  %v401 = vpack.c.b16 %v337, %v329
  %466 = vmatprep.subr.bf16.mxu0 %v339
  %467 = vmatpush1.bf16.msra.mxu0 %v338
  %468 = vmatprep.subr.bf16.mxu0 %v347
  %469 = vmatpush1.bf16.msra.mxu0 %v346
  %470 = vmatprep.subr.bf16.mxu0 %v355
  %471 = vmatpush1.bf16.msra.mxu0 %v354
  %472 = vmatprep.subr.bf16.mxu0 %v363
  %473 = vmatpush1.bf16.msra.mxu0 %v362
  %474 = vmatprep.subr.bf16.mxu0 %v371
  %475 = vmatpush1.bf16.msra.mxu0 %v370
  %476 = vmatprep.subr.bf16.mxu0 %v379
  %477 = vmatpush1.bf16.msra.mxu0 %v378
  %478 = vmatprep.subr.bf16.mxu0 %v387
  %479 = vmatpush1.bf16.msra.mxu0 %v386
  %480 = vmatprep.subr.bf16.mxu0 %v395
  %481 = vmatpush1.bf16.msra.mxu0 %v394
  %482 = vmatprep.subr.bf16.mxu0 0
  %483 = vmatpush1.bf16.msra.mxu0 0
  %484 = vmatprep.subr.bf16.mxu0 0
  %485 = vmatpush1.bf16.msra.mxu0 0
  %486 = vmatprep.subr.bf16.mxu0 0
  %487 = vmatpush1.bf16.msra.mxu0 0
  %488 = vmatprep.subr.bf16.mxu0 0
  %489 = vmatpush1.bf16.msra.mxu0 0
  %490 = vmatprep.subr.bf16.mxu0 0
  %491 = vmatpush1.bf16.msra.mxu0 0
  %492 = vmatprep.subr.bf16.mxu0 0
  %493 = vmatpush1.bf16.msra.mxu0 0
  %494 = vmatprep.subr.bf16.mxu0 0
  %495 = vmatpush1.bf16.msra.mxu0 0
  %496 = vmatprep.subr.bf16.mxu0 0
  %497 = vmatpush1.bf16.msra.mxu0 0
  %498 = vmatprep.mubr.bf16.mxu0 0
  %499 = vmatmul.mubr.bf16.gmra.mrb[0].mxu0 %v130
  %v500 = vpop.f32.mrb[0].mxu0
  %v501 = vadd.f32 0.0, %v500
  %v502 = vpop.f32.mrb[0].mxu0
  %v503 = vadd.f32 0.0, %v502
  %v504 = vpop.f32.mrb[0].mxu0
  %v505 = vadd.f32 0.0, %v504
  %v506 = vpop.f32.mrb[0].mxu0
  %v507 = vadd.f32 0.0, %v506
  %508 = vmatprep.mubr.bf16.mxu0 0
  %509 = vmatmul.mubr.bf16.gmra.mrb[0].mxu0 %v131
  %v510 = vpop.f32.mrb[0].mxu0
  %v511 = vadd.f32 0.0, %v510
  %v512 = vpop.f32.mrb[0].mxu0
  %v513 = vadd.f32 0.0, %v512
  %v514 = vpop.f32.mrb[0].mxu0
  %v515 = vadd.f32 0.0, %v514
  %v516 = vpop.f32.mrb[0].mxu0
  %v517 = vadd.f32 0.0, %v516
  %518 = vmatprep.mubr.bf16.mxu0 0
  %519 = vmatmul.mubr.bf16.gmra.mrb[0].mxu0 %v132
  %v520 = vpop.f32.mrb[0].mxu0
  %v521 = vadd.f32 0.0, %v520
  %v522 = vpop.f32.mrb[0].mxu0
  %v523 = vadd.f32 0.0, %v522
  %v524 = vpop.f32.mrb[0].mxu0
  %v525 = vadd.f32 0.0, %v524
  %v526 = vpop.f32.mrb[0].mxu0
  %v527 = vadd.f32 0.0, %v526
  %528 = vmatprep.mubr.bf16.mxu0 0
  %529 = vmatmul.mubr.bf16.gmra.mrb[0].mxu0 %v133
  %v530 = vpop.f32.mrb[0].mxu0
  %v531 = vadd.f32 0.0, %v530
  %v532 = vpop.f32.mrb[0].mxu0
  %v533 = vadd.f32 0.0, %v532
  %v534 = vpop.f32.mrb[0].mxu0
  %v535 = vadd.f32 0.0, %v534
  %v536 = vpop.f32.mrb[0].mxu0
  %v537 = vadd.f32 0.0, %v536
  %538 = vmatprep.mubr.bf16.mxu0 0
  %539 = vmatmul.mubr.bf16.gmra.mrb[0].mxu0 %v134
  %v540 = vpop.f32.mrb[0].mxu0
  %v541 = vadd.f32 0.0, %v540
  %v542 = vpop.f32.mrb[0].mxu0
  %v543 = vadd.f32 0.0, %v542
  %v544 = vpop.f32.mrb[0].mxu0
  %v545 = vadd.f32 0.0, %v544
  %v546 = vpop.f32.mrb[0].mxu0
  %v547 = vadd.f32 0.0, %v546
  %548 = vmatprep.mubr.bf16.mxu0 0
  %549 = vmatmul.mubr.bf16.gmra.mrb[0].mxu0 %v135
  %v550 = vpop.f32.mrb[0].mxu0
  %v551 = vadd.f32 0.0, %v550
  %v552 = vpop.f32.mrb[0].mxu0
  %v553 = vadd.f32 0.0, %v552
  %v554 = vpop.f32.mrb[0].mxu0
  %v555 = vadd.f32 0.0, %v554
  %v556 = vpop.f32.mrb[0].mxu0
  %v557 = vadd.f32 0.0, %v556
  %558 = vmatprep.mubr.bf16.mxu0 0
  %559 = vmatmul.mubr.bf16.gmra.mrb[0].mxu0 %v136
  %v560 = vpop.f32.mrb[0].mxu0
  %v561 = vadd.f32 0.0, %v560
  %v562 = vpop.f32.mrb[0].mxu0
  %v563 = vadd.f32 0.0, %v562
  %v564 = vpop.f32.mrb[0].mxu0
  %v565 = vadd.f32 0.0, %v564
  %v566 = vpop.f32.mrb[0].mxu0
  %v567 = vadd.f32 0.0, %v566
  %568 = vmatprep.mubr.bf16.mxu0 0
  %569 = vmatmul.mubr.bf16.gmra.mrb[0].mxu0 %v137
  %v570 = vpop.f32.mrb[0].mxu0
  %v571 = vadd.f32 0.0, %v570
  %v572 = vpop.f32.mrb[0].mxu0
  %v573 = vadd.f32 0.0, %v572
  %v574 = vpop.f32.mrb[0].mxu0
  %v575 = vadd.f32 0.0, %v574
  %v576 = vpop.f32.mrb[0].mxu0
  %v577 = vadd.f32 0.0, %v576
  %578 = vdwg.mxu0
  %579 = vmatprep.subr.bf16.mxu0 %v341
  %580 = vmatpush1.bf16.msra.mxu0 %v340
  %581 = vmatprep.subr.bf16.mxu0 %v349
  %582 = vmatpush1.bf16.msra.mxu0 %v348
  %583 = vmatprep.subr.bf16.mxu0 %v357
  %584 = vmatpush1.bf16.msra.mxu0 %v356
  %585 = vmatprep.subr.bf16.mxu0 %v365
  %586 = vmatpush1.bf16.msra.mxu0 %v364
  %587 = vmatprep.subr.bf16.mxu0 %v373
  %588 = vmatpush1.bf16.msra.mxu0 %v372
  %589 = vmatprep.subr.bf16.mxu0 %v381
  %590 = vmatpush1.bf16.msra.mxu0 %v380
  %591 = vmatprep.subr.bf16.mxu0 %v389
  %592 = vmatpush1.bf16.msra.mxu0 %v388
  %593 = vmatprep.subr.bf16.mxu0 %v397
  %594 = vmatpush1.bf16.msra.mxu0 %v396
  %595 = vmatprep.subr.bf16.mxu0 0
  %596 = vmatpush1.bf16.msra.mxu0 0
  %597 = vmatprep.subr.bf16.mxu0 0
  %598 = vmatpush1.bf16.msra.mxu0 0
  %599 = vmatprep.subr.bf16.mxu0 0
  %600 = vmatpush1.bf16.msra.mxu0 0
  %601 = vmatprep.subr.bf16.mxu0 0
  %602 = vmatpush1.bf16.msra.mxu0 0
  %603 = vmatprep.subr.bf16.mxu0 0
  %604 = vmatpush1.bf16.msra.mxu0 0
  %605 = vmatprep.subr.bf16.mxu0 0
  %606 = vmatpush1.bf16.msra.mxu0 0
  %607 = vmatprep.subr.bf16.mxu0 0
  %608 = vmatpush1.bf16.msra.mxu0 0
  %609 = vmatprep.subr.bf16.mxu0 0
  %610 = vmatpush1.bf16.msra.mxu0 0
  %611 = vmatprep.mubr.bf16.mxu0 0
  %612 = vmatmul.mubr.bf16.gmra.mrb[0].mxu0 %v130
  %v613 = vpop.f32.mrb[0].mxu0
  %v614 = vadd.f32 0.0, %v613
  %v615 = vpop.f32.mrb[0].mxu0
  %v616 = vadd.f32 0.0, %v615
  %v617 = vpop.f32.mrb[0].mxu0
  %v618 = vadd.f32 0.0, %v617
  %v619 = vpop.f32.mrb[0].mxu0
  %v620 = vadd.f32 0.0, %v619
  %621 = vmatprep.mubr.bf16.mxu0 0
  %622 = vmatmul.mubr.bf16.gmra.mrb[0].mxu0 %v131
  %v623 = vpop.f32.mrb[0].mxu0
  %v624 = vadd.f32 0.0, %v623
  %v625 = vpop.f32.mrb[0].mxu0
  %v626 = vadd.f32 0.0, %v625
  %v627 = vpop.f32.mrb[0].mxu0
  %v628 = vadd.f32 0.0, %v627
  %v629 = vpop.f32.mrb[0].mxu0
  %v630 = vadd.f32 0.0, %v629
  %631 = vmatprep.mubr.bf16.mxu0 0
  %632 = vmatmul.mubr.bf16.gmra.mrb[0].mxu0 %v132
  %v633 = vpop.f32.mrb[0].mxu0
  %v634 = vadd.f32 0.0, %v633
  %v635 = vpop.f32.mrb[0].mxu0
  %v636 = vadd.f32 0.0, %v635
  %v637 = vpop.f32.mrb[0].mxu0
  %v638 = vadd.f32 0.0, %v637
  %v639 = vpop.f32.mrb[0].mxu0
  %v640 = vadd.f32 0.0, %v639
  %641 = vmatprep.mubr.bf16.mxu0 0
  %642 = vmatmul.mubr.bf16.gmra.mrb[0].mxu0 %v133
  %v643 = vpop.f32.mrb[0].mxu0
  %v644 = vadd.f32 0.0, %v643
  %v645 = vpop.f32.mrb[0].mxu0
  %v646 = vadd.f32 0.0, %v645
  %v647 = vpop.f32.mrb[0].mxu0
  %v648 = vadd.f32 0.0, %v647
  %v649 = vpop.f32.mrb[0].mxu0
  %v650 = vadd.f32 0.0, %v649
  %651 = vmatprep.mubr.bf16.mxu0 0
  %652 = vmatmul.mubr.bf16.gmra.mrb[0].mxu0 %v134
  %v653 = vpop.f32.mrb[0].mxu0
  %v654 = vadd.f32 0.0, %v653
  %v655 = vpop.f32.mrb[0].mxu0
  %v656 = vadd.f32 0.0, %v655
  %v657 = vpop.f32.mrb[0].mxu0
  %v658 = vadd.f32 0.0, %v657
  %v659 = vpop.f32.mrb[0].mxu0
  %v660 = vadd.f32 0.0, %v659
  %661 = vmatprep.mubr.bf16.mxu0 0
  %662 = vmatmul.mubr.bf16.gmra.mrb[0].mxu0 %v135
  %v663 = vpop.f32.mrb[0].mxu0
  %v664 = vadd.f32 0.0, %v663
  %v665 = vpop.f32.mrb[0].mxu0
  %v666 = vadd.f32 0.0, %v665
  %v667 = vpop.f32.mrb[0].mxu0
  %v668 = vadd.f32 0.0, %v667
  %v669 = vpop.f32.mrb[0].mxu0
  %v670 = vadd.f32 0.0, %v669
  %671 = vmatprep.mubr.bf16.mxu0 0
  %672 = vmatmul.mubr.bf16.gmra.mrb[0].mxu0 %v136
  %v673 = vpop.f32.mrb[0].mxu0
  %v674 = vadd.f32 0.0, %v673
  %v675 = vpop.f32.mrb[0].mxu0
  %v676 = vadd.f32 0.0, %v675
  %v677 = vpop.f32.mrb[0].mxu0
  %v678 = vadd.f32 0.0, %v677
  %v679 = vpop.f32.mrb[0].mxu0
  %v680 = vadd.f32 0.0, %v679
  %681 = vmatprep.mubr.bf16.mxu0 0
  %682 = vmatmul.mubr.bf16.gmra.mrb[0].mxu0 %v137
  %v683 = vpop.f32.mrb[0].mxu0
  %v684 = vadd.f32 0.0, %v683
  %v685 = vpop.f32.mrb[0].mxu0
  %v686 = vadd.f32 0.0, %v685
  %v687 = vpop.f32.mrb[0].mxu0
  %v688 = vadd.f32 0.0, %v687
  %v689 = vpop.f32.mrb[0].mxu0
  %v690 = vadd.f32 0.0, %v689
  %691 = vdwg.mxu0
  %692 = vmatprep.subr.bf16.mxu0 %v343
  %693 = vmatpush1.bf16.msra.mxu0 %v342
  %694 = vmatprep.subr.bf16.mxu0 %v351
  %695 = vmatpush1.bf16.msra.mxu0 %v350
  %696 = vmatprep.subr.bf16.mxu0 %v359
  %697 = vmatpush1.bf16.msra.mxu0 %v358
  %698 = vmatprep.subr.bf16.mxu0 %v367
  %699 = vmatpush1.bf16.msra.mxu0 %v366
  %700 = vmatprep.subr.bf16.mxu0 %v375
  %701 = vmatpush1.bf16.msra.mxu0 %v374
  %702 = vmatprep.subr.bf16.mxu0 %v383
  %703 = vmatpush1.bf16.msra.mxu0 %v382
  %704 = vmatprep.subr.bf16.mxu0 %v391
  %705 = vmatpush1.bf16.msra.mxu0 %v390
  %706 = vmatprep.subr.bf16.mxu0 %v399
  %707 = vmatpush1.bf16.msra.mxu0 %v398
  %708 = vmatprep.subr.bf16.mxu0 0
  %709 = vmatpush1.bf16.msra.mxu0 0
  %710 = vmatprep.subr.bf16.mxu0 0
  %711 = vmatpush1.bf16.msra.mxu0 0
  %712 = vmatprep.subr.bf16.mxu0 0
  %713 = vmatpush1.bf16.msra.mxu0 0
  %714 = vmatprep.subr.bf16.mxu0 0
  %715 = vmatpush1.bf16.msra.mxu0 0
  %716 = vmatprep.subr.bf16.mxu0 0
  %717 = vmatpush1.bf16.msra.mxu0 0
  %718 = vmatprep.subr.bf16.mxu0 0
  %719 = vmatpush1.bf16.msra.mxu0 0
  %720 = vmatprep.subr.bf16.mxu0 0
  %721 = vmatpush1.bf16.msra.mxu0 0
  %722 = vmatprep.subr.bf16.mxu0 0
  %723 = vmatpush1.bf16.msra.mxu0 0
  %724 = vmatprep.mubr.bf16.mxu0 0
  %725 = vmatmul.mubr.bf16.gmra.mrb[0].mxu0 %v130
  %v726 = vpop.f32.mrb[0].mxu0
  %v727 = vadd.f32 0.0, %v726
  %v728 = vpop.f32.mrb[0].mxu0
  %v729 = vadd.f32 0.0, %v728
  %v730 = vpop.f32.mrb[0].mxu0
  %v731 = vadd.f32 0.0, %v730
  %v732 = vpop.f32.mrb[0].mxu0
  %v733 = vadd.f32 0.0, %v732
  %734 = vmatprep.mubr.bf16.mxu0 0
  %735 = vmatmul.mubr.bf16.gmra.mrb[0].mxu0 %v131
  %v736 = vpop.f32.mrb[0].mxu0
  %v737 = vadd.f32 0.0, %v736
  %v738 = vpop.f32.mrb[0].mxu0
  %v739 = vadd.f32 0.0, %v738
  %v740 = vpop.f32.mrb[0].mxu0
  %v741 = vadd.f32 0.0, %v740
  %v742 = vpop.f32.mrb[0].mxu0
  %v743 = vadd.f32 0.0, %v742
  %744 = vmatprep.mubr.bf16.mxu0 0
  %745 = vmatmul.mubr.bf16.gmra.mrb[0].mxu0 %v132
  %v746 = vpop.f32.mrb[0].mxu0
  %v747 = vadd.f32 0.0, %v746
  %v748 = vpop.f32.mrb[0].mxu0
  %v749 = vadd.f32 0.0, %v748
  %v750 = vpop.f32.mrb[0].mxu0
  %v751 = vadd.f32 0.0, %v750
  %v752 = vpop.f32.mrb[0].mxu0
  %v753 = vadd.f32 0.0, %v752
  %754 = vmatprep.mubr.bf16.mxu0 0
  %755 = vmatmul.mubr.bf16.gmra.mrb[0].mxu0 %v133
  %v756 = vpop.f32.mrb[0].mxu0
  %v757 = vadd.f32 0.0, %v756
  %v758 = vpop.f32.mrb[0].mxu0
  %v759 = vadd.f32 0.0, %v758
  %v760 = vpop.f32.mrb[0].mxu0
  %v761 = vadd.f32 0.0, %v760
  %v762 = vpop.f32.mrb[0].mxu0
  %v763 = vadd.f32 0.0, %v762
  %764 = vmatprep.mubr.bf16.mxu0 0
  %765 = vmatmul.mubr.bf16.gmra.mrb[0].mxu0 %v134
  %v766 = vpop.f32.mrb[0].mxu0
  %v767 = vadd.f32 0.0, %v766
  %v768 = vpop.f32.mrb[0].mxu0
  %v769 = vadd.f32 0.0, %v768
  %v770 = vpop.f32.mrb[0].mxu0
  %v771 = vadd.f32 0.0, %v770
  %v772 = vpop.f32.mrb[0].mxu0
  %v773 = vadd.f32 0.0, %v772
  %774 = vmatprep.mubr.bf16.mxu0 0
  %775 = vmatmul.mubr.bf16.gmra.mrb[0].mxu0 %v135
  %v776 = vpop.f32.mrb[0].mxu0
  %v777 = vadd.f32 0.0, %v776
  %v778 = vpop.f32.mrb[0].mxu0
  %v779 = vadd.f32 0.0, %v778
  %v780 = vpop.f32.mrb[0].mxu0
  %v781 = vadd.f32 0.0, %v780
  %v782 = vpop.f32.mrb[0].mxu0
  %v783 = vadd.f32 0.0, %v782
  %784 = vmatprep.mubr.bf16.mxu0 0
  %785 = vmatmul.mubr.bf16.gmra.mrb[0].mxu0 %v136
  %v786 = vpop.f32.mrb[0].mxu0
  %v787 = vadd.f32 0.0, %v786
  %v788 = vpop.f32.mrb[0].mxu0
  %v789 = vadd.f32 0.0, %v788
  %v790 = vpop.f32.mrb[0].mxu0
  %v791 = vadd.f32 0.0, %v790
  %v792 = vpop.f32.mrb[0].mxu0
  %v793 = vadd.f32 0.0, %v792
  %794 = vmatprep.mubr.bf16.mxu0 0
  %795 = vmatmul.mubr.bf16.gmra.mrb[0].mxu0 %v137
  %v796 = vpop.f32.mrb[0].mxu0
  %v797 = vadd.f32 0.0, %v796
  %v798 = vpop.f32.mrb[0].mxu0
  %v799 = vadd.f32 0.0, %v798
  %v800 = vpop.f32.mrb[0].mxu0
  %v801 = vadd.f32 0.0, %v800
  %v802 = vpop.f32.mrb[0].mxu0
  %v803 = vadd.f32 0.0, %v802
  %804 = vdwg.mxu0
  %805 = vmatprep.subr.bf16.mxu0 %v345
  %806 = vmatpush1.bf16.msra.mxu0 %v344
  %807 = vmatprep.subr.bf16.mxu0 %v353
  %808 = vmatpush1.bf16.msra.mxu0 %v352
  %809 = vmatprep.subr.bf16.mxu0 %v361
  %810 = vmatpush1.bf16.msra.mxu0 %v360
  %811 = vmatprep.subr.bf16.mxu0 %v369
  %812 = vmatpush1.bf16.msra.mxu0 %v368
  %813 = vmatprep.subr.bf16.mxu0 %v377
  %814 = vmatpush1.bf16.msra.mxu0 %v376
  %815 = vmatprep.subr.bf16.mxu0 %v385
  %816 = vmatpush1.bf16.msra.mxu0 %v384
  %817 = vmatprep.subr.bf16.mxu0 %v393
  %818 = vmatpush1.bf16.msra.mxu0 %v392
  %819 = vmatprep.subr.bf16.mxu0 %v401
  %820 = vmatpush1.bf16.msra.mxu0 %v400
  %821 = vmatprep.subr.bf16.mxu0 0
  %822 = vmatpush1.bf16.msra.mxu0 0
  %823 = vmatprep.subr.bf16.mxu0 0
  %824 = vmatpush1.bf16.msra.mxu0 0
  %825 = vmatprep.subr.bf16.mxu0 0
  %826 = vmatpush1.bf16.msra.mxu0 0
  %827 = vmatprep.subr.bf16.mxu0 0
  %828 = vmatpush1.bf16.msra.mxu0 0
  %829 = vmatprep.subr.bf16.mxu0 0
  %830 = vmatpush1.bf16.msra.mxu0 0
  %831 = vmatprep.subr.bf16.mxu0 0
  %832 = vmatpush1.bf16.msra.mxu0 0
  %833 = vmatprep.subr.bf16.mxu0 0
  %834 = vmatpush1.bf16.msra.mxu0 0
  %835 = vmatprep.subr.bf16.mxu0 0
  %836 = vmatpush1.bf16.msra.mxu0 0
  %837 = vmatprep.mubr.bf16.mxu0 0
  %838 = vmatmul.mubr.bf16.gmra.mrb[0].mxu0 %v130
  %v839 = vpop.f32.mrb[0].mxu0
  %v840 = vadd.f32 0.0, %v839
  %v841 = vpop.f32.mrb[0].mxu0
  %v842 = vadd.f32 0.0, %v841
  %v843 = vpop.f32.mrb[0].mxu0
  %v844 = vadd.f32 0.0, %v843
  %v845 = vpop.f32.mrb[0].mxu0
  %v846 = vadd.f32 0.0, %v845
  %847 = vmatprep.mubr.bf16.mxu0 0
  %848 = vmatmul.mubr.bf16.gmra.mrb[0].mxu0 %v131
  %v849 = vpop.f32.mrb[0].mxu0
  %v850 = vadd.f32 0.0, %v849
  %v851 = vpop.f32.mrb[0].mxu0
  %v852 = vadd.f32 0.0, %v851
  %v853 = vpop.f32.mrb[0].mxu0
  %v854 = vadd.f32 0.0, %v853
  %v855 = vpop.f32.mrb[0].mxu0
  %v856 = vadd.f32 0.0, %v855
  %857 = vmatprep.mubr.bf16.mxu0 0
  %858 = vmatmul.mubr.bf16.gmra.mrb[0].mxu0 %v132
  %v859 = vpop.f32.mrb[0].mxu0
  %v860 = vadd.f32 0.0, %v859
  %v861 = vpop.f32.mrb[0].mxu0
  %v862 = vadd.f32 0.0, %v861
  %v863 = vpop.f32.mrb[0].mxu0
  %v864 = vadd.f32 0.0, %v863
  %v865 = vpop.f32.mrb[0].mxu0
  %v866 = vadd.f32 0.0, %v865
  %867 = vmatprep.mubr.bf16.mxu0 0
  %868 = vmatmul.mubr.bf16.gmra.mrb[0].mxu0 %v133
  %v869 = vpop.f32.mrb[0].mxu0
  %v870 = vadd.f32 0.0, %v869
  %v871 = vpop.f32.mrb[0].mxu0
  %v872 = vadd.f32 0.0, %v871
  %v873 = vpop.f32.mrb[0].mxu0
  %v874 = vadd.f32 0.0, %v873
  %v875 = vpop.f32.mrb[0].mxu0
  %v876 = vadd.f32 0.0, %v875
  %877 = vmatprep.mubr.bf16.mxu0 0
  %878 = vmatmul.mubr.bf16.gmra.mrb[0].mxu0 %v134
  %v879 = vpop.f32.mrb[0].mxu0
  %v880 = vadd.f32 0.0, %v879
  %v881 = vpop.f32.mrb[0].mxu0
  %v882 = vadd.f32 0.0, %v881
  %v883 = vpop.f32.mrb[0].mxu0
  %v884 = vadd.f32 0.0, %v883
  %v885 = vpop.f32.mrb[0].mxu0
  %v886 = vadd.f32 0.0, %v885
  %887 = vmatprep.mubr.bf16.mxu0 0
  %888 = vmatmul.mubr.bf16.gmra.mrb[0].mxu0 %v135
  %v889 = vpop.f32.mrb[0].mxu0
  %v890 = vadd.f32 0.0, %v889
  %v891 = vpop.f32.mrb[0].mxu0
  %v892 = vadd.f32 0.0, %v891
  %v893 = vpop.f32.mrb[0].mxu0
  %v894 = vadd.f32 0.0, %v893
  %v895 = vpop.f32.mrb[0].mxu0
  %v896 = vadd.f32 0.0, %v895
  %897 = vmatprep.mubr.bf16.mxu0 0
  %898 = vmatmul.mubr.bf16.gmra.mrb[0].mxu0 %v136
  %v899 = vpop.f32.mrb[0].mxu0
  %v900 = vadd.f32 0.0, %v899
  %v901 = vpop.f32.mrb[0].mxu0
  %v902 = vadd.f32 0.0, %v901
  %v903 = vpop.f32.mrb[0].mxu0
  %v904 = vadd.f32 0.0, %v903
  %v905 = vpop.f32.mrb[0].mxu0
  %v906 = vadd.f32 0.0, %v905
  %907 = vmatprep.mubr.bf16.mxu0 0
  %908 = vmatmul.mubr.bf16.gmra.mrb[0].mxu0 %v137
  %v909 = vpop.f32.mrb[0].mxu0
  %v910 = vadd.f32 0.0, %v909
  %v911 = vpop.f32.mrb[0].mxu0
  %v912 = vadd.f32 0.0, %v911
  %v913 = vpop.f32.mrb[0].mxu0
  %v914 = vadd.f32 0.0, %v913
  %v915 = vpop.f32.mrb[0].mxu0
  %v916 = vadd.f32 0.0, %v915
  %917 = vdwg.mxu0
  %v918 = vld [vmem:[%s0] sm:$0xff]
  %v920 = vlaneseq
  %v921 = vshrl.u32 %v920, 7
  %v922 = vsub.s32 0, %v921
  %v923 = vrot.slane %v918, %v922
  %v924 = vlaneseq
  %v925 = vshrl.u32 %v924, 7
  %v926 = vsub.s32 1, %v925
  %v927 = vrot.slane %v918, %v926
  %v928 = vlaneseq
  %v929 = vshrl.u32 %v928, 7
  %v930 = vsub.s32 2, %v929
  %v931 = vrot.slane %v918, %v930
  %v932 = vlaneseq
  %v933 = vshrl.u32 %v932, 7
  %v934 = vsub.s32 3, %v933
  %v935 = vrot.slane %v918, %v934
  %v936 = vlaneseq
  %v937 = vshrl.u32 %v936, 7
  %v938 = vsub.s32 4, %v937
  %v939 = vrot.slane %v918, %v938
  %v940 = vlaneseq
  %v941 = vshrl.u32 %v940, 7
  %v942 = vsub.s32 5, %v941
  %v943 = vrot.slane %v918, %v942
  %v944 = vlaneseq
  %v945 = vshrl.u32 %v944, 7
  %v946 = vsub.s32 6, %v945
  %v947 = vrot.slane %v918, %v946
  %v948 = vlaneseq
  %v949 = vshrl.u32 %v948, 7
  %v950 = vsub.s32 7, %v949
  %v951 = vrot.slane %v918, %v950
  %v960 = vmul.f32 %v501, %v923
  %v961 = vmul.f32 %v503, %v927
  %v962 = vmul.f32 %v614, %v931
  %v963 = vmul.f32 %v616, %v935
  %v964 = vmul.f32 %v727, %v939
  %v965 = vmul.f32 %v729, %v943
  %v966 = vmul.f32 %v840, %v947
  %v967 = vmul.f32 %v842, %v951
  %v968 = vmul.f32 %v505, %v923
  %v969 = vmul.f32 %v507, %v927
  %v970 = vmul.f32 %v618, %v931
  %v971 = vmul.f32 %v620, %v935
  %v972 = vmul.f32 %v731, %v939
  %v973 = vmul.f32 %v733, %v943
  %v974 = vmul.f32 %v844, %v947
  %v975 = vmul.f32 %v846, %v951
  %v976 = vmul.f32 %v511, %v923
  %v977 = vmul.f32 %v513, %v927
  %v978 = vmul.f32 %v624, %v931
  %v979 = vmul.f32 %v626, %v935
  %v980 = vmul.f32 %v737, %v939
  %v981 = vmul.f32 %v739, %v943
  %v982 = vmul.f32 %v850, %v947
  %v983 = vmul.f32 %v852, %v951
  %v984 = vmul.f32 %v515, %v923
  %v985 = vmul.f32 %v517, %v927
  %v986 = vmul.f32 %v628, %v931
  %v987 = vmul.f32 %v630, %v935
  %v988 = vmul.f32 %v741, %v939
  %v989 = vmul.f32 %v743, %v943
  %v990 = vmul.f32 %v854, %v947
  %v991 = vmul.f32 %v856, %v951
  %v992 = vmul.f32 %v521, %v923
  %v993 = vmul.f32 %v523, %v927
  %v994 = vmul.f32 %v634, %v931
  %v995 = vmul.f32 %v636, %v935
  %v996 = vmul.f32 %v747, %v939
  %v997 = vmul.f32 %v749, %v943
  %v998 = vmul.f32 %v860, %v947
  %v999 = vmul.f32 %v862, %v951
  %v1000 = vmul.f32 %v525, %v923
  %v1001 = vmul.f32 %v527, %v927
  %v1002 = vmul.f32 %v638, %v931
  %v1003 = vmul.f32 %v640, %v935
  %v1004 = vmul.f32 %v751, %v939
  %v1005 = vmul.f32 %v753, %v943
  %v1006 = vmul.f32 %v864, %v947
  %v1007 = vmul.f32 %v866, %v951
  %v1008 = vmul.f32 %v531, %v923
  %v1009 = vmul.f32 %v533, %v927
  %v1010 = vmul.f32 %v644, %v931
  %v1011 = vmul.f32 %v646, %v935
  %v1012 = vmul.f32 %v757, %v939
  %v1013 = vmul.f32 %v759, %v943
  %v1014 = vmul.f32 %v870, %v947
  %v1015 = vmul.f32 %v872, %v951
  %v1016 = vmul.f32 %v535, %v923
  %v1017 = vmul.f32 %v537, %v927
  %v1018 = vmul.f32 %v648, %v931
  %v1019 = vmul.f32 %v650, %v935
  %v1020 = vmul.f32 %v761, %v939
  %v1021 = vmul.f32 %v763, %v943
  %v1022 = vmul.f32 %v874, %v947
  %v1023 = vmul.f32 %v876, %v951
  %v1024 = vmul.f32 %v541, %v923
  %v1025 = vmul.f32 %v543, %v927
  %v1026 = vmul.f32 %v654, %v931
  %v1027 = vmul.f32 %v656, %v935
  %v1028 = vmul.f32 %v767, %v939
  %v1029 = vmul.f32 %v769, %v943
  %v1030 = vmul.f32 %v880, %v947
  %v1031 = vmul.f32 %v882, %v951
  %v1032 = vmul.f32 %v545, %v923
  %v1033 = vmul.f32 %v547, %v927
  %v1034 = vmul.f32 %v658, %v931
  %v1035 = vmul.f32 %v660, %v935
  %v1036 = vmul.f32 %v771, %v939
  %v1037 = vmul.f32 %v773, %v943
  %v1038 = vmul.f32 %v884, %v947
  %v1039 = vmul.f32 %v886, %v951
  %v1040 = vmul.f32 %v551, %v923
  %v1041 = vmul.f32 %v553, %v927
  %v1042 = vmul.f32 %v664, %v931
  %v1043 = vmul.f32 %v666, %v935
  %v1044 = vmul.f32 %v777, %v939
  %v1045 = vmul.f32 %v779, %v943
  %v1046 = vmul.f32 %v890, %v947
  %v1047 = vmul.f32 %v892, %v951
  %v1048 = vmul.f32 %v555, %v923
  %v1049 = vmul.f32 %v557, %v927
  %v1050 = vmul.f32 %v668, %v931
  %v1051 = vmul.f32 %v670, %v935
  %v1052 = vmul.f32 %v781, %v939
  %v1053 = vmul.f32 %v783, %v943
  %v1054 = vmul.f32 %v894, %v947
  %v1055 = vmul.f32 %v896, %v951
  %v1056 = vmul.f32 %v561, %v923
  %v1057 = vmul.f32 %v563, %v927
  %v1058 = vmul.f32 %v674, %v931
  %v1059 = vmul.f32 %v676, %v935
  %v1060 = vmul.f32 %v787, %v939
  %v1061 = vmul.f32 %v789, %v943
  %v1062 = vmul.f32 %v900, %v947
  %v1063 = vmul.f32 %v902, %v951
  %v1064 = vmul.f32 %v565, %v923
  %v1065 = vmul.f32 %v567, %v927
  %v1066 = vmul.f32 %v678, %v931
  %v1067 = vmul.f32 %v680, %v935
  %v1068 = vmul.f32 %v791, %v939
  %v1069 = vmul.f32 %v793, %v943
  %v1070 = vmul.f32 %v904, %v947
  %v1071 = vmul.f32 %v906, %v951
  %v1072 = vmul.f32 %v571, %v923
  %v1073 = vmul.f32 %v573, %v927
  %v1074 = vmul.f32 %v684, %v931
  %v1075 = vmul.f32 %v686, %v935
  %v1076 = vmul.f32 %v797, %v939
  %v1077 = vmul.f32 %v799, %v943
  %v1078 = vmul.f32 %v910, %v947
  %v1079 = vmul.f32 %v912, %v951
  %v1080 = vmul.f32 %v575, %v923
  %v1081 = vmul.f32 %v577, %v927
  %v1082 = vmul.f32 %v688, %v931
  %v1083 = vmul.f32 %v690, %v935
  %v1084 = vmul.f32 %v801, %v939
  %v1085 = vmul.f32 %v803, %v943
  %v1086 = vmul.f32 %v914, %v947
  %v1087 = vmul.f32 %v916, %v951
  %v1088 = vld [vmem:[%s1] sm:$0xff]
  %v1090 = vlaneseq
  %v1091 = vshrl.u32 %v1090, 7
  %v1092 = vsub.s32 0, %v1091
  %v1093 = vrot.slane %v1088, %v1092
  %v1094 = vlaneseq
  %v1095 = vshrl.u32 %v1094, 7
  %v1096 = vsub.s32 1, %v1095
  %v1097 = vrot.slane %v1088, %v1096
  %v1098 = vlaneseq
  %v1099 = vshrl.u32 %v1098, 7
  %v1100 = vsub.s32 2, %v1099
  %v1101 = vrot.slane %v1088, %v1100
  %v1102 = vlaneseq
  %v1103 = vshrl.u32 %v1102, 7
  %v1104 = vsub.s32 3, %v1103
  %v1105 = vrot.slane %v1088, %v1104
  %v1106 = vlaneseq
  %v1107 = vshrl.u32 %v1106, 7
  %v1108 = vsub.s32 4, %v1107
  %v1109 = vrot.slane %v1088, %v1108
  %v1110 = vlaneseq
  %v1111 = vshrl.u32 %v1110, 7
  %v1112 = vsub.s32 5, %v1111
  %v1113 = vrot.slane %v1088, %v1112
  %v1114 = vlaneseq
  %v1115 = vshrl.u32 %v1114, 7
  %v1116 = vsub.s32 6, %v1115
  %v1117 = vrot.slane %v1088, %v1116
  %v1118 = vlaneseq
  %v1119 = vshrl.u32 %v1118, 7
  %v1120 = vsub.s32 7, %v1119
  %v1121 = vrot.slane %v1088, %v1120
  %v1130 = vadd.f32 %v960, %v1093
  %v1131 = vadd.f32 %v961, %v1097
  %v1132 = vadd.f32 %v962, %v1101
  %v1133 = vadd.f32 %v963, %v1105
  %v1134 = vadd.f32 %v964, %v1109
  %v1135 = vadd.f32 %v965, %v1113
  %v1136 = vadd.f32 %v966, %v1117
  %v1137 = vadd.f32 %v967, %v1121
  %v1138 = vadd.f32 %v968, %v1093
  %v1139 = vadd.f32 %v969, %v1097
  %v1140 = vadd.f32 %v970, %v1101
  %v1141 = vadd.f32 %v971, %v1105
  %v1142 = vadd.f32 %v972, %v1109
  %v1143 = vadd.f32 %v973, %v1113
  %v1144 = vadd.f32 %v974, %v1117
  %v1145 = vadd.f32 %v975, %v1121
  %v1146 = vadd.f32 %v976, %v1093
  %v1147 = vadd.f32 %v977, %v1097
  %v1148 = vadd.f32 %v978, %v1101
  %v1149 = vadd.f32 %v979, %v1105
  %v1150 = vadd.f32 %v980, %v1109
  %v1151 = vadd.f32 %v981, %v1113
  %v1152 = vadd.f32 %v982, %v1117
  %v1153 = vadd.f32 %v983, %v1121
  %v1154 = vadd.f32 %v984, %v1093
  %v1155 = vadd.f32 %v985, %v1097
  %v1156 = vadd.f32 %v986, %v1101
  %v1157 = vadd.f32 %v987, %v1105
  %v1158 = vadd.f32 %v988, %v1109
  %v1159 = vadd.f32 %v989, %v1113
  %v1160 = vadd.f32 %v990, %v1117
  %v1161 = vadd.f32 %v991, %v1121
  %v1162 = vadd.f32 %v992, %v1093
  %v1163 = vadd.f32 %v993, %v1097
  %v1164 = vadd.f32 %v994, %v1101
  %v1165 = vadd.f32 %v995, %v1105
  %v1166 = vadd.f32 %v996, %v1109
  %v1167 = vadd.f32 %v997, %v1113
  %v1168 = vadd.f32 %v998, %v1117
  %v1169 = vadd.f32 %v999, %v1121
  %v1170 = vadd.f32 %v1000, %v1093
  %v1171 = vadd.f32 %v1001, %v1097
  %v1172 = vadd.f32 %v1002, %v1101
  %v1173 = vadd.f32 %v1003, %v1105
  %v1174 = vadd.f32 %v1004, %v1109
  %v1175 = vadd.f32 %v1005, %v1113
  %v1176 = vadd.f32 %v1006, %v1117
  %v1177 = vadd.f32 %v1007, %v1121
  %v1178 = vadd.f32 %v1008, %v1093
  %v1179 = vadd.f32 %v1009, %v1097
  %v1180 = vadd.f32 %v1010, %v1101
  %v1181 = vadd.f32 %v1011, %v1105
  %v1182 = vadd.f32 %v1012, %v1109
  %v1183 = vadd.f32 %v1013, %v1113
  %v1184 = vadd.f32 %v1014, %v1117
  %v1185 = vadd.f32 %v1015, %v1121
  %v1186 = vadd.f32 %v1016, %v1093
  %v1187 = vadd.f32 %v1017, %v1097
  %v1188 = vadd.f32 %v1018, %v1101
  %v1189 = vadd.f32 %v1019, %v1105
  %v1190 = vadd.f32 %v1020, %v1109
  %v1191 = vadd.f32 %v1021, %v1113
  %v1192 = vadd.f32 %v1022, %v1117
  %v1193 = vadd.f32 %v1023, %v1121
  %v1194 = vadd.f32 %v1024, %v1093
  %v1195 = vadd.f32 %v1025, %v1097
  %v1196 = vadd.f32 %v1026, %v1101
  %v1197 = vadd.f32 %v1027, %v1105
  %v1198 = vadd.f32 %v1028, %v1109
  %v1199 = vadd.f32 %v1029, %v1113
  %v1200 = vadd.f32 %v1030, %v1117
  %v1201 = vadd.f32 %v1031, %v1121
  %v1202 = vadd.f32 %v1032, %v1093
  %v1203 = vadd.f32 %v1033, %v1097
  %v1204 = vadd.f32 %v1034, %v1101
  %v1205 = vadd.f32 %v1035, %v1105
  %v1206 = vadd.f32 %v1036, %v1109
  %v1207 = vadd.f32 %v1037, %v1113
  %v1208 = vadd.f32 %v1038, %v1117
  %v1209 = vadd.f32 %v1039, %v1121
  %v1210 = vadd.f32 %v1040, %v1093
  %v1211 = vadd.f32 %v1041, %v1097
  %v1212 = vadd.f32 %v1042, %v1101
  %v1213 = vadd.f32 %v1043, %v1105
  %v1214 = vadd.f32 %v1044, %v1109
  %v1215 = vadd.f32 %v1045, %v1113
  %v1216 = vadd.f32 %v1046, %v1117
  %v1217 = vadd.f32 %v1047, %v1121
  %v1218 = vadd.f32 %v1048, %v1093
  %v1219 = vadd.f32 %v1049, %v1097
  %v1220 = vadd.f32 %v1050, %v1101
  %v1221 = vadd.f32 %v1051, %v1105
  %v1222 = vadd.f32 %v1052, %v1109
  %v1223 = vadd.f32 %v1053, %v1113
  %v1224 = vadd.f32 %v1054, %v1117
  %v1225 = vadd.f32 %v1055, %v1121
  %v1226 = vadd.f32 %v1056, %v1093
  %v1227 = vadd.f32 %v1057, %v1097
  %v1228 = vadd.f32 %v1058, %v1101
  %v1229 = vadd.f32 %v1059, %v1105
  %v1230 = vadd.f32 %v1060, %v1109
  %v1231 = vadd.f32 %v1061, %v1113
  %v1232 = vadd.f32 %v1062, %v1117
  %v1233 = vadd.f32 %v1063, %v1121
  %v1234 = vadd.f32 %v1064, %v1093
  %v1235 = vadd.f32 %v1065, %v1097
  %v1236 = vadd.f32 %v1066, %v1101
  %v1237 = vadd.f32 %v1067, %v1105
  %v1238 = vadd.f32 %v1068, %v1109
  %v1239 = vadd.f32 %v1069, %v1113
  %v1240 = vadd.f32 %v1070, %v1117
  %v1241 = vadd.f32 %v1071, %v1121
  %v1242 = vadd.f32 %v1072, %v1093
  %v1243 = vadd.f32 %v1073, %v1097
  %v1244 = vadd.f32 %v1074, %v1101
  %v1245 = vadd.f32 %v1075, %v1105
  %v1246 = vadd.f32 %v1076, %v1109
  %v1247 = vadd.f32 %v1077, %v1113
  %v1248 = vadd.f32 %v1078, %v1117
  %v1249 = vadd.f32 %v1079, %v1121
  %v1250 = vadd.f32 %v1080, %v1093
  %v1251 = vadd.f32 %v1081, %v1097
  %v1252 = vadd.f32 %v1082, %v1101
  %v1253 = vadd.f32 %v1083, %v1105
  %v1254 = vadd.f32 %v1084, %v1109
  %v1255 = vadd.f32 %v1085, %v1113
  %v1256 = vadd.f32 %v1086, %v1117
  %v1257 = vadd.f32 %v1087, %v1121
  %v1258 = vsub.f32 0.0, %v1130
  %v1259 = vsub.f32 0.0, %v1131
  %v1260 = vsub.f32 0.0, %v1132
  %v1261 = vsub.f32 0.0, %v1133
  %v1262 = vsub.f32 0.0, %v1134
  %v1263 = vsub.f32 0.0, %v1135
  %v1264 = vsub.f32 0.0, %v1136
  %v1265 = vsub.f32 0.0, %v1137
  %v1266 = vsub.f32 0.0, %v1138
  %v1267 = vsub.f32 0.0, %v1139
  %v1268 = vsub.f32 0.0, %v1140
  %v1269 = vsub.f32 0.0, %v1141
  %v1270 = vsub.f32 0.0, %v1142
  %v1271 = vsub.f32 0.0, %v1143
  %v1272 = vsub.f32 0.0, %v1144
  %v1273 = vsub.f32 0.0, %v1145
  %v1274 = vsub.f32 0.0, %v1146
  %v1275 = vsub.f32 0.0, %v1147
  %v1276 = vsub.f32 0.0, %v1148
  %v1277 = vsub.f32 0.0, %v1149
  %v1278 = vsub.f32 0.0, %v1150
  %v1279 = vsub.f32 0.0, %v1151
  %v1280 = vsub.f32 0.0, %v1152
  %v1281 = vsub.f32 0.0, %v1153
  %v1282 = vsub.f32 0.0, %v1154
  %v1283 = vsub.f32 0.0, %v1155
  %v1284 = vsub.f32 0.0, %v1156
  %v1285 = vsub.f32 0.0, %v1157
  %v1286 = vsub.f32 0.0, %v1158
  %v1287 = vsub.f32 0.0, %v1159
  %v1288 = vsub.f32 0.0, %v1160
  %v1289 = vsub.f32 0.0, %v1161
  %v1290 = vsub.f32 0.0, %v1162
  %v1291 = vsub.f32 0.0, %v1163
  %v1292 = vsub.f32 0.0, %v1164
  %v1293 = vsub.f32 0.0, %v1165
  %v1294 = vsub.f32 0.0, %v1166
  %v1295 = vsub.f32 0.0, %v1167
  %v1296 = vsub.f32 0.0, %v1168
  %v1297 = vsub.f32 0.0, %v1169
  %v1298 = vsub.f32 0.0, %v1170
  %v1299 = vsub.f32 0.0, %v1171
  %v1300 = vsub.f32 0.0, %v1172
  %v1301 = vsub.f32 0.0, %v1173
  %v1302 = vsub.f32 0.0, %v1174
  %v1303 = vsub.f32 0.0, %v1175
  %v1304 = vsub.f32 0.0, %v1176
  %v1305 = vsub.f32 0.0, %v1177
  %v1306 = vsub.f32 0.0, %v1178
  %v1307 = vsub.f32 0.0, %v1179
  %v1308 = vsub.f32 0.0, %v1180
  %v1309 = vsub.f32 0.0, %v1181
  %v1310 = vsub.f32 0.0, %v1182
  %v1311 = vsub.f32 0.0, %v1183
  %v1312 = vsub.f32 0.0, %v1184
  %v1313 = vsub.f32 0.0, %v1185
  %v1314 = vsub.f32 0.0, %v1186
  %v1315 = vsub.f32 0.0, %v1187
  %v1316 = vsub.f32 0.0, %v1188
  %v1317 = vsub.f32 0.0, %v1189
  %v1318 = vsub.f32 0.0, %v1190
  %v1319 = vsub.f32 0.0, %v1191
  %v1320 = vsub.f32 0.0, %v1192
  %v1321 = vsub.f32 0.0, %v1193
  %v1322 = vsub.f32 0.0, %v1194
  %v1323 = vsub.f32 0.0, %v1195
  %v1324 = vsub.f32 0.0, %v1196
  %v1325 = vsub.f32 0.0, %v1197
  %v1326 = vsub.f32 0.0, %v1198
  %v1327 = vsub.f32 0.0, %v1199
  %v1328 = vsub.f32 0.0, %v1200
  %v1329 = vsub.f32 0.0, %v1201
  %v1330 = vsub.f32 0.0, %v1202
  %v1331 = vsub.f32 0.0, %v1203
  %v1332 = vsub.f32 0.0, %v1204
  %v1333 = vsub.f32 0.0, %v1205
  %v1334 = vsub.f32 0.0, %v1206
  %v1335 = vsub.f32 0.0, %v1207
  %v1336 = vsub.f32 0.0, %v1208
  %v1337 = vsub.f32 0.0, %v1209
  %v1338 = vsub.f32 0.0, %v1210
  %v1339 = vsub.f32 0.0, %v1211
  %v1340 = vsub.f32 0.0, %v1212
  %v1341 = vsub.f32 0.0, %v1213
  %v1342 = vsub.f32 0.0, %v1214
  %v1343 = vsub.f32 0.0, %v1215
  %v1344 = vsub.f32 0.0, %v1216
  %v1345 = vsub.f32 0.0, %v1217
  %v1346 = vsub.f32 0.0, %v1218
  %v1347 = vsub.f32 0.0, %v1219
  %v1348 = vsub.f32 0.0, %v1220
  %v1349 = vsub.f32 0.0, %v1221
  %v1350 = vsub.f32 0.0, %v1222
  %v1351 = vsub.f32 0.0, %v1223
  %v1352 = vsub.f32 0.0, %v1224
  %v1353 = vsub.f32 0.0, %v1225
  %v1354 = vsub.f32 0.0, %v1226
  %v1355 = vsub.f32 0.0, %v1227
  %v1356 = vsub.f32 0.0, %v1228
  %v1357 = vsub.f32 0.0, %v1229
  %v1358 = vsub.f32 0.0, %v1230
  %v1359 = vsub.f32 0.0, %v1231
  %v1360 = vsub.f32 0.0, %v1232
  %v1361 = vsub.f32 0.0, %v1233
  %v1362 = vsub.f32 0.0, %v1234
  %v1363 = vsub.f32 0.0, %v1235
  %v1364 = vsub.f32 0.0, %v1236
  %v1365 = vsub.f32 0.0, %v1237
  %v1366 = vsub.f32 0.0, %v1238
  %v1367 = vsub.f32 0.0, %v1239
  %v1368 = vsub.f32 0.0, %v1240
  %v1369 = vsub.f32 0.0, %v1241
  %v1370 = vsub.f32 0.0, %v1242
  %v1371 = vsub.f32 0.0, %v1243
  %v1372 = vsub.f32 0.0, %v1244
  %v1373 = vsub.f32 0.0, %v1245
  %v1374 = vsub.f32 0.0, %v1246
  %v1375 = vsub.f32 0.0, %v1247
  %v1376 = vsub.f32 0.0, %v1248
  %v1377 = vsub.f32 0.0, %v1249
  %v1378 = vsub.f32 0.0, %v1250
  %v1379 = vsub.f32 0.0, %v1251
  %v1380 = vsub.f32 0.0, %v1252
  %v1381 = vsub.f32 0.0, %v1253
  %v1382 = vsub.f32 0.0, %v1254
  %v1383 = vsub.f32 0.0, %v1255
  %v1384 = vsub.f32 0.0, %v1256
  %v1385 = vsub.f32 0.0, %v1257
  %v1386 = vmul.f32 %v1258, 1.442695
  %v1387 = vpow.pop %v1386
  %v1388 = vmul.f32 %v1259, 1.442695
  %v1389 = vpow.pop %v1388
  %v1390 = vmul.f32 %v1260, 1.442695
  %v1391 = vpow.pop %v1390
  %v1392 = vmul.f32 %v1261, 1.442695
  %v1393 = vpow.pop %v1392
  %v1394 = vmul.f32 %v1262, 1.442695
  %v1395 = vpow.pop %v1394
  %v1396 = vmul.f32 %v1263, 1.442695
  %v1397 = vpow.pop %v1396
  %v1398 = vmul.f32 %v1264, 1.442695
  %v1399 = vpow.pop %v1398
  %v1400 = vmul.f32 %v1265, 1.442695
  %v1401 = vpow.pop %v1400
  %v1402 = vmul.f32 %v1266, 1.442695
  %v1403 = vpow.pop %v1402
  %v1404 = vmul.f32 %v1267, 1.442695
  %v1405 = vpow.pop %v1404
  %v1406 = vmul.f32 %v1268, 1.442695
  %v1407 = vpow.pop %v1406
  %v1408 = vmul.f32 %v1269, 1.442695
  %v1409 = vpow.pop %v1408
  %v1410 = vmul.f32 %v1270, 1.442695
  %v1411 = vpow.pop %v1410
  %v1412 = vmul.f32 %v1271, 1.442695
  %v1413 = vpow.pop %v1412
  %v1414 = vmul.f32 %v1272, 1.442695
  %v1415 = vpow.pop %v1414
  %v1416 = vmul.f32 %v1273, 1.442695
  %v1417 = vpow.pop %v1416
  %v1418 = vmul.f32 %v1274, 1.442695
  %v1419 = vpow.pop %v1418
  %v1420 = vmul.f32 %v1275, 1.442695
  %v1421 = vpow.pop %v1420
  %v1422 = vmul.f32 %v1276, 1.442695
  %v1423 = vpow.pop %v1422
  %v1424 = vmul.f32 %v1277, 1.442695
  %v1425 = vpow.pop %v1424
  %v1426 = vmul.f32 %v1278, 1.442695
  %v1427 = vpow.pop %v1426
  %v1428 = vmul.f32 %v1279, 1.442695
  %v1429 = vpow.pop %v1428
  %v1430 = vmul.f32 %v1280, 1.442695
  %v1431 = vpow.pop %v1430
  %v1432 = vmul.f32 %v1281, 1.442695
  %v1433 = vpow.pop %v1432
  %v1434 = vmul.f32 %v1282, 1.442695
  %v1435 = vpow.pop %v1434
  %v1436 = vmul.f32 %v1283, 1.442695
  %v1437 = vpow.pop %v1436
  %v1438 = vmul.f32 %v1284, 1.442695
  %v1439 = vpow.pop %v1438
  %v1440 = vmul.f32 %v1285, 1.442695
  %v1441 = vpow.pop %v1440
  %v1442 = vmul.f32 %v1286, 1.442695
  %v1443 = vpow.pop %v1442
  %v1444 = vmul.f32 %v1287, 1.442695
  %v1445 = vpow.pop %v1444
  %v1446 = vmul.f32 %v1288, 1.442695
  %v1447 = vpow.pop %v1446
  %v1448 = vmul.f32 %v1289, 1.442695
  %v1449 = vpow.pop %v1448
  %v1450 = vmul.f32 %v1290, 1.442695
  %v1451 = vpow.pop %v1450
  %v1452 = vmul.f32 %v1291, 1.442695
  %v1453 = vpow.pop %v1452
  %v1454 = vmul.f32 %v1292, 1.442695
  %v1455 = vpow.pop %v1454
  %v1456 = vmul.f32 %v1293, 1.442695
  %v1457 = vpow.pop %v1456
  %v1458 = vmul.f32 %v1294, 1.442695
  %v1459 = vpow.pop %v1458
  %v1460 = vmul.f32 %v1295, 1.442695
  %v1461 = vpow.pop %v1460
  %v1462 = vmul.f32 %v1296, 1.442695
  %v1463 = vpow.pop %v1462
  %v1464 = vmul.f32 %v1297, 1.442695
  %v1465 = vpow.pop %v1464
  %v1466 = vmul.f32 %v1298, 1.442695
  %v1467 = vpow.pop %v1466
  %v1468 = vmul.f32 %v1299, 1.442695
  %v1469 = vpow.pop %v1468
  %v1470 = vmul.f32 %v1300, 1.442695
  %v1471 = vpow.pop %v1470
  %v1472 = vmul.f32 %v1301, 1.442695
  %v1473 = vpow.pop %v1472
  %v1474 = vmul.f32 %v1302, 1.442695
  %v1475 = vpow.pop %v1474
  %v1476 = vmul.f32 %v1303, 1.442695
  %v1477 = vpow.pop %v1476
  %v1478 = vmul.f32 %v1304, 1.442695
  %v1479 = vpow.pop %v1478
  %v1480 = vmul.f32 %v1305, 1.442695
  %v1481 = vpow.pop %v1480
  %v1482 = vmul.f32 %v1306, 1.442695
  %v1483 = vpow.pop %v1482
  %v1484 = vmul.f32 %v1307, 1.442695
  %v1485 = vpow.pop %v1484
  %v1486 = vmul.f32 %v1308, 1.442695
  %v1487 = vpow.pop %v1486
  %v1488 = vmul.f32 %v1309, 1.442695
  %v1489 = vpow.pop %v1488
  %v1490 = vmul.f32 %v1310, 1.442695
  %v1491 = vpow.pop %v1490
  %v1492 = vmul.f32 %v1311, 1.442695
  %v1493 = vpow.pop %v1492
  %v1494 = vmul.f32 %v1312, 1.442695
  %v1495 = vpow.pop %v1494
  %v1496 = vmul.f32 %v1313, 1.442695
  %v1497 = vpow.pop %v1496
  %v1498 = vmul.f32 %v1314, 1.442695
  %v1499 = vpow.pop %v1498
  %v1500 = vmul.f32 %v1315, 1.442695
  %v1501 = vpow.pop %v1500
  %v1502 = vmul.f32 %v1316, 1.442695
  %v1503 = vpow.pop %v1502
  %v1504 = vmul.f32 %v1317, 1.442695
  %v1505 = vpow.pop %v1504
  %v1506 = vmul.f32 %v1318, 1.442695
  %v1507 = vpow.pop %v1506
  %v1508 = vmul.f32 %v1319, 1.442695
  %v1509 = vpow.pop %v1508
  %v1510 = vmul.f32 %v1320, 1.442695
  %v1511 = vpow.pop %v1510
  %v1512 = vmul.f32 %v1321, 1.442695
  %v1513 = vpow.pop %v1512
  %v1514 = vmul.f32 %v1322, 1.442695
  %v1515 = vpow.pop %v1514
  %v1516 = vmul.f32 %v1323, 1.442695
  %v1517 = vpow.pop %v1516
  %v1518 = vmul.f32 %v1324, 1.442695
  %v1519 = vpow.pop %v1518
  %v1520 = vmul.f32 %v1325, 1.442695
  %v1521 = vpow.pop %v1520
  %v1522 = vmul.f32 %v1326, 1.442695
  %v1523 = vpow.pop %v1522
  %v1524 = vmul.f32 %v1327, 1.442695
  %v1525 = vpow.pop %v1524
  %v1526 = vmul.f32 %v1328, 1.442695
  %v1527 = vpow.pop %v1526
  %v1528 = vmul.f32 %v1329, 1.442695
  %v1529 = vpow.pop %v1528
  %v1530 = vmul.f32 %v1330, 1.442695
  %v1531 = vpow.pop %v1530
  %v1532 = vmul.f32 %v1331, 1.442695
  %v1533 = vpow.pop %v1532
  %v1534 = vmul.f32 %v1332, 1.442695
  %v1535 = vpow.pop %v1534
  %v1536 = vmul.f32 %v1333, 1.442695
  %v1537 = vpow.pop %v1536
  %v1538 = vmul.f32 %v1334, 1.442695
  %v1539 = vpow.pop %v1538
  %v1540 = vmul.f32 %v1335, 1.442695
  %v1541 = vpow.pop %v1540
  %v1542 = vmul.f32 %v1336, 1.442695
  %v1543 = vpow.pop %v1542
  %v1544 = vmul.f32 %v1337, 1.442695
  %v1545 = vpow.pop %v1544
  %v1546 = vmul.f32 %v1338, 1.442695
  %v1547 = vpow.pop %v1546
  %v1548 = vmul.f32 %v1339, 1.442695
  %v1549 = vpow.pop %v1548
  %v1550 = vmul.f32 %v1340, 1.442695
  %v1551 = vpow.pop %v1550
  %v1552 = vmul.f32 %v1341, 1.442695
  %v1553 = vpow.pop %v1552
  %v1554 = vmul.f32 %v1342, 1.442695
  %v1555 = vpow.pop %v1554
  %v1556 = vmul.f32 %v1343, 1.442695
  %v1557 = vpow.pop %v1556
  %v1558 = vmul.f32 %v1344, 1.442695
  %v1559 = vpow.pop %v1558
  %v1560 = vmul.f32 %v1345, 1.442695
  %v1561 = vpow.pop %v1560
  %v1562 = vmul.f32 %v1346, 1.442695
  %v1563 = vpow.pop %v1562
  %v1564 = vmul.f32 %v1347, 1.442695
  %v1565 = vpow.pop %v1564
  %v1566 = vmul.f32 %v1348, 1.442695
  %v1567 = vpow.pop %v1566
  %v1568 = vmul.f32 %v1349, 1.442695
  %v1569 = vpow.pop %v1568
  %v1570 = vmul.f32 %v1350, 1.442695
  %v1571 = vpow.pop %v1570
  %v1572 = vmul.f32 %v1351, 1.442695
  %v1573 = vpow.pop %v1572
  %v1574 = vmul.f32 %v1352, 1.442695
  %v1575 = vpow.pop %v1574
  %v1576 = vmul.f32 %v1353, 1.442695
  %v1577 = vpow.pop %v1576
  %v1578 = vmul.f32 %v1354, 1.442695
  %v1579 = vpow.pop %v1578
  %v1580 = vmul.f32 %v1355, 1.442695
  %v1581 = vpow.pop %v1580
  %v1582 = vmul.f32 %v1356, 1.442695
  %v1583 = vpow.pop %v1582
  %v1584 = vmul.f32 %v1357, 1.442695
  %v1585 = vpow.pop %v1584
  %v1586 = vmul.f32 %v1358, 1.442695
  %v1587 = vpow.pop %v1586
  %v1588 = vmul.f32 %v1359, 1.442695
  %v1589 = vpow.pop %v1588
  %v1590 = vmul.f32 %v1360, 1.442695
  %v1591 = vpow.pop %v1590
  %v1592 = vmul.f32 %v1361, 1.442695
  %v1593 = vpow.pop %v1592
  %v1594 = vmul.f32 %v1362, 1.442695
  %v1595 = vpow.pop %v1594
  %v1596 = vmul.f32 %v1363, 1.442695
  %v1597 = vpow.pop %v1596
  %v1598 = vmul.f32 %v1364, 1.442695
  %v1599 = vpow.pop %v1598
  %v1600 = vmul.f32 %v1365, 1.442695
  %v1601 = vpow.pop %v1600
  %v1602 = vmul.f32 %v1366, 1.442695
  %v1603 = vpow.pop %v1602
  %v1604 = vmul.f32 %v1367, 1.442695
  %v1605 = vpow.pop %v1604
  %v1606 = vmul.f32 %v1368, 1.442695
  %v1607 = vpow.pop %v1606
  %v1608 = vmul.f32 %v1369, 1.442695
  %v1609 = vpow.pop %v1608
  %v1610 = vmul.f32 %v1370, 1.442695
  %v1611 = vpow.pop %v1610
  %v1612 = vmul.f32 %v1371, 1.442695
  %v1613 = vpow.pop %v1612
  %v1614 = vmul.f32 %v1372, 1.442695
  %v1615 = vpow.pop %v1614
  %v1616 = vmul.f32 %v1373, 1.442695
  %v1617 = vpow.pop %v1616
  %v1618 = vmul.f32 %v1374, 1.442695
  %v1619 = vpow.pop %v1618
  %v1620 = vmul.f32 %v1375, 1.442695
  %v1621 = vpow.pop %v1620
  %v1622 = vmul.f32 %v1376, 1.442695
  %v1623 = vpow.pop %v1622
  %v1624 = vmul.f32 %v1377, 1.442695
  %v1625 = vpow.pop %v1624
  %v1626 = vmul.f32 %v1378, 1.442695
  %v1627 = vpow.pop %v1626
  %v1628 = vmul.f32 %v1379, 1.442695
  %v1629 = vpow.pop %v1628
  %v1630 = vmul.f32 %v1380, 1.442695
  %v1631 = vpow.pop %v1630
  %v1632 = vmul.f32 %v1381, 1.442695
  %v1633 = vpow.pop %v1632
  %v1634 = vmul.f32 %v1382, 1.442695
  %v1635 = vpow.pop %v1634
  %v1636 = vmul.f32 %v1383, 1.442695
  %v1637 = vpow.pop %v1636
  %v1638 = vmul.f32 %v1384, 1.442695
  %v1639 = vpow.pop %v1638
  %v1640 = vmul.f32 %v1385, 1.442695
  %v1641 = vpow.pop %v1640
  %v1642 = vadd.f32 %v1387, 1.0
  %v1643 = vadd.f32 %v1389, 1.0
  %v1644 = vadd.f32 %v1391, 1.0
  %v1645 = vadd.f32 %v1393, 1.0
  %v1646 = vadd.f32 %v1395, 1.0
  %v1647 = vadd.f32 %v1397, 1.0
  %v1648 = vadd.f32 %v1399, 1.0
  %v1649 = vadd.f32 %v1401, 1.0
  %v1650 = vadd.f32 %v1403, 1.0
  %v1651 = vadd.f32 %v1405, 1.0
  %v1652 = vadd.f32 %v1407, 1.0
  %v1653 = vadd.f32 %v1409, 1.0
  %v1654 = vadd.f32 %v1411, 1.0
  %v1655 = vadd.f32 %v1413, 1.0
  %v1656 = vadd.f32 %v1415, 1.0
  %v1657 = vadd.f32 %v1417, 1.0
  %v1658 = vadd.f32 %v1419, 1.0
  %v1659 = vadd.f32 %v1421, 1.0
  %v1660 = vadd.f32 %v1423, 1.0
  %v1661 = vadd.f32 %v1425, 1.0
  %v1662 = vadd.f32 %v1427, 1.0
  %v1663 = vadd.f32 %v1429, 1.0
  %v1664 = vadd.f32 %v1431, 1.0
  %v1665 = vadd.f32 %v1433, 1.0
  %v1666 = vadd.f32 %v1435, 1.0
  %v1667 = vadd.f32 %v1437, 1.0
  %v1668 = vadd.f32 %v1439, 1.0
  %v1669 = vadd.f32 %v1441, 1.0
  %v1670 = vadd.f32 %v1443, 1.0
  %v1671 = vadd.f32 %v1445, 1.0
  %v1672 = vadd.f32 %v1447, 1.0
  %v1673 = vadd.f32 %v1449, 1.0
  %v1674 = vadd.f32 %v1451, 1.0
  %v1675 = vadd.f32 %v1453, 1.0
  %v1676 = vadd.f32 %v1455, 1.0
  %v1677 = vadd.f32 %v1457, 1.0
  %v1678 = vadd.f32 %v1459, 1.0
  %v1679 = vadd.f32 %v1461, 1.0
  %v1680 = vadd.f32 %v1463, 1.0
  %v1681 = vadd.f32 %v1465, 1.0
  %v1682 = vadd.f32 %v1467, 1.0
  %v1683 = vadd.f32 %v1469, 1.0
  %v1684 = vadd.f32 %v1471, 1.0
  %v1685 = vadd.f32 %v1473, 1.0
  %v1686 = vadd.f32 %v1475, 1.0
  %v1687 = vadd.f32 %v1477, 1.0
  %v1688 = vadd.f32 %v1479, 1.0
  %v1689 = vadd.f32 %v1481, 1.0
  %v1690 = vadd.f32 %v1483, 1.0
  %v1691 = vadd.f32 %v1485, 1.0
  %v1692 = vadd.f32 %v1487, 1.0
  %v1693 = vadd.f32 %v1489, 1.0
  %v1694 = vadd.f32 %v1491, 1.0
  %v1695 = vadd.f32 %v1493, 1.0
  %v1696 = vadd.f32 %v1495, 1.0
  %v1697 = vadd.f32 %v1497, 1.0
  %v1698 = vadd.f32 %v1499, 1.0
  %v1699 = vadd.f32 %v1501, 1.0
  %v1700 = vadd.f32 %v1503, 1.0
  %v1701 = vadd.f32 %v1505, 1.0
  %v1702 = vadd.f32 %v1507, 1.0
  %v1703 = vadd.f32 %v1509, 1.0
  %v1704 = vadd.f32 %v1511, 1.0
  %v1705 = vadd.f32 %v1513, 1.0
  %v1706 = vadd.f32 %v1515, 1.0
  %v1707 = vadd.f32 %v1517, 1.0
  %v1708 = vadd.f32 %v1519, 1.0
  %v1709 = vadd.f32 %v1521, 1.0
  %v1710 = vadd.f32 %v1523, 1.0
  %v1711 = vadd.f32 %v1525, 1.0
  %v1712 = vadd.f32 %v1527, 1.0
  %v1713 = vadd.f32 %v1529, 1.0
  %v1714 = vadd.f32 %v1531, 1.0
  %v1715 = vadd.f32 %v1533, 1.0
  %v1716 = vadd.f32 %v1535, 1.0
  %v1717 = vadd.f32 %v1537, 1.0
  %v1718 = vadd.f32 %v1539, 1.0
  %v1719 = vadd.f32 %v1541, 1.0
  %v1720 = vadd.f32 %v1543, 1.0
  %v1721 = vadd.f32 %v1545, 1.0
  %v1722 = vadd.f32 %v1547, 1.0
  %v1723 = vadd.f32 %v1549, 1.0
  %v1724 = vadd.f32 %v1551, 1.0
  %v1725 = vadd.f32 %v1553, 1.0
  %v1726 = vadd.f32 %v1555, 1.0
  %v1727 = vadd.f32 %v1557, 1.0
  %v1728 = vadd.f32 %v1559, 1.0
  %v1729 = vadd.f32 %v1561, 1.0
  %v1730 = vadd.f32 %v1563, 1.0
  %v1731 = vadd.f32 %v1565, 1.0
  %v1732 = vadd.f32 %v1567, 1.0
  %v1733 = vadd.f32 %v1569, 1.0
  %v1734 = vadd.f32 %v1571, 1.0
  %v1735 = vadd.f32 %v1573, 1.0
  %v1736 = vadd.f32 %v1575, 1.0
  %v1737 = vadd.f32 %v1577, 1.0
  %v1738 = vadd.f32 %v1579, 1.0
  %v1739 = vadd.f32 %v1581, 1.0
  %v1740 = vadd.f32 %v1583, 1.0
  %v1741 = vadd.f32 %v1585, 1.0
  %v1742 = vadd.f32 %v1587, 1.0
  %v1743 = vadd.f32 %v1589, 1.0
  %v1744 = vadd.f32 %v1591, 1.0
  %v1745 = vadd.f32 %v1593, 1.0
  %v1746 = vadd.f32 %v1595, 1.0
  %v1747 = vadd.f32 %v1597, 1.0
  %v1748 = vadd.f32 %v1599, 1.0
  %v1749 = vadd.f32 %v1601, 1.0
  %v1750 = vadd.f32 %v1603, 1.0
  %v1751 = vadd.f32 %v1605, 1.0
  %v1752 = vadd.f32 %v1607, 1.0
  %v1753 = vadd.f32 %v1609, 1.0
  %v1754 = vadd.f32 %v1611, 1.0
  %v1755 = vadd.f32 %v1613, 1.0
  %v1756 = vadd.f32 %v1615, 1.0
  %v1757 = vadd.f32 %v1617, 1.0
  %v1758 = vadd.f32 %v1619, 1.0
  %v1759 = vadd.f32 %v1621, 1.0
  %v1760 = vadd.f32 %v1623, 1.0
  %v1761 = vadd.f32 %v1625, 1.0
  %v1762 = vadd.f32 %v1627, 1.0
  %v1763 = vadd.f32 %v1629, 1.0
  %v1764 = vadd.f32 %v1631, 1.0
  %v1765 = vadd.f32 %v1633, 1.0
  %v1766 = vadd.f32 %v1635, 1.0
  %v1767 = vadd.f32 %v1637, 1.0
  %v1768 = vadd.f32 %v1639, 1.0
  %v1769 = vadd.f32 %v1641, 1.0
  %v1770 = vrcp.pop %v1642
  %v1771 = vrcp.pop %v1643
  %v1772 = vrcp.pop %v1644
  %v1773 = vrcp.pop %v1645
  %v1774 = vrcp.pop %v1646
  %v1775 = vrcp.pop %v1647
  %v1776 = vrcp.pop %v1648
  %v1777 = vrcp.pop %v1649
  %v1778 = vrcp.pop %v1650
  %v1779 = vrcp.pop %v1651
  %v1780 = vrcp.pop %v1652
  %v1781 = vrcp.pop %v1653
  %v1782 = vrcp.pop %v1654
  %v1783 = vrcp.pop %v1655
  %v1784 = vrcp.pop %v1656
  %v1785 = vrcp.pop %v1657
  %v1786 = vrcp.pop %v1658
  %v1787 = vrcp.pop %v1659
  %v1788 = vrcp.pop %v1660
  %v1789 = vrcp.pop %v1661
  %v1790 = vrcp.pop %v1662
  %v1791 = vrcp.pop %v1663
  %v1792 = vrcp.pop %v1664
  %v1793 = vrcp.pop %v1665
  %v1794 = vrcp.pop %v1666
  %v1795 = vrcp.pop %v1667
  %v1796 = vrcp.pop %v1668
  %v1797 = vrcp.pop %v1669
  %v1798 = vrcp.pop %v1670
  %v1799 = vrcp.pop %v1671
  %v1800 = vrcp.pop %v1672
  %v1801 = vrcp.pop %v1673
  %v1802 = vrcp.pop %v1674
  %v1803 = vrcp.pop %v1675
  %v1804 = vrcp.pop %v1676
  %v1805 = vrcp.pop %v1677
  %v1806 = vrcp.pop %v1678
  %v1807 = vrcp.pop %v1679
  %v1808 = vrcp.pop %v1680
  %v1809 = vrcp.pop %v1681
  %v1810 = vrcp.pop %v1682
  %v1811 = vrcp.pop %v1683
  %v1812 = vrcp.pop %v1684
  %v1813 = vrcp.pop %v1685
  %v1814 = vrcp.pop %v1686
  %v1815 = vrcp.pop %v1687
  %v1816 = vrcp.pop %v1688
  %v1817 = vrcp.pop %v1689
  %v1818 = vrcp.pop %v1690
  %v1819 = vrcp.pop %v1691
  %v1820 = vrcp.pop %v1692
  %v1821 = vrcp.pop %v1693
  %v1822 = vrcp.pop %v1694
  %v1823 = vrcp.pop %v1695
  %v1824 = vrcp.pop %v1696
  %v1825 = vrcp.pop %v1697
  %v1826 = vrcp.pop %v1698
  %v1827 = vrcp.pop %v1699
  %v1828 = vrcp.pop %v1700
  %v1829 = vrcp.pop %v1701
  %v1830 = vrcp.pop %v1702
  %v1831 = vrcp.pop %v1703
  %v1832 = vrcp.pop %v1704
  %v1833 = vrcp.pop %v1705
  %v1834 = vrcp.pop %v1706
  %v1835 = vrcp.pop %v1707
  %v1836 = vrcp.pop %v1708
  %v1837 = vrcp.pop %v1709
  %v1838 = vrcp.pop %v1710
  %v1839 = vrcp.pop %v1711
  %v1840 = vrcp.pop %v1712
  %v1841 = vrcp.pop %v1713
  %v1842 = vrcp.pop %v1714
  %v1843 = vrcp.pop %v1715
  %v1844 = vrcp.pop %v1716
  %v1845 = vrcp.pop %v1717
  %v1846 = vrcp.pop %v1718
  %v1847 = vrcp.pop %v1719
  %v1848 = vrcp.pop %v1720
  %v1849 = vrcp.pop %v1721
  %v1850 = vrcp.pop %v1722
  %v1851 = vrcp.pop %v1723
  %v1852 = vrcp.pop %v1724
  %v1853 = vrcp.pop %v1725
  %v1854 = vrcp.pop %v1726
  %v1855 = vrcp.pop %v1727
  %v1856 = vrcp.pop %v1728
  %v1857 = vrcp.pop %v1729
  %v1858 = vrcp.pop %v1730
  %v1859 = vrcp.pop %v1731
  %v1860 = vrcp.pop %v1732
  %v1861 = vrcp.pop %v1733
  %v1862 = vrcp.pop %v1734
  %v1863 = vrcp.pop %v1735
  %v1864 = vrcp.pop %v1736
  %v1865 = vrcp.pop %v1737
  %v1866 = vrcp.pop %v1738
  %v1867 = vrcp.pop %v1739
  %v1868 = vrcp.pop %v1740
  %v1869 = vrcp.pop %v1741
  %v1870 = vrcp.pop %v1742
  %v1871 = vrcp.pop %v1743
  %v1872 = vrcp.pop %v1744
  %v1873 = vrcp.pop %v1745
  %v1874 = vrcp.pop %v1746
  %v1875 = vrcp.pop %v1747
  %v1876 = vrcp.pop %v1748
  %v1877 = vrcp.pop %v1749
  %v1878 = vrcp.pop %v1750
  %v1879 = vrcp.pop %v1751
  %v1880 = vrcp.pop %v1752
  %v1881 = vrcp.pop %v1753
  %v1882 = vrcp.pop %v1754
  %v1883 = vrcp.pop %v1755
  %v1884 = vrcp.pop %v1756
  %v1885 = vrcp.pop %v1757
  %v1886 = vrcp.pop %v1758
  %v1887 = vrcp.pop %v1759
  %v1888 = vrcp.pop %v1760
  %v1889 = vrcp.pop %v1761
  %v1890 = vrcp.pop %v1762
  %v1891 = vrcp.pop %v1763
  %v1892 = vrcp.pop %v1764
  %v1893 = vrcp.pop %v1765
  %v1894 = vrcp.pop %v1766
  %v1895 = vrcp.pop %v1767
  %v1896 = vrcp.pop %v1768
  %v1897 = vrcp.pop %v1769
  %1898 = vst [vmem:[%s4] sm:$0xff] %v1770
  %1899 = vst [vmem:[%s4 + $0x8] sm:$0xff] %v1771
  %1900 = vst [vmem:[%s4 + $0x10] sm:$0xff] %v1772
  %1901 = vst [vmem:[%s4 + $0x18] sm:$0xff] %v1773
  %1902 = vst [vmem:[%s4 + $0x20] sm:$0xff] %v1774
  %1903 = vst [vmem:[%s4 + $0x28] sm:$0xff] %v1775
  %1904 = vst [vmem:[%s4 + $0x30] sm:$0xff] %v1776
  %1905 = vst [vmem:[%s4 + $0x38] sm:$0xff] %v1777
  %1906 = vst [vmem:[%s4 + $0x40] sm:$0xff] %v1778
  %1907 = vst [vmem:[%s4 + $0x48] sm:$0xff] %v1779
  %1908 = vst [vmem:[%s4 + $0x50] sm:$0xff] %v1780
  %1909 = vst [vmem:[%s4 + $0x58] sm:$0xff] %v1781
  %1910 = vst [vmem:[%s4 + $0x60] sm:$0xff] %v1782
  %1911 = vst [vmem:[%s4 + $0x68] sm:$0xff] %v1783
  %1912 = vst [vmem:[%s4 + $0x70] sm:$0xff] %v1784
  %1913 = vst [vmem:[%s4 + $0x78] sm:$0xff] %v1785
  %1914 = vst [vmem:[%s4 + $0x80] sm:$0xff] %v1786
  %1915 = vst [vmem:[%s4 + $0x88] sm:$0xff] %v1787
  %1916 = vst [vmem:[%s4 + $0x90] sm:$0xff] %v1788
  %1917 = vst [vmem:[%s4 + $0x98] sm:$0xff] %v1789
  %1918 = vst [vmem:[%s4 + $0xa0] sm:$0xff] %v1790
  %1919 = vst [vmem:[%s4 + $0xa8] sm:$0xff] %v1791
  %1920 = vst [vmem:[%s4 + $0xb0] sm:$0xff] %v1792
  %1921 = vst [vmem:[%s4 + $0xb8] sm:$0xff] %v1793
  %1922 = vst [vmem:[%s4 + $0xc0] sm:$0xff] %v1794
  %1923 = vst [vmem:[%s4 + $0xc8] sm:$0xff] %v1795
  %1924 = vst [vmem:[%s4 + $0xd0] sm:$0xff] %v1796
  %1925 = vst [vmem:[%s4 + $0xd8] sm:$0xff] %v1797
  %1926 = vst [vmem:[%s4 + $0xe0] sm:$0xff] %v1798
  %1927 = vst [vmem:[%s4 + $0xe8] sm:$0xff] %v1799
  %1928 = vst [vmem:[%s4 + $0xf0] sm:$0xff] %v1800
  %1929 = vst [vmem:[%s4 + $0xf8] sm:$0xff] %v1801
  %1930 = vst [vmem:[%s4 + $0x100] sm:$0xff] %v1802
  %1931 = vst [vmem:[%s4 + $0x108] sm:$0xff] %v1803
  %1932 = vst [vmem:[%s4 + $0x110] sm:$0xff] %v1804
  %1933 = vst [vmem:[%s4 + $0x118] sm:$0xff] %v1805
  %1934 = vst [vmem:[%s4 + $0x120] sm:$0xff] %v1806
  %1935 = vst [vmem:[%s4 + $0x128] sm:$0xff] %v1807
  %1936 = vst [vmem:[%s4 + $0x130] sm:$0xff] %v1808
  %1937 = vst [vmem:[%s4 + $0x138] sm:$0xff] %v1809
  %1938 = vst [vmem:[%s4 + $0x140] sm:$0xff] %v1810
  %1939 = vst [vmem:[%s4 + $0x148] sm:$0xff] %v1811
  %1940 = vst [vmem:[%s4 + $0x150] sm:$0xff] %v1812
  %1941 = vst [vmem:[%s4 + $0x158] sm:$0xff] %v1813
  %1942 = vst [vmem:[%s4 + $0x160] sm:$0xff] %v1814
  %1943 = vst [vmem:[%s4 + $0x168] sm:$0xff] %v1815
  %1944 = vst [vmem:[%s4 + $0x170] sm:$0xff] %v1816
  %1945 = vst [vmem:[%s4 + $0x178] sm:$0xff] %v1817
  %1946 = vst [vmem:[%s4 + $0x180] sm:$0xff] %v1818
  %1947 = vst [vmem:[%s4 + $0x188] sm:$0xff] %v1819
  %1948 = vst [vmem:[%s4 + $0x190] sm:$0xff] %v1820
  %1949 = vst [vmem:[%s4 + $0x198] sm:$0xff] %v1821
  %1950 = vst [vmem:[%s4 + $0x1a0] sm:$0xff] %v1822
  %1951 = vst [vmem:[%s4 + $0x1a8] sm:$0xff] %v1823
  %1952 = vst [vmem:[%s4 + $0x1b0] sm:$0xff] %v1824
  %1953 = vst [vmem:[%s4 + $0x1b8] sm:$0xff] %v1825
  %1954 = vst [vmem:[%s4 + $0x1c0] sm:$0xff] %v1826
  %1955 = vst [vmem:[%s4 + $0x1c8] sm:$0xff] %v1827
  %1956 = vst [vmem:[%s4 + $0x1d0] sm:$0xff] %v1828
  %1957 = vst [vmem:[%s4 + $0x1d8] sm:$0xff] %v1829
  %1958 = vst [vmem:[%s4 + $0x1e0] sm:$0xff] %v1830
  %1959 = vst [vmem:[%s4 + $0x1e8] sm:$0xff] %v1831
  %1960 = vst [vmem:[%s4 + $0x1f0] sm:$0xff] %v1832
  %1961 = vst [vmem:[%s4 + $0x1f8] sm:$0xff] %v1833
  %1962 = vst [vmem:[%s4 + $0x200] sm:$0xff] %v1834
  %1963 = vst [vmem:[%s4 + $0x208] sm:$0xff] %v1835
  %1964 = vst [vmem:[%s4 + $0x210] sm:$0xff] %v1836
  %1965 = vst [vmem:[%s4 + $0x218] sm:$0xff] %v1837
  %1966 = vst [vmem:[%s4 + $0x220] sm:$0xff] %v1838
  %1967 = vst [vmem:[%s4 + $0x228] sm:$0xff] %v1839
  %1968 = vst [vmem:[%s4 + $0x230] sm:$0xff] %v1840
  %1969 = vst [vmem:[%s4 + $0x238] sm:$0xff] %v1841
  %1970 = vst [vmem:[%s4 + $0x240] sm:$0xff] %v1842
  %1971 = vst [vmem:[%s4 + $0x248] sm:$0xff] %v1843
  %1972 = vst [vmem:[%s4 + $0x250] sm:$0xff] %v1844
  %1973 = vst [vmem:[%s4 + $0x258] sm:$0xff] %v1845
  %1974 = vst [vmem:[%s4 + $0x260] sm:$0xff] %v1846
  %1975 = vst [vmem:[%s4 + $0x268] sm:$0xff] %v1847
  %1976 = vst [vmem:[%s4 + $0x270] sm:$0xff] %v1848
  %1977 = vst [vmem:[%s4 + $0x278] sm:$0xff] %v1849
  %1978 = vst [vmem:[%s4 + $0x280] sm:$0xff] %v1850
  %1979 = vst [vmem:[%s4 + $0x288] sm:$0xff] %v1851
  %1980 = vst [vmem:[%s4 + $0x290] sm:$0xff] %v1852
  %1981 = vst [vmem:[%s4 + $0x298] sm:$0xff] %v1853
  %1982 = vst [vmem:[%s4 + $0x2a0] sm:$0xff] %v1854
  %1983 = vst [vmem:[%s4 + $0x2a8] sm:$0xff] %v1855
  %1984 = vst [vmem:[%s4 + $0x2b0] sm:$0xff] %v1856
  %1985 = vst [vmem:[%s4 + $0x2b8] sm:$0xff] %v1857
  %1986 = vst [vmem:[%s4 + $0x2c0] sm:$0xff] %v1858
  %1987 = vst [vmem:[%s4 + $0x2c8] sm:$0xff] %v1859
  %1988 = vst [vmem:[%s4 + $0x2d0] sm:$0xff] %v1860
  %1989 = vst [vmem:[%s4 + $0x2d8] sm:$0xff] %v1861
  %1990 = vst [vmem:[%s4 + $0x2e0] sm:$0xff] %v1862
  %1991 = vst [vmem:[%s4 + $0x2e8] sm:$0xff] %v1863
  %1992 = vst [vmem:[%s4 + $0x2f0] sm:$0xff] %v1864
  %1993 = vst [vmem:[%s4 + $0x2f8] sm:$0xff] %v1865
  %1994 = vst [vmem:[%s4 + $0x300] sm:$0xff] %v1866
  %1995 = vst [vmem:[%s4 + $0x308] sm:$0xff] %v1867
  %1996 = vst [vmem:[%s4 + $0x310] sm:$0xff] %v1868
  %1997 = vst [vmem:[%s4 + $0x318] sm:$0xff] %v1869
  %1998 = vst [vmem:[%s4 + $0x320] sm:$0xff] %v1870
  %1999 = vst [vmem:[%s4 + $0x328] sm:$0xff] %v1871
  %2000 = vst [vmem:[%s4 + $0x330] sm:$0xff] %v1872
  %2001 = vst [vmem:[%s4 + $0x338] sm:$0xff] %v1873
  %2002 = vst [vmem:[%s4 + $0x340] sm:$0xff] %v1874
  %2003 = vst [vmem:[%s4 + $0x348] sm:$0xff] %v1875
  %2004 = vst [vmem:[%s4 + $0x350] sm:$0xff] %v1876
  %2005 = vst [vmem:[%s4 + $0x358] sm:$0xff] %v1877
  %2006 = vst [vmem:[%s4 + $0x360] sm:$0xff] %v1878
  %2007 = vst [vmem:[%s4 + $0x368] sm:$0xff] %v1879
  %2008 = vst [vmem:[%s4 + $0x370] sm:$0xff] %v1880
  %2009 = vst [vmem:[%s4 + $0x378] sm:$0xff] %v1881
  %2010 = vst [vmem:[%s4 + $0x380] sm:$0xff] %v1882
  %2011 = vst [vmem:[%s4 + $0x388] sm:$0xff] %v1883
  %2012 = vst [vmem:[%s4 + $0x390] sm:$0xff] %v1884
  %2013 = vst [vmem:[%s4 + $0x398] sm:$0xff] %v1885
  %2014 = vst [vmem:[%s4 + $0x3a0] sm:$0xff] %v1886
  %2015 = vst [vmem:[%s4 + $0x3a8] sm:$0xff] %v1887
  %2016 = vst [vmem:[%s4 + $0x3b0] sm:$0xff] %v1888
  %2017 = vst [vmem:[%s4 + $0x3b8] sm:$0xff] %v1889
  %2018 = vst [vmem:[%s4 + $0x3c0] sm:$0xff] %v1890
  %2019 = vst [vmem:[%s4 + $0x3c8] sm:$0xff] %v1891
  %2020 = vst [vmem:[%s4 + $0x3d0] sm:$0xff] %v1892
  %2021 = vst [vmem:[%s4 + $0x3d8] sm:$0xff] %v1893
  %2022 = vst [vmem:[%s4 + $0x3e0] sm:$0xff] %v1894
  %2023 = vst [vmem:[%s4 + $0x3e8] sm:$0xff] %v1895
  %2024 = vst [vmem:[%s4 + $0x3f0] sm:$0xff] %v1896
  %2025 = vst [vmem:[%s4 + $0x3f8] sm:$0xff] %v1897
  // Predicated region
  $region18: #{model_forward.3} parent=0 // pred_check
    _
  $region19: #{model_forward.3} parent=0 // pred_check_branch
    %2027 = sbr.rel (0) target = $region21
  $region20: #{model_forward.3} parent=0 // pred_region
    _
  $region21: #{model_forward.3} parent=0 // pred_fallthru
    _
  // Predicated region
  $region22: #{model_forward.3} parent=0 // pred_check
    _
  $region23: #{model_forward.3} parent=0 // pred_check_branch
    %2029 = sbr.rel (0) target = $region25
  $region24: #{model_forward.3} parent=0 // pred_region
    _
  $region25: #{model_forward.3} parent=0 // pred_fallthru
    _

</llo_original>
